<compile_context>
chip_gen: v6e
topology: v6e:2x2x1
jax: 0.10.0
libtpu: 0.0.40
codegen_flags: <defaults>
</compile_context>

<pallas_src>
import math
import functools

import jax
import jax.numpy as jnp
from jax.experimental import pallas as pl
from jax.experimental.pallas import tpu as pltpu


PARAM_ORDER = [
    "w1", "b1", "g1", "be1",
    "w2", "b2", "g2", "be2",
    "w3", "b3", "g3", "be3",
    "w4", "b4",
    "wd1", "bd1", "gd1", "bed1",
    "wd2", "bd2", "gd2", "bed2",
    "wd3", "bd3", "gd3", "bed3",
    "wd4", "bd4",
]


# --------------------------------- kernel ------------------------------------

def autoencoder_kernel(
    # input block
    x_ref,
    # encoder params (resident)
    w1_ref, b1_ref, g1_ref, be1_ref,
    w2_ref, b2_ref, g2_ref, be2_ref,
    w3_ref, b3_ref, g3_ref, be3_ref,
    w4_ref, b4_ref,
    # decoder params (resident)
    wd1_ref, bd1_ref, gd1_ref, bed1_ref,
    wd2_ref, bd2_ref, gd2_ref, bed2_ref,
    wd3_ref, bd3_ref, gd3_ref, bed3_ref,
    wd4_ref, bd4_ref,
    # output blocks
    decoded_ref, encoded_ref,
):
    def linear(h, w_ref, b_ref):
        # bf16 operands on the MXU, f32 accumulation.
        return jnp.dot(h.astype(jnp.bfloat16), w_ref[...],
                       preferred_element_type=jnp.float32) + b_ref[...]

    def ln_lrelu(h, g_ref, b_ref):
        # nn.LayerNorm (biased variance, eps=1e-5) + nn.LeakyReLU(0.2), all f32.
        mean = jnp.mean(h, axis=-1, keepdims=True)
        var = jnp.mean((h - mean) ** 2, axis=-1, keepdims=True)
        h = (h - mean) * jax.lax.rsqrt(var + 1e-5) * g_ref[...] + b_ref[...]
        return jnp.where(h >= 0.0, h, 0.2 * h)

    x = x_ref[...]

    # ---- encoder ----
    h = ln_lrelu(linear(x, w1_ref, b1_ref), g1_ref, be1_ref)
    # nn.Dropout(dropout_rate): identity in eval mode
    h = ln_lrelu(linear(h, w2_ref, b2_ref), g2_ref, be2_ref)
    # nn.Dropout(dropout_rate / 2): identity in eval mode
    h = ln_lrelu(linear(h, w3_ref, b3_ref), g3_ref, be3_ref)
    encoded = jnp.tanh(linear(h, w4_ref, b4_ref))

    # ---- decoder ----
    d = ln_lrelu(linear(encoded, wd1_ref, bd1_ref), gd1_ref, bed1_ref)
    d = ln_lrelu(linear(d, wd2_ref, bd2_ref), gd2_ref, bed2_ref)
    d = ln_lrelu(linear(d, wd3_ref, bd3_ref), gd3_ref, bed3_ref)
    decoded = linear(d, wd4_ref, bd4_ref)

    decoded_ref[...] = decoded
    encoded_ref[...] = encoded


# --------------------------- parameter construction ---------------------------

def _xavier_linear(key, in_dim, out_dim):
    # PyTorch: xavier_uniform_ on weight of shape (out, in), bias = 0.
    bound = math.sqrt(6.0 / (in_dim + out_dim))
    w = jax.random.uniform(key, (out_dim, in_dim), jnp.float32, -bound, bound)
    b = jnp.zeros((1, out_dim), jnp.float32)
    # Store as (in, out) bf16 so the kernel computes x @ W on the MXU.
    return w.T.astype(jnp.bfloat16), b


def make_autoencoder_params(key, input_dim, encoding_dim):
    hidden_1 = min(768, input_dim)
    hidden_2 = min(384, hidden_1 // 2)
    hidden_3 = min(192, hidden_2 // 2)
    keys = jax.random.split(key, 8)

    w1, b1 = _xavier_linear(keys[0], input_dim, hidden_1)
    w2, b2 = _xavier_linear(keys[1], hidden_1, hidden_2)
    w3, b3 = _xavier_linear(keys[2], hidden_2, hidden_3)
    w4, b4 = _xavier_linear(keys[3], hidden_3, encoding_dim)
    wd1, bd1 = _xavier_linear(keys[4], encoding_dim, hidden_3)
    wd2, bd2 = _xavier_linear(keys[5], hidden_3, hidden_2)
    wd3, bd3 = _xavier_linear(keys[6], hidden_2, hidden_1)
    wd4, bd4 = _xavier_linear(keys[7], hidden_1, input_dim)

    ones = lambda n: jnp.ones((1, n), jnp.float32)
    zeros = lambda n: jnp.zeros((1, n), jnp.float32)

    params = dict(
        w1=w1, b1=b1, g1=ones(hidden_1), be1=zeros(hidden_1),
        w2=w2, b2=b2, g2=ones(hidden_2), be2=zeros(hidden_2),
        w3=w3, b3=b3, g3=ones(hidden_3), be3=zeros(hidden_3),
        w4=w4, b4=b4,
        wd1=wd1, bd1=bd1, gd1=ones(hidden_3), bed1=zeros(hidden_3),
        wd2=wd2, bd2=bd2, gd2=ones(hidden_2), bed2=zeros(hidden_2),
        wd3=wd3, bd3=bd3, gd3=ones(hidden_1), bed3=zeros(hidden_1),
        wd4=wd4, bd4=bd4,
    )
    dims = dict(hidden_1=hidden_1, hidden_2=hidden_2, hidden_3=hidden_3,
                encoding_dim=encoding_dim)
    return params, dims


# --------------------------------- wrapper ------------------------------------

@functools.partial(jax.jit, static_argnames=("block_b",))
def autoencoder_forward(x, params, block_b=16):
    B, D = x.shape
    h1 = params["w1"].shape[1]
    h2 = params["w2"].shape[1]
    h3 = params["w3"].shape[1]
    E = params["w4"].shape[1]

    ordered_params = [params[k] for k in PARAM_ORDER]
    grid = (pl.cdiv(B, block_b),)

    # Batch-blocked input/outputs; params resident across the whole grid.
    x_spec = pl.BlockSpec((block_b, D), lambda i: (i, 0))
    resident = lambda p: pl.BlockSpec(p.shape, lambda i: (0, 0))
    in_specs = [x_spec] + [resident(p) for p in ordered_params]
    out_specs = (
        pl.BlockSpec((block_b, D), lambda i: (i, 0)),
        pl.BlockSpec((block_b, E), lambda i: (i, 0)),
    )

    flops = 2 * B * (D * h1 + h1 * h2 + h2 * h3 + h3 * E
                     + E * h3 + h3 * h2 + h2 * h1 + h1 * D)
    transcendentals = B * (E + 8)  # tanh on latent + rsqrt per LayerNorm row
    bytes_accessed = (
        x.size * x.dtype.itemsize
        + sum(p.size * p.dtype.itemsize for p in ordered_params)
        + B * D * 4 + B * E * 4
    )

    return pl.pallas_call(
        autoencoder_kernel,
        out_shape=(
            jax.ShapeDtypeStruct((B, D), jnp.float32),   # decoded
            jax.ShapeDtypeStruct((B, E), jnp.float32),   # encoded
        ),
        grid=grid,
        in_specs=in_specs,
        out_specs=out_specs,
        compiler_params=pltpu.CompilerParams(
            dimension_semantics=("parallel",),
        ),
        cost_estimate=pl.CostEstimate(
            flops=flops,
            transcendentals=transcendentals,
            bytes_accessed=bytes_accessed,
        ),
    )(x, *ordered_params)


# ------------------------------ pure-JAX reference ----------------------------

def autoencoder_ref(x, params):
    def linear(h, w, b):
        return jnp.dot(h.astype(jnp.bfloat16), w,
                       preferred_element_type=jnp.float32) + b

    def ln_lrelu(h, g, b):
        m = jnp.mean(h, -1, keepdims=True)
        v = jnp.mean((h - m) ** 2, -1, keepdims=True)
        h = (h - m) * jax.lax.rsqrt(v + 1e-5) * g + b
        return jnp.where(h >= 0.0, h, 0.2 * h)

    p = params
    h = ln_lrelu(linear(x, p["w1"], p["b1"]), p["g1"], p["be1"])
    h = ln_lrelu(linear(h, p["w2"], p["b2"]), p["g2"], p["be2"])
    h = ln_lrelu(linear(h, p["w3"], p["b3"]), p["g3"], p["be3"])
    encoded = jnp.tanh(linear(h, p["w4"], p["b4"]))

    d = ln_lrelu(linear(encoded, p["wd1"], p["bd1"]), p["gd1"], p["bed1"])
    d = ln_lrelu(linear(d, p["wd2"], p["bd2"]), p["gd2"], p["bed2"])
    d = ln_lrelu(linear(d, p["wd3"], p["bd3"]), p["gd3"], p["bed3"])
    decoded = linear(d, p["wd4"], p["bd4"])
    return decoded, encoded


# ----------------------------------- main -------------------------------------

if __name__ == "__main__":
    B = 64            # small example batch; grid = B // TB = 4 steps
    TB = 16           # batch tile (multiple of 8 f32 sublanes)
    INPUT_DIM = 256   # -> hidden_1=256, hidden_2=128, hidden_3=64
    ENCODING_DIM = 64

    key = jax.random.PRNGKey(0)
    k_x, k_params = jax.random.split(key)

    params, dims = make_autoencoder_params(k_params, INPUT_DIM, ENCODING_DIM)
    x = jax.random.normal(k_x, (B, INPUT_DIM), dtype=jnp.float32)

    decoded, encoded = autoencoder_forward(x, params, block_b=TB)
    jax.block_until_ready((decoded, encoded))

    d_ref, e_ref = autoencoder_ref(x, params)
    assert jnp.allclose(decoded, d_ref, atol=1e-2, rtol=1e-2), "decoded mismatch"
    assert jnp.allclose(encoded, e_ref, atol=1e-2, rtol=1e-2), "encoded mismatch"

    print("KERNEL_OK")
</pallas_src>

<mosaic_0001>
module attributes {stable_mosaic.version = 11 : i64} {
  func.func @autoencoder_kernel(%arg0: i32, %arg1: memref<16x256xf32, #tpu.memory_space<vmem>>, %arg2: memref<256x256xbf16, #tpu.memory_space<vmem>>, %arg3: memref<1x256xf32, #tpu.memory_space<vmem>>, %arg4: memref<1x256xf32, #tpu.memory_space<vmem>>, %arg5: memref<1x256xf32, #tpu.memory_space<vmem>>, %arg6: memref<256x128xbf16, #tpu.memory_space<vmem>>, %arg7: memref<1x128xf32, #tpu.memory_space<vmem>>, %arg8: memref<1x128xf32, #tpu.memory_space<vmem>>, %arg9: memref<1x128xf32, #tpu.memory_space<vmem>>, %arg10: memref<128x64xbf16, #tpu.memory_space<vmem>>, %arg11: memref<1x64xf32, #tpu.memory_space<vmem>>, %arg12: memref<1x64xf32, #tpu.memory_space<vmem>>, %arg13: memref<1x64xf32, #tpu.memory_space<vmem>>, %arg14: memref<64x64xbf16, #tpu.memory_space<vmem>>, %arg15: memref<1x64xf32, #tpu.memory_space<vmem>>, %arg16: memref<64x64xbf16, #tpu.memory_space<vmem>>, %arg17: memref<1x64xf32, #tpu.memory_space<vmem>>, %arg18: memref<1x64xf32, #tpu.memory_space<vmem>>, %arg19: memref<1x64xf32, #tpu.memory_space<vmem>>, %arg20: memref<64x128xbf16, #tpu.memory_space<vmem>>, %arg21: memref<1x128xf32, #tpu.memory_space<vmem>>, %arg22: memref<1x128xf32, #tpu.memory_space<vmem>>, %arg23: memref<1x128xf32, #tpu.memory_space<vmem>>, %arg24: memref<128x256xbf16, #tpu.memory_space<vmem>>, %arg25: memref<1x256xf32, #tpu.memory_space<vmem>>, %arg26: memref<1x256xf32, #tpu.memory_space<vmem>>, %arg27: memref<1x256xf32, #tpu.memory_space<vmem>>, %arg28: memref<256x256xbf16, #tpu.memory_space<vmem>>, %arg29: memref<1x256xf32, #tpu.memory_space<vmem>>, %arg30: memref<16x256xf32, #tpu.memory_space<vmem>>, %arg31: memref<16x64xf32, #tpu.memory_space<vmem>>) attributes {dimension_semantics = [#tpu.dimension_semantics<parallel>], iteration_bounds = array<i64: 4>, scalar_prefetch = 0 : i64, scratch_operands = 0 : i64, tpu.core_type = #tpu.core_type<tc>, window_params = [{transform_indices = @transform_0, window_bounds = array<i64: 16, 256>}, {pipeline_mode = #tpu.pipeline_mode<synchronous>, transform_indices = @transform_1, window_bounds = array<i64: 256, 256>}, {pipeline_mode = #tpu.pipeline_mode<synchronous>, transform_indices = @transform_2, window_bounds = array<i64: 1, 256>}, {pipeline_mode = #tpu.pipeline_mode<synchronous>, transform_indices = @transform_3, window_bounds = array<i64: 1, 256>}, {pipeline_mode = #tpu.pipeline_mode<synchronous>, transform_indices = @transform_4, window_bounds = array<i64: 1, 256>}, {pipeline_mode = #tpu.pipeline_mode<synchronous>, transform_indices = @transform_5, window_bounds = array<i64: 256, 128>}, {pipeline_mode = #tpu.pipeline_mode<synchronous>, transform_indices = @transform_6, window_bounds = array<i64: 1, 128>}, {pipeline_mode = #tpu.pipeline_mode<synchronous>, transform_indices = @transform_7, window_bounds = array<i64: 1, 128>}, {pipeline_mode = #tpu.pipeline_mode<synchronous>, transform_indices = @transform_8, window_bounds = array<i64: 1, 128>}, {pipeline_mode = #tpu.pipeline_mode<synchronous>, transform_indices = @transform_9, window_bounds = array<i64: 128, 64>}, {pipeline_mode = #tpu.pipeline_mode<synchronous>, transform_indices = @transform_10, window_bounds = array<i64: 1, 64>}, {pipeline_mode = #tpu.pipeline_mode<synchronous>, transform_indices = @transform_11, window_bounds = array<i64: 1, 64>}, {pipeline_mode = #tpu.pipeline_mode<synchronous>, transform_indices = @transform_12, window_bounds = array<i64: 1, 64>}, {pipeline_mode = #tpu.pipeline_mode<synchronous>, transform_indices = @transform_13, window_bounds = array<i64: 64, 64>}, {pipeline_mode = #tpu.pipeline_mode<synchronous>, transform_indices = @transform_14, window_bounds = array<i64: 1, 64>}, {pipeline_mode = #tpu.pipeline_mode<synchronous>, transform_indices = @transform_15, window_bounds = array<i64: 64, 64>}, {pipeline_mode = #tpu.pipeline_mode<synchronous>, transform_indices = @transform_16, window_bounds = array<i64: 1, 64>}, {pipeline_mode = #tpu.pipeline_mode<synchronous>, transform_indices = @transform_17, window_bounds = array<i64: 1, 64>}, {pipeline_mode = #tpu.pipeline_mode<synchronous>, transform_indices = @transform_18, window_bounds = array<i64: 1, 64>}, {pipeline_mode = #tpu.pipeline_mode<synchronous>, transform_indices = @transform_19, window_bounds = array<i64: 64, 128>}, {pipeline_mode = #tpu.pipeline_mode<synchronous>, transform_indices = @transform_20, window_bounds = array<i64: 1, 128>}, {pipeline_mode = #tpu.pipeline_mode<synchronous>, transform_indices = @transform_21, window_bounds = array<i64: 1, 128>}, {pipeline_mode = #tpu.pipeline_mode<synchronous>, transform_indices = @transform_22, window_bounds = array<i64: 1, 128>}, {pipeline_mode = #tpu.pipeline_mode<synchronous>, transform_indices = @transform_23, window_bounds = array<i64: 128, 256>}, {pipeline_mode = #tpu.pipeline_mode<synchronous>, transform_indices = @transform_24, window_bounds = array<i64: 1, 256>}, {pipeline_mode = #tpu.pipeline_mode<synchronous>, transform_indices = @transform_25, window_bounds = array<i64: 1, 256>}, {pipeline_mode = #tpu.pipeline_mode<synchronous>, transform_indices = @transform_26, window_bounds = array<i64: 1, 256>}, {pipeline_mode = #tpu.pipeline_mode<synchronous>, transform_indices = @transform_27, window_bounds = array<i64: 256, 256>}, {pipeline_mode = #tpu.pipeline_mode<synchronous>, transform_indices = @transform_28, window_bounds = array<i64: 1, 256>}, {transform_indices = @transform_29, window_bounds = array<i64: 16, 256>}, {transform_indices = @transform_30, window_bounds = array<i64: 16, 64>}]} {
    %c0 = arith.constant 0 : index
    %c0_0 = arith.constant 0 : index
    %0 = vector.load %arg1[%c0, %c0_0] : memref<16x256xf32, #tpu.memory_space<vmem>>, vector<16x256xf32>
    %1 = arith.truncf %0 : vector<16x256xf32> to vector<16x256xbf16>
    %c0_1 = arith.constant 0 : index
    %c0_2 = arith.constant 0 : index
    %2 = vector.load %arg2[%c0_1, %c0_2] : memref<256x256xbf16, #tpu.memory_space<vmem>>, vector<256x256xbf16>
    %cst = arith.constant dense<0.000000e+00> : vector<16x256xf32>
    %3 = tpu.matmul %1, %2, %cst {dimension_numbers = #tpu.dot_dimension_numbers<[1], [0], [0], [1], [0, 0, 1, 1], [], []>} : vector<16x256xbf16>, vector<256x256xbf16>, vector<16x256xf32> -> vector<16x256xf32>
    %c0_3 = arith.constant 0 : index
    %c0_4 = arith.constant 0 : index
    %4 = vector.load %arg3[%c0_3, %c0_4] : memref<1x256xf32, #tpu.memory_space<vmem>>, vector<1x256xf32>
    %5 = vector.broadcast %4 : vector<1x256xf32> to vector<16x256xf32>
    %6 = arith.addf %3, %5 : vector<16x256xf32>
    %cst_5 = arith.constant dense<0.000000e+00> : vector<16xf32>
    %7 = vector.multi_reduction <add>, %6, %cst_5 [1] : vector<16x256xf32> to vector<16xf32>
    %8 = vector.shape_cast %7 : vector<16xf32> to vector<16x1xf32>
    %cst_6 = arith.constant 2.560000e+02 : f32
    %9 = vector.broadcast %cst_6 : f32 to vector<16x1xf32>
    %10 = arith.divf %8, %9 : vector<16x1xf32>
    %11 = vector.broadcast %10 : vector<16x1xf32> to vector<16x256xf32>
    %12 = arith.subf %6, %11 : vector<16x256xf32>
    %13 = arith.mulf %12, %12 : vector<16x256xf32>
    %cst_7 = arith.constant dense<0.000000e+00> : vector<16xf32>
    %14 = vector.multi_reduction <add>, %13, %cst_7 [1] : vector<16x256xf32> to vector<16xf32>
    %15 = vector.shape_cast %14 : vector<16xf32> to vector<16x1xf32>
    %cst_8 = arith.constant 2.560000e+02 : f32
    %16 = vector.broadcast %cst_8 : f32 to vector<16x1xf32>
    %17 = arith.divf %15, %16 : vector<16x1xf32>
    %18 = vector.broadcast %10 : vector<16x1xf32> to vector<16x256xf32>
    %19 = arith.subf %6, %18 : vector<16x256xf32>
    %cst_9 = arith.constant 9.99999974E-6 : f32
    %20 = vector.broadcast %cst_9 : f32 to vector<16x1xf32>
    %21 = arith.addf %17, %20 : vector<16x1xf32>
    %22 = math.rsqrt %21 : vector<16x1xf32>
    %23 = vector.broadcast %22 : vector<16x1xf32> to vector<16x256xf32>
    %24 = arith.mulf %19, %23 : vector<16x256xf32>
    %c0_10 = arith.constant 0 : index
    %c0_11 = arith.constant 0 : index
    %25 = vector.load %arg4[%c0_10, %c0_11] : memref<1x256xf32, #tpu.memory_space<vmem>>, vector<1x256xf32>
    %26 = vector.broadcast %25 : vector<1x256xf32> to vector<16x256xf32>
    %27 = arith.mulf %24, %26 : vector<16x256xf32>
    %c0_12 = arith.constant 0 : index
    %c0_13 = arith.constant 0 : index
    %28 = vector.load %arg5[%c0_12, %c0_13] : memref<1x256xf32, #tpu.memory_space<vmem>>, vector<1x256xf32>
    %29 = vector.broadcast %28 : vector<1x256xf32> to vector<16x256xf32>
    %30 = arith.addf %27, %29 : vector<16x256xf32>
    %cst_14 = arith.constant 0.000000e+00 : f32
    %31 = vector.broadcast %cst_14 : f32 to vector<16x256xf32>
    %32 = arith.cmpf oge, %30, %31 : vector<16x256xf32>
    %cst_15 = arith.constant 2.000000e-01 : f32
    %33 = vector.broadcast %cst_15 : f32 to vector<16x256xf32>
    %34 = arith.mulf %33, %30 : vector<16x256xf32>
    %35 = arith.select %32, %30, %34 : vector<16x256xi1>, vector<16x256xf32>
    %36 = arith.truncf %35 : vector<16x256xf32> to vector<16x256xbf16>
    %c0_16 = arith.constant 0 : index
    %c0_17 = arith.constant 0 : index
    %37 = vector.load %arg6[%c0_16, %c0_17] : memref<256x128xbf16, #tpu.memory_space<vmem>>, vector<256x128xbf16>
    %cst_18 = arith.constant dense<0.000000e+00> : vector<16x128xf32>
    %38 = tpu.matmul %36, %37, %cst_18 {dimension_numbers = #tpu.dot_dimension_numbers<[1], [0], [0], [1], [0, 0, 1, 1], [], []>} : vector<16x256xbf16>, vector<256x128xbf16>, vector<16x128xf32> -> vector<16x128xf32>
    %c0_19 = arith.constant 0 : index
    %c0_20 = arith.constant 0 : index
    %39 = vector.load %arg7[%c0_19, %c0_20] : memref<1x128xf32, #tpu.memory_space<vmem>>, vector<1x128xf32>
    %40 = vector.broadcast %39 : vector<1x128xf32> to vector<16x128xf32>
    %41 = arith.addf %38, %40 : vector<16x128xf32>
    %cst_21 = arith.constant dense<0.000000e+00> : vector<16xf32>
    %42 = vector.multi_reduction <add>, %41, %cst_21 [1] : vector<16x128xf32> to vector<16xf32>
    %43 = vector.shape_cast %42 : vector<16xf32> to vector<16x1xf32>
    %cst_22 = arith.constant 1.280000e+02 : f32
    %44 = vector.broadcast %cst_22 : f32 to vector<16x1xf32>
    %45 = arith.divf %43, %44 : vector<16x1xf32>
    %46 = vector.broadcast %45 : vector<16x1xf32> to vector<16x128xf32>
    %47 = arith.subf %41, %46 : vector<16x128xf32>
    %48 = arith.mulf %47, %47 : vector<16x128xf32>
    %cst_23 = arith.constant dense<0.000000e+00> : vector<16xf32>
    %49 = vector.multi_reduction <add>, %48, %cst_23 [1] : vector<16x128xf32> to vector<16xf32>
    %50 = vector.shape_cast %49 : vector<16xf32> to vector<16x1xf32>
    %cst_24 = arith.constant 1.280000e+02 : f32
    %51 = vector.broadcast %cst_24 : f32 to vector<16x1xf32>
    %52 = arith.divf %50, %51 : vector<16x1xf32>
    %53 = vector.broadcast %45 : vector<16x1xf32> to vector<16x128xf32>
    %54 = arith.subf %41, %53 : vector<16x128xf32>
    %cst_25 = arith.constant 9.99999974E-6 : f32
    %55 = vector.broadcast %cst_25 : f32 to vector<16x1xf32>
    %56 = arith.addf %52, %55 : vector<16x1xf32>
    %57 = math.rsqrt %56 : vector<16x1xf32>
    %58 = vector.broadcast %57 : vector<16x1xf32> to vector<16x128xf32>
    %59 = arith.mulf %54, %58 : vector<16x128xf32>
    %c0_26 = arith.constant 0 : index
    %c0_27 = arith.constant 0 : index
    %60 = vector.load %arg8[%c0_26, %c0_27] : memref<1x128xf32, #tpu.memory_space<vmem>>, vector<1x128xf32>
    %61 = vector.broadcast %60 : vector<1x128xf32> to vector<16x128xf32>
    %62 = arith.mulf %59, %61 : vector<16x128xf32>
    %c0_28 = arith.constant 0 : index
    %c0_29 = arith.constant 0 : index
    %63 = vector.load %arg9[%c0_28, %c0_29] : memref<1x128xf32, #tpu.memory_space<vmem>>, vector<1x128xf32>
    %64 = vector.broadcast %63 : vector<1x128xf32> to vector<16x128xf32>
    %65 = arith.addf %62, %64 : vector<16x128xf32>
    %cst_30 = arith.constant 0.000000e+00 : f32
    %66 = vector.broadcast %cst_30 : f32 to vector<16x128xf32>
    %67 = arith.cmpf oge, %65, %66 : vector<16x128xf32>
    %cst_31 = arith.constant 2.000000e-01 : f32
    %68 = vector.broadcast %cst_31 : f32 to vector<16x128xf32>
    %69 = arith.mulf %68, %65 : vector<16x128xf32>
    %70 = arith.select %67, %65, %69 : vector<16x128xi1>, vector<16x128xf32>
    %71 = arith.truncf %70 : vector<16x128xf32> to vector<16x128xbf16>
    %c0_32 = arith.constant 0 : index
    %c0_33 = arith.constant 0 : index
    %72 = vector.load %arg10[%c0_32, %c0_33] : memref<128x64xbf16, #tpu.memory_space<vmem>>, vector<128x64xbf16>
    %cst_34 = arith.constant dense<0.000000e+00> : vector<16x64xf32>
    %73 = tpu.matmul %71, %72, %cst_34 {dimension_numbers = #tpu.dot_dimension_numbers<[1], [0], [0], [1], [0, 0, 1, 1], [], []>} : vector<16x128xbf16>, vector<128x64xbf16>, vector<16x64xf32> -> vector<16x64xf32>
    %c0_35 = arith.constant 0 : index
    %c0_36 = arith.constant 0 : index
    %74 = vector.load %arg11[%c0_35, %c0_36] : memref<1x64xf32, #tpu.memory_space<vmem>>, vector<1x64xf32>
    %75 = vector.broadcast %74 : vector<1x64xf32> to vector<16x64xf32>
    %76 = arith.addf %73, %75 : vector<16x64xf32>
    %cst_37 = arith.constant dense<0.000000e+00> : vector<16xf32>
    %77 = vector.multi_reduction <add>, %76, %cst_37 [1] : vector<16x64xf32> to vector<16xf32>
    %78 = vector.shape_cast %77 : vector<16xf32> to vector<16x1xf32>
    %cst_38 = arith.constant 6.400000e+01 : f32
    %79 = vector.broadcast %cst_38 : f32 to vector<16x1xf32>
    %80 = arith.divf %78, %79 : vector<16x1xf32>
    %81 = vector.broadcast %80 : vector<16x1xf32> to vector<16x64xf32>
    %82 = arith.subf %76, %81 : vector<16x64xf32>
    %83 = arith.mulf %82, %82 : vector<16x64xf32>
    %cst_39 = arith.constant dense<0.000000e+00> : vector<16xf32>
    %84 = vector.multi_reduction <add>, %83, %cst_39 [1] : vector<16x64xf32> to vector<16xf32>
    %85 = vector.shape_cast %84 : vector<16xf32> to vector<16x1xf32>
    %cst_40 = arith.constant 6.400000e+01 : f32
    %86 = vector.broadcast %cst_40 : f32 to vector<16x1xf32>
    %87 = arith.divf %85, %86 : vector<16x1xf32>
    %88 = vector.broadcast %80 : vector<16x1xf32> to vector<16x64xf32>
    %89 = arith.subf %76, %88 : vector<16x64xf32>
    %cst_41 = arith.constant 9.99999974E-6 : f32
    %90 = vector.broadcast %cst_41 : f32 to vector<16x1xf32>
    %91 = arith.addf %87, %90 : vector<16x1xf32>
    %92 = math.rsqrt %91 : vector<16x1xf32>
    %93 = vector.broadcast %92 : vector<16x1xf32> to vector<16x64xf32>
    %94 = arith.mulf %89, %93 : vector<16x64xf32>
    %c0_42 = arith.constant 0 : index
    %c0_43 = arith.constant 0 : index
    %95 = vector.load %arg12[%c0_42, %c0_43] : memref<1x64xf32, #tpu.memory_space<vmem>>, vector<1x64xf32>
    %96 = vector.broadcast %95 : vector<1x64xf32> to vector<16x64xf32>
    %97 = arith.mulf %94, %96 : vector<16x64xf32>
    %c0_44 = arith.constant 0 : index
    %c0_45 = arith.constant 0 : index
    %98 = vector.load %arg13[%c0_44, %c0_45] : memref<1x64xf32, #tpu.memory_space<vmem>>, vector<1x64xf32>
    %99 = vector.broadcast %98 : vector<1x64xf32> to vector<16x64xf32>
    %100 = arith.addf %97, %99 : vector<16x64xf32>
    %cst_46 = arith.constant 0.000000e+00 : f32
    %101 = vector.broadcast %cst_46 : f32 to vector<16x64xf32>
    %102 = arith.cmpf oge, %100, %101 : vector<16x64xf32>
    %cst_47 = arith.constant 2.000000e-01 : f32
    %103 = vector.broadcast %cst_47 : f32 to vector<16x64xf32>
    %104 = arith.mulf %103, %100 : vector<16x64xf32>
    %105 = arith.select %102, %100, %104 : vector<16x64xi1>, vector<16x64xf32>
    %106 = arith.truncf %105 : vector<16x64xf32> to vector<16x64xbf16>
    %c0_48 = arith.constant 0 : index
    %c0_49 = arith.constant 0 : index
    %107 = vector.load %arg14[%c0_48, %c0_49] : memref<64x64xbf16, #tpu.memory_space<vmem>>, vector<64x64xbf16>
    %cst_50 = arith.constant dense<0.000000e+00> : vector<16x64xf32>
    %108 = tpu.matmul %106, %107, %cst_50 {dimension_numbers = #tpu.dot_dimension_numbers<[1], [0], [0], [1], [0, 0, 1, 1], [], []>} : vector<16x64xbf16>, vector<64x64xbf16>, vector<16x64xf32> -> vector<16x64xf32>
    %c0_51 = arith.constant 0 : index
    %c0_52 = arith.constant 0 : index
    %109 = vector.load %arg15[%c0_51, %c0_52] : memref<1x64xf32, #tpu.memory_space<vmem>>, vector<1x64xf32>
    %110 = vector.broadcast %109 : vector<1x64xf32> to vector<16x64xf32>
    %111 = arith.addf %108, %110 : vector<16x64xf32>
    %112 = math.tanh %111 : vector<16x64xf32>
    %113 = arith.truncf %112 : vector<16x64xf32> to vector<16x64xbf16>
    %c0_53 = arith.constant 0 : index
    %c0_54 = arith.constant 0 : index
    %114 = vector.load %arg16[%c0_53, %c0_54] : memref<64x64xbf16, #tpu.memory_space<vmem>>, vector<64x64xbf16>
    %cst_55 = arith.constant dense<0.000000e+00> : vector<16x64xf32>
    %115 = tpu.matmul %113, %114, %cst_55 {dimension_numbers = #tpu.dot_dimension_numbers<[1], [0], [0], [1], [0, 0, 1, 1], [], []>} : vector<16x64xbf16>, vector<64x64xbf16>, vector<16x64xf32> -> vector<16x64xf32>
    %c0_56 = arith.constant 0 : index
    %c0_57 = arith.constant 0 : index
    %116 = vector.load %arg17[%c0_56, %c0_57] : memref<1x64xf32, #tpu.memory_space<vmem>>, vector<1x64xf32>
    %117 = vector.broadcast %116 : vector<1x64xf32> to vector<16x64xf32>
    %118 = arith.addf %115, %117 : vector<16x64xf32>
    %cst_58 = arith.constant dense<0.000000e+00> : vector<16xf32>
    %119 = vector.multi_reduction <add>, %118, %cst_58 [1] : vector<16x64xf32> to vector<16xf32>
    %120 = vector.shape_cast %119 : vector<16xf32> to vector<16x1xf32>
    %cst_59 = arith.constant 6.400000e+01 : f32
    %121 = vector.broadcast %cst_59 : f32 to vector<16x1xf32>
    %122 = arith.divf %120, %121 : vector<16x1xf32>
    %123 = vector.broadcast %122 : vector<16x1xf32> to vector<16x64xf32>
    %124 = arith.subf %118, %123 : vector<16x64xf32>
    %125 = arith.mulf %124, %124 : vector<16x64xf32>
    %cst_60 = arith.constant dense<0.000000e+00> : vector<16xf32>
    %126 = vector.multi_reduction <add>, %125, %cst_60 [1] : vector<16x64xf32> to vector<16xf32>
    %127 = vector.shape_cast %126 : vector<16xf32> to vector<16x1xf32>
    %cst_61 = arith.constant 6.400000e+01 : f32
    %128 = vector.broadcast %cst_61 : f32 to vector<16x1xf32>
    %129 = arith.divf %127, %128 : vector<16x1xf32>
    %130 = vector.broadcast %122 : vector<16x1xf32> to vector<16x64xf32>
    %131 = arith.subf %118, %130 : vector<16x64xf32>
    %cst_62 = arith.constant 9.99999974E-6 : f32
    %132 = vector.broadcast %cst_62 : f32 to vector<16x1xf32>
    %133 = arith.addf %129, %132 : vector<16x1xf32>
    %134 = math.rsqrt %133 : vector<16x1xf32>
    %135 = vector.broadcast %134 : vector<16x1xf32> to vector<16x64xf32>
    %136 = arith.mulf %131, %135 : vector<16x64xf32>
    %c0_63 = arith.constant 0 : index
    %c0_64 = arith.constant 0 : index
    %137 = vector.load %arg18[%c0_63, %c0_64] : memref<1x64xf32, #tpu.memory_space<vmem>>, vector<1x64xf32>
    %138 = vector.broadcast %137 : vector<1x64xf32> to vector<16x64xf32>
    %139 = arith.mulf %136, %138 : vector<16x64xf32>
    %c0_65 = arith.constant 0 : index
    %c0_66 = arith.constant 0 : index
    %140 = vector.load %arg19[%c0_65, %c0_66] : memref<1x64xf32, #tpu.memory_space<vmem>>, vector<1x64xf32>
    %141 = vector.broadcast %140 : vector<1x64xf32> to vector<16x64xf32>
    %142 = arith.addf %139, %141 : vector<16x64xf32>
    %cst_67 = arith.constant 0.000000e+00 : f32
    %143 = vector.broadcast %cst_67 : f32 to vector<16x64xf32>
    %144 = arith.cmpf oge, %142, %143 : vector<16x64xf32>
    %cst_68 = arith.constant 2.000000e-01 : f32
    %145 = vector.broadcast %cst_68 : f32 to vector<16x64xf32>
    %146 = arith.mulf %145, %142 : vector<16x64xf32>
    %147 = arith.select %144, %142, %146 : vector<16x64xi1>, vector<16x64xf32>
    %148 = arith.truncf %147 : vector<16x64xf32> to vector<16x64xbf16>
    %c0_69 = arith.constant 0 : index
    %c0_70 = arith.constant 0 : index
    %149 = vector.load %arg20[%c0_69, %c0_70] : memref<64x128xbf16, #tpu.memory_space<vmem>>, vector<64x128xbf16>
    %cst_71 = arith.constant dense<0.000000e+00> : vector<16x128xf32>
    %150 = tpu.matmul %148, %149, %cst_71 {dimension_numbers = #tpu.dot_dimension_numbers<[1], [0], [0], [1], [0, 0, 1, 1], [], []>} : vector<16x64xbf16>, vector<64x128xbf16>, vector<16x128xf32> -> vector<16x128xf32>
    %c0_72 = arith.constant 0 : index
    %c0_73 = arith.constant 0 : index
    %151 = vector.load %arg21[%c0_72, %c0_73] : memref<1x128xf32, #tpu.memory_space<vmem>>, vector<1x128xf32>
    %152 = vector.broadcast %151 : vector<1x128xf32> to vector<16x128xf32>
    %153 = arith.addf %150, %152 : vector<16x128xf32>
    %cst_74 = arith.constant dense<0.000000e+00> : vector<16xf32>
    %154 = vector.multi_reduction <add>, %153, %cst_74 [1] : vector<16x128xf32> to vector<16xf32>
    %155 = vector.shape_cast %154 : vector<16xf32> to vector<16x1xf32>
    %cst_75 = arith.constant 1.280000e+02 : f32
    %156 = vector.broadcast %cst_75 : f32 to vector<16x1xf32>
    %157 = arith.divf %155, %156 : vector<16x1xf32>
    %158 = vector.broadcast %157 : vector<16x1xf32> to vector<16x128xf32>
    %159 = arith.subf %153, %158 : vector<16x128xf32>
    %160 = arith.mulf %159, %159 : vector<16x128xf32>
    %cst_76 = arith.constant dense<0.000000e+00> : vector<16xf32>
    %161 = vector.multi_reduction <add>, %160, %cst_76 [1] : vector<16x128xf32> to vector<16xf32>
    %162 = vector.shape_cast %161 : vector<16xf32> to vector<16x1xf32>
    %cst_77 = arith.constant 1.280000e+02 : f32
    %163 = vector.broadcast %cst_77 : f32 to vector<16x1xf32>
    %164 = arith.divf %162, %163 : vector<16x1xf32>
    %165 = vector.broadcast %157 : vector<16x1xf32> to vector<16x128xf32>
    %166 = arith.subf %153, %165 : vector<16x128xf32>
    %cst_78 = arith.constant 9.99999974E-6 : f32
    %167 = vector.broadcast %cst_78 : f32 to vector<16x1xf32>
    %168 = arith.addf %164, %167 : vector<16x1xf32>
    %169 = math.rsqrt %168 : vector<16x1xf32>
    %170 = vector.broadcast %169 : vector<16x1xf32> to vector<16x128xf32>
    %171 = arith.mulf %166, %170 : vector<16x128xf32>
    %c0_79 = arith.constant 0 : index
    %c0_80 = arith.constant 0 : index
    %172 = vector.load %arg22[%c0_79, %c0_80] : memref<1x128xf32, #tpu.memory_space<vmem>>, vector<1x128xf32>
    %173 = vector.broadcast %172 : vector<1x128xf32> to vector<16x128xf32>
    %174 = arith.mulf %171, %173 : vector<16x128xf32>
    %c0_81 = arith.constant 0 : index
    %c0_82 = arith.constant 0 : index
    %175 = vector.load %arg23[%c0_81, %c0_82] : memref<1x128xf32, #tpu.memory_space<vmem>>, vector<1x128xf32>
    %176 = vector.broadcast %175 : vector<1x128xf32> to vector<16x128xf32>
    %177 = arith.addf %174, %176 : vector<16x128xf32>
    %cst_83 = arith.constant 0.000000e+00 : f32
    %178 = vector.broadcast %cst_83 : f32 to vector<16x128xf32>
    %179 = arith.cmpf oge, %177, %178 : vector<16x128xf32>
    %cst_84 = arith.constant 2.000000e-01 : f32
    %180 = vector.broadcast %cst_84 : f32 to vector<16x128xf32>
    %181 = arith.mulf %180, %177 : vector<16x128xf32>
    %182 = arith.select %179, %177, %181 : vector<16x128xi1>, vector<16x128xf32>
    %183 = arith.truncf %182 : vector<16x128xf32> to vector<16x128xbf16>
    %c0_85 = arith.constant 0 : index
    %c0_86 = arith.constant 0 : index
    %184 = vector.load %arg24[%c0_85, %c0_86] : memref<128x256xbf16, #tpu.memory_space<vmem>>, vector<128x256xbf16>
    %cst_87 = arith.constant dense<0.000000e+00> : vector<16x256xf32>
    %185 = tpu.matmul %183, %184, %cst_87 {dimension_numbers = #tpu.dot_dimension_numbers<[1], [0], [0], [1], [0, 0, 1, 1], [], []>} : vector<16x128xbf16>, vector<128x256xbf16>, vector<16x256xf32> -> vector<16x256xf32>
    %c0_88 = arith.constant 0 : index
    %c0_89 = arith.constant 0 : index
    %186 = vector.load %arg25[%c0_88, %c0_89] : memref<1x256xf32, #tpu.memory_space<vmem>>, vector<1x256xf32>
    %187 = vector.broadcast %186 : vector<1x256xf32> to vector<16x256xf32>
    %188 = arith.addf %185, %187 : vector<16x256xf32>
    %cst_90 = arith.constant dense<0.000000e+00> : vector<16xf32>
    %189 = vector.multi_reduction <add>, %188, %cst_90 [1] : vector<16x256xf32> to vector<16xf32>
    %190 = vector.shape_cast %189 : vector<16xf32> to vector<16x1xf32>
    %cst_91 = arith.constant 2.560000e+02 : f32
    %191 = vector.broadcast %cst_91 : f32 to vector<16x1xf32>
    %192 = arith.divf %190, %191 : vector<16x1xf32>
    %193 = vector.broadcast %192 : vector<16x1xf32> to vector<16x256xf32>
    %194 = arith.subf %188, %193 : vector<16x256xf32>
    %195 = arith.mulf %194, %194 : vector<16x256xf32>
    %cst_92 = arith.constant dense<0.000000e+00> : vector<16xf32>
    %196 = vector.multi_reduction <add>, %195, %cst_92 [1] : vector<16x256xf32> to vector<16xf32>
    %197 = vector.shape_cast %196 : vector<16xf32> to vector<16x1xf32>
    %cst_93 = arith.constant 2.560000e+02 : f32
    %198 = vector.broadcast %cst_93 : f32 to vector<16x1xf32>
    %199 = arith.divf %197, %198 : vector<16x1xf32>
    %200 = vector.broadcast %192 : vector<16x1xf32> to vector<16x256xf32>
    %201 = arith.subf %188, %200 : vector<16x256xf32>
    %cst_94 = arith.constant 9.99999974E-6 : f32
    %202 = vector.broadcast %cst_94 : f32 to vector<16x1xf32>
    %203 = arith.addf %199, %202 : vector<16x1xf32>
    %204 = math.rsqrt %203 : vector<16x1xf32>
    %205 = vector.broadcast %204 : vector<16x1xf32> to vector<16x256xf32>
    %206 = arith.mulf %201, %205 : vector<16x256xf32>
    %c0_95 = arith.constant 0 : index
    %c0_96 = arith.constant 0 : index
    %207 = vector.load %arg26[%c0_95, %c0_96] : memref<1x256xf32, #tpu.memory_space<vmem>>, vector<1x256xf32>
    %208 = vector.broadcast %207 : vector<1x256xf32> to vector<16x256xf32>
    %209 = arith.mulf %206, %208 : vector<16x256xf32>
    %c0_97 = arith.constant 0 : index
    %c0_98 = arith.constant 0 : index
    %210 = vector.load %arg27[%c0_97, %c0_98] : memref<1x256xf32, #tpu.memory_space<vmem>>, vector<1x256xf32>
    %211 = vector.broadcast %210 : vector<1x256xf32> to vector<16x256xf32>
    %212 = arith.addf %209, %211 : vector<16x256xf32>
    %cst_99 = arith.constant 0.000000e+00 : f32
    %213 = vector.broadcast %cst_99 : f32 to vector<16x256xf32>
    %214 = arith.cmpf oge, %212, %213 : vector<16x256xf32>
    %cst_100 = arith.constant 2.000000e-01 : f32
    %215 = vector.broadcast %cst_100 : f32 to vector<16x256xf32>
    %216 = arith.mulf %215, %212 : vector<16x256xf32>
    %217 = arith.select %214, %212, %216 : vector<16x256xi1>, vector<16x256xf32>
    %218 = arith.truncf %217 : vector<16x256xf32> to vector<16x256xbf16>
    %c0_101 = arith.constant 0 : index
    %c0_102 = arith.constant 0 : index
    %219 = vector.load %arg28[%c0_101, %c0_102] : memref<256x256xbf16, #tpu.memory_space<vmem>>, vector<256x256xbf16>
    %cst_103 = arith.constant dense<0.000000e+00> : vector<16x256xf32>
    %220 = tpu.matmul %218, %219, %cst_103 {dimension_numbers = #tpu.dot_dimension_numbers<[1], [0], [0], [1], [0, 0, 1, 1], [], []>} : vector<16x256xbf16>, vector<256x256xbf16>, vector<16x256xf32> -> vector<16x256xf32>
    %c0_104 = arith.constant 0 : index
    %c0_105 = arith.constant 0 : index
    %221 = vector.load %arg29[%c0_104, %c0_105] : memref<1x256xf32, #tpu.memory_space<vmem>>, vector<1x256xf32>
    %222 = vector.broadcast %221 : vector<1x256xf32> to vector<16x256xf32>
    %223 = arith.addf %220, %222 : vector<16x256xf32>
    %c0_106 = arith.constant 0 : index
    %c0_107 = arith.constant 0 : index
    %224 = vector.load %arg30[%c0_106, %c0_107] : memref<16x256xf32, #tpu.memory_space<vmem>>, vector<16x256xf32>
    tpu.vector_store %arg30[%c0_106, %c0_107], %223 {strides = array<i32>} : memref<16x256xf32, #tpu.memory_space<vmem>>, vector<16x256xf32>,
    %c0_108 = arith.constant 0 : index
    %c0_109 = arith.constant 0 : index
    %225 = vector.load %arg31[%c0_108, %c0_109] : memref<16x64xf32, #tpu.memory_space<vmem>>, vector<16x64xf32>
    tpu.vector_store %arg31[%c0_108, %c0_109], %112 {strides = array<i32>} : memref<16x64xf32, #tpu.memory_space<vmem>>, vector<16x64xf32>,
    return
  }
  func.func @transform_0(%arg0: i32) -> (i32, i32) {
    %c0_i32 = arith.constant 0 : i32
    %c0_i32_0 = arith.constant 0 : i32
    return %arg0, %c0_i32 : i32, i32
  }
  func.func @transform_1(%arg0: i32) -> (i32, i32) {
    %c0_i32 = arith.constant 0 : i32
    %c0_i32_0 = arith.constant 0 : i32
    %c0_i32_1 = arith.constant 0 : i32
    return %c0_i32, %c0_i32_0 : i32, i32
  }
  func.func @transform_2(%arg0: i32) -> (i32, i32) {
    %c0_i32 = arith.constant 0 : i32
    %c0_i32_0 = arith.constant 0 : i32
    %c0_i32_1 = arith.constant 0 : i32
    return %c0_i32, %c0_i32_0 : i32, i32
  }
  func.func @transform_3(%arg0: i32) -> (i32, i32) {
    %c0_i32 = arith.constant 0 : i32
    %c0_i32_0 = arith.constant 0 : i32
    %c0_i32_1 = arith.constant 0 : i32
    return %c0_i32, %c0_i32_0 : i32, i32
  }
  func.func @transform_4(%arg0: i32) -> (i32, i32) {
    %c0_i32 = arith.constant 0 : i32
    %c0_i32_0 = arith.constant 0 : i32
    %c0_i32_1 = arith.constant 0 : i32
    return %c0_i32, %c0_i32_0 : i32, i32
  }
  func.func @transform_5(%arg0: i32) -> (i32, i32) {
    %c0_i32 = arith.constant 0 : i32
    %c0_i32_0 = arith.constant 0 : i32
    %c0_i32_1 = arith.constant 0 : i32
    return %c0_i32, %c0_i32_0 : i32, i32
  }
  func.func @transform_6(%arg0: i32) -> (i32, i32) {
    %c0_i32 = arith.constant 0 : i32
    %c0_i32_0 = arith.constant 0 : i32
    %c0_i32_1 = arith.constant 0 : i32
    return %c0_i32, %c0_i32_0 : i32, i32
  }
  func.func @transform_7(%arg0: i32) -> (i32, i32) {
    %c0_i32 = arith.constant 0 : i32
    %c0_i32_0 = arith.constant 0 : i32
    %c0_i32_1 = arith.constant 0 : i32
    return %c0_i32, %c0_i32_0 : i32, i32
  }
  func.func @transform_8(%arg0: i32) -> (i32, i32) {
    %c0_i32 = arith.constant 0 : i32
    %c0_i32_0 = arith.constant 0 : i32
    %c0_i32_1 = arith.constant 0 : i32
    return %c0_i32, %c0_i32_0 : i32, i32
  }
  func.func @transform_9(%arg0: i32) -> (i32, i32) {
    %c0_i32 = arith.constant 0 : i32
    %c0_i32_0 = arith.constant 0 : i32
    %c0_i32_1 = arith.constant 0 : i32
    return %c0_i32, %c0_i32_0 : i32, i32
  }
  func.func @transform_10(%arg0: i32) -> (i32, i32) {
    %c0_i32 = arith.constant 0 : i32
    %c0_i32_0 = arith.constant 0 : i32
    %c0_i32_1 = arith.constant 0 : i32
    return %c0_i32, %c0_i32_0 : i32, i32
  }
  func.func @transform_11(%arg0: i32) -> (i32, i32) {
    %c0_i32 = arith.constant 0 : i32
    %c0_i32_0 = arith.constant 0 : i32
    %c0_i32_1 = arith.constant 0 : i32
    return %c0_i32, %c0_i32_0 : i32, i32
  }
  func.func @transform_12(%arg0: i32) -> (i32, i32) {
    %c0_i32 = arith.constant 0 : i32
    %c0_i32_0 = arith.constant 0 : i32
    %c0_i32_1 = arith.constant 0 : i32
    return %c0_i32, %c0_i32_0 : i32, i32
  }
  func.func @transform_13(%arg0: i32) -> (i32, i32) {
    %c0_i32 = arith.constant 0 : i32
    %c0_i32_0 = arith.constant 0 : i32
    %c0_i32_1 = arith.constant 0 : i32
    return %c0_i32, %c0_i32_0 : i32, i32
  }
  func.func @transform_14(%arg0: i32) -> (i32, i32) {
    %c0_i32 = arith.constant 0 : i32
    %c0_i32_0 = arith.constant 0 : i32
    %c0_i32_1 = arith.constant 0 : i32
    return %c0_i32, %c0_i32_0 : i32, i32
  }
  func.func @transform_15(%arg0: i32) -> (i32, i32) {
    %c0_i32 = arith.constant 0 : i32
    %c0_i32_0 = arith.constant 0 : i32
    %c0_i32_1 = arith.constant 0 : i32
    return %c0_i32, %c0_i32_0 : i32, i32
  }
  func.func @transform_16(%arg0: i32) -> (i32, i32) {
    %c0_i32 = arith.constant 0 : i32
    %c0_i32_0 = arith.constant 0 : i32
    %c0_i32_1 = arith.constant 0 : i32
    return %c0_i32, %c0_i32_0 : i32, i32
  }
  func.func @transform_17(%arg0: i32) -> (i32, i32) {
    %c0_i32 = arith.constant 0 : i32
    %c0_i32_0 = arith.constant 0 : i32
    %c0_i32_1 = arith.constant 0 : i32
    return %c0_i32, %c0_i32_0 : i32, i32
  }
  func.func @transform_18(%arg0: i32) -> (i32, i32) {
    %c0_i32 = arith.constant 0 : i32
    %c0_i32_0 = arith.constant 0 : i32
    %c0_i32_1 = arith.constant 0 : i32
    return %c0_i32, %c0_i32_0 : i32, i32
  }
  func.func @transform_19(%arg0: i32) -> (i32, i32) {
    %c0_i32 = arith.constant 0 : i32
    %c0_i32_0 = arith.constant 0 : i32
    %c0_i32_1 = arith.constant 0 : i32
    return %c0_i32, %c0_i32_0 : i32, i32
  }
  func.func @transform_20(%arg0: i32) -> (i32, i32) {
    %c0_i32 = arith.constant 0 : i32
    %c0_i32_0 = arith.constant 0 : i32
    %c0_i32_1 = arith.constant 0 : i32
    return %c0_i32, %c0_i32_0 : i32, i32
  }
  func.func @transform_21(%arg0: i32) -> (i32, i32) {
    %c0_i32 = arith.constant 0 : i32
    %c0_i32_0 = arith.constant 0 : i32
    %c0_i32_1 = arith.constant 0 : i32
    return %c0_i32, %c0_i32_0 : i32, i32
  }
  func.func @transform_22(%arg0: i32) -> (i32, i32) {
    %c0_i32 = arith.constant 0 : i32
    %c0_i32_0 = arith.constant 0 : i32
    %c0_i32_1 = arith.constant 0 : i32
    return %c0_i32, %c0_i32_0 : i32, i32
  }
  func.func @transform_23(%arg0: i32) -> (i32, i32) {
    %c0_i32 = arith.constant 0 : i32
    %c0_i32_0 = arith.constant 0 : i32
    %c0_i32_1 = arith.constant 0 : i32
    return %c0_i32, %c0_i32_0 : i32, i32
  }
  func.func @transform_24(%arg0: i32) -> (i32, i32) {
    %c0_i32 = arith.constant 0 : i32
    %c0_i32_0 = arith.constant 0 : i32
    %c0_i32_1 = arith.constant 0 : i32
    return %c0_i32, %c0_i32_0 : i32, i32
  }
  func.func @transform_25(%arg0: i32) -> (i32, i32) {
    %c0_i32 = arith.constant 0 : i32
    %c0_i32_0 = arith.constant 0 : i32
    %c0_i32_1 = arith.constant 0 : i32
    return %c0_i32, %c0_i32_0 : i32, i32
  }
  func.func @transform_26(%arg0: i32) -> (i32, i32) {
    %c0_i32 = arith.constant 0 : i32
    %c0_i32_0 = arith.constant 0 : i32
    %c0_i32_1 = arith.constant 0 : i32
    return %c0_i32, %c0_i32_0 : i32, i32
  }
  func.func @transform_27(%arg0: i32) -> (i32, i32) {
    %c0_i32 = arith.constant 0 : i32
    %c0_i32_0 = arith.constant 0 : i32
    %c0_i32_1 = arith.constant 0 : i32
    return %c0_i32, %c0_i32_0 : i32, i32
  }
  func.func @transform_28(%arg0: i32) -> (i32, i32) {
    %c0_i32 = arith.constant 0 : i32
    %c0_i32_0 = arith.constant 0 : i32
    %c0_i32_1 = arith.constant 0 : i32
    return %c0_i32, %c0_i32_0 : i32, i32
  }
  func.func @transform_29(%arg0: i32) -> (i32, i32) {
    %c0_i32 = arith.constant 0 : i32
    %c0_i32_0 = arith.constant 0 : i32
    return %arg0, %c0_i32 : i32, i32
  }
  func.func @transform_30(%arg0: i32) -> (i32, i32) {
    %c0_i32 = arith.constant 0 : i32
    %c0_i32_0 = arith.constant 0 : i32
    return %arg0, %c0_i32 : i32, i32
  }
}

</mosaic_0001>

<llo_original>
// kernel: autoencoder_forward.1
$region0: #{autoencoder_forward.1}
  #allocation0 [shape = 'u32[]', space=smem, size = 0x4, offset = 0x4, fixed_abs, tag = 'smem constant byte address 0x4 - core index']
  #allocation1 [shape = 'u32[144,128]{1,0:T(1,128)}', space=vmem, size = 0x12000, scoped, tag = 'internal scratch']
  %s0 = inlined_call_operand.smem [shape: u32[31], index: -1, kind: input, shape index: {}]
  %s1 = sld [smem:[%s0]]
  %s2 = scalar_lea.smem %s0, 1
  %s3 = sld [smem:[%s2]]
  %s4 = scalar_lea.smem %s0, 2
  %s5 = sld [smem:[%s4]]
  %s6 = scalar_lea.smem %s0, 3
  %s7 = sld [smem:[%s6]]
  %s8 = scalar_lea.smem %s0, 4
  %s9 = sld [smem:[%s8]]
  %s10 = scalar_lea.smem %s0, 5
  %s11 = sld [smem:[%s10]]
  %s12 = scalar_lea.smem %s0, 6
  %s13 = sld [smem:[%s12]]
  %s14 = scalar_lea.smem %s0, 7
  %s15 = sld [smem:[%s14]]
  %s16 = scalar_lea.smem %s0, 8
  %s17 = sld [smem:[%s16]]
  %s18 = scalar_lea.smem %s0, 9
  %s19 = sld [smem:[%s18]]
  %s20 = scalar_lea.smem %s0, 10
  %s21 = sld [smem:[%s20]]
  %s22 = scalar_lea.smem %s0, 11
  %s23 = sld [smem:[%s22]]
  %s24 = scalar_lea.smem %s0, 12
  %s25 = sld [smem:[%s24]]
  %s26 = scalar_lea.smem %s0, 13
  %s27 = sld [smem:[%s26]]
  %s28 = scalar_lea.smem %s0, 14
  %s29 = sld [smem:[%s28]]
  %s30 = scalar_lea.smem %s0, 15
  %s31 = sld [smem:[%s30]]
  %s32 = scalar_lea.smem %s0, 16
  %s33 = sld [smem:[%s32]]
  %s34 = scalar_lea.smem %s0, 17
  %s35 = sld [smem:[%s34]]
  %s36 = scalar_lea.smem %s0, 18
  %s37 = sld [smem:[%s36]]
  %s38 = scalar_lea.smem %s0, 19
  %s39 = sld [smem:[%s38]]
  %s40 = scalar_lea.smem %s0, 20
  %s41 = sld [smem:[%s40]]
  %s42 = scalar_lea.smem %s0, 21
  %s43 = sld [smem:[%s42]]
  %s44 = scalar_lea.smem %s0, 22
  %s45 = sld [smem:[%s44]]
  %s46 = scalar_lea.smem %s0, 23
  %s47 = sld [smem:[%s46]]
  %s48 = scalar_lea.smem %s0, 24
  %s49 = sld [smem:[%s48]]
  %s50 = scalar_lea.smem %s0, 25
  %s51 = sld [smem:[%s50]]
  %s52 = scalar_lea.smem %s0, 26
  %s53 = sld [smem:[%s52]]
  %s54 = scalar_lea.smem %s0, 27
  %s55 = sld [smem:[%s54]]
  %s56 = scalar_lea.smem %s0, 28
  %s57 = sld [smem:[%s56]]
  %s58 = scalar_lea.smem %s0, 29
  %s59 = sld [smem:[%s58]]
  %s60 = scalar_lea.smem %s0, 30
  %s61 = sld [smem:[%s60]]
  %62 = xla_tuple %s59, %s61
  %s63 = sld [smem:[#allocation0]]
  $region249: #{autoencoder_forward.1} parent=0
    _
  %s65 = ssub.s32 1, %s63
  %s66 = scalar_select 0, %s65, %s63
  $region1: #{autoencoder_forward.1} parent=0
    #allocation2 [shape = 'u8[32768]{0}', space=vmem, size = 0x8000, scoped, tag = 'input window, operand 0']
    #allocation3 [shape = 's32[2]{0}', space=sflag, size = 0x8, scoped, tag = 'scoped memory for autoencoder_forward.1']
    #allocation4 [shape = 's32[2]{0}', space=sflag, size = 0x8, scoped, tag = 'scoped memory for autoencoder_forward.1']
    #allocation5 [shape = 'u8[131072]{0}', space=vmem, size = 0x20000, scoped, tag = 'input window, operand 1, single buffered']
    #allocation6 [shape = 's32[1]{0}', space=sflag, size = 0x4, scoped, tag = 'scoped memory for autoencoder_forward.1']
    #allocation7 [shape = 'u8[512]{0}', space=vmem, size = 0x400, scoped, tag = 'input window, operand 6, single buffered']
    #allocation8 [shape = 'u8[512]{0}', space=vmem, size = 0x400, scoped, tag = 'input window, operand 7, single buffered']
    #allocation9 [shape = 's32[1]{0}', space=sflag, size = 0x4, scoped, tag = 'scoped memory for autoencoder_forward.1']
    #allocation10 [shape = 'u8[512]{0}', space=vmem, size = 0x400, scoped, tag = 'input window, operand 8, single buffered']
    #allocation11 [shape = 'u8[512]{0}', space=vmem, size = 0x400, scoped, tag = 'input window, operand 10, single buffered']
    #allocation12 [shape = 's32[1]{0}', space=sflag, size = 0x4, scoped, tag = 'scoped memory for autoencoder_forward.1']
    #allocation13 [shape = 'u8[512]{0}', space=vmem, size = 0x400, scoped, tag = 'input window, operand 11, single buffered']
    #allocation14 [shape = 'u8[512]{0}', space=vmem, size = 0x400, scoped, tag = 'input window, operand 12, single buffered']
    #allocation15 [shape = 's32[1]{0}', space=sflag, size = 0x4, scoped, tag = 'scoped memory for autoencoder_forward.1']
    #allocation16 [shape = 'u8[16384]{0}', space=vmem, size = 0x4000, scoped, tag = 'input window, operand 13, single buffered']
    #allocation17 [shape = 'u8[512]{0}', space=vmem, size = 0x400, scoped, tag = 'input window, operand 14, single buffered']
    #allocation18 [shape = 's32[1]{0}', space=sflag, size = 0x4, scoped, tag = 'scoped memory for autoencoder_forward.1']
    #allocation19 [shape = 'u8[16384]{0}', space=vmem, size = 0x4000, scoped, tag = 'input window, operand 15, single buffered']
    #allocation20 [shape = 'u8[512]{0}', space=vmem, size = 0x400, scoped, tag = 'input window, operand 16, single buffered']
    #allocation21 [shape = 's32[1]{0}', space=sflag, size = 0x4, scoped, tag = 'scoped memory for autoencoder_forward.1']
    #allocation22 [shape = 'u8[512]{0}', space=vmem, size = 0x400, scoped, tag = 'input window, operand 17, single buffered']
    #allocation23 [shape = 'u8[512]{0}', space=vmem, size = 0x400, scoped, tag = 'input window, operand 18, single buffered']
    #allocation24 [shape = 's32[1]{0}', space=sflag, size = 0x4, scoped, tag = 'scoped memory for autoencoder_forward.1']
    #allocation25 [shape = 'u8[16384]{0}', space=vmem, size = 0x4000, scoped, tag = 'input window, operand 19, single buffered']
    #allocation26 [shape = 'u8[512]{0}', space=vmem, size = 0x400, scoped, tag = 'input window, operand 20, single buffered']
    #allocation27 [shape = 's32[1]{0}', space=sflag, size = 0x4, scoped, tag = 'scoped memory for autoencoder_forward.1']
    #allocation28 [shape = 'u8[512]{0}', space=vmem, size = 0x400, scoped, tag = 'input window, operand 21, single buffered']
    #allocation29 [shape = 'u8[512]{0}', space=vmem, size = 0x400, scoped, tag = 'input window, operand 22, single buffered']
    #allocation30 [shape = 's32[1]{0}', space=sflag, size = 0x4, scoped, tag = 'scoped memory for autoencoder_forward.1']
    #allocation31 [shape = 'u8[65536]{0}', space=vmem, size = 0x10000, scoped, tag = 'input window, operand 23, single buffered']
    #allocation32 [shape = 'u8[1024]{0}', space=vmem, size = 0x400, scoped, tag = 'input window, operand 25, single buffered']
    #allocation33 [shape = 's32[1]{0}', space=sflag, size = 0x4, scoped, tag = 'scoped memory for autoencoder_forward.1']
    #allocation34 [shape = 'u8[1024]{0}', space=vmem, size = 0x400, scoped, tag = 'input window, operand 26, single buffered']
    #allocation35 [shape = 'u8[131072]{0}', space=vmem, size = 0x20000, scoped, tag = 'input window, operand 27, single buffered']
    #allocation36 [shape = 's32[1]{0}', space=sflag, size = 0x4, scoped, tag = 'scoped memory for autoencoder_forward.1']
    #allocation37 [shape = 'u8[1024]{0}', space=vmem, size = 0x400, scoped, tag = 'input window, operand 28, single buffered']
    #allocation38 [shape = 'u8[32768]{0}', space=vmem, size = 0x8000, scoped, tag = 'output window, operand 0']
    #allocation39 [shape = 'u8[16384]{0}', space=vmem, size = 0x4000, scoped, tag = 'output window, operand 1']
    #allocation40 [shape = 's32[2]{0}', space=sflag, size = 0x8, scoped, tag = 'scoped memory for autoencoder_forward.1']
    %67 = vsyncpa [#allocation3], 0
    %s68 = scalar_lea.sflag [#allocation3], 1
    %69 = vsyncpa %s68, 0
    %70 = vsyncpa [#allocation6], 0
    %71 = vsyncpa [#allocation9], 0
    %72 = vsyncpa [#allocation12], 0
    %73 = vsyncpa [#allocation15], 0
    %74 = vsyncpa [#allocation18], 0
    %75 = vsyncpa [#allocation21], 0
    %76 = vsyncpa [#allocation24], 0
    %77 = vsyncpa [#allocation27], 0
    %78 = vsyncpa [#allocation30], 0
    %79 = vsyncpa [#allocation33], 0
    %80 = vsyncpa [#allocation36], 0
    %81 = vsyncpa [#allocation4], 0
    %s82 = scalar_lea.sflag [#allocation4], 1
    %83 = vsyncpa %s82, 0
    %84 = vsyncpa [#allocation40], 0
    %s85 = scalar_lea.sflag [#allocation40], 1
    %86 = vsyncpa %s85, 0
    loop: start=0, step=1, limit=6
    $region2: #{autoencoder_forward.1} parent=1 // loop_pre_header
      _
    $region3: #{autoencoder_forward.1} parent=1 // loop_header
      %s88 = sphi 0, %s92
      %p89 = scmp.ge.s32.totalorder %s88, 6
      %s98 = sphi 0, %s100
      %s101 = sphi 0, %s98
      %s102 = sphi 0, %s101
      %s118 = sphi 0, %s102
      %s122 = sphi 0, %s122
      %s124 = sphi 0, %s122
      %s125 = sphi 0, %s124
      %s139 = sphi 0, %s125
      %s143 = sphi 0, %s143
      %s145 = sphi 0, %s143
      %s146 = sphi 0, %s145
      %s160 = sphi 0, %s146
      %s164 = sphi 0, %s164
      %s166 = sphi 0, %s164
      %s167 = sphi 0, %s166
      %s181 = sphi 0, %s167
      %s185 = sphi 0, %s185
      %s187 = sphi 0, %s185
      %s188 = sphi 0, %s187
      %s202 = sphi 0, %s188
      %s206 = sphi 0, %s206
      %s208 = sphi 0, %s206
      %s209 = sphi 0, %s208
      %s223 = sphi 0, %s209
      %s227 = sphi 0, %s227
      %s229 = sphi 0, %s227
      %s230 = sphi 0, %s229
      %s244 = sphi 0, %s230
      %s248 = sphi 0, %s248
      %s250 = sphi 0, %s248
      %s251 = sphi 0, %s250
      %s265 = sphi 0, %s251
      %s269 = sphi 0, %s269
      %s271 = sphi 0, %s269
      %s272 = sphi 0, %s271
      %s286 = sphi 0, %s272
      %s290 = sphi 0, %s290
      %s292 = sphi 0, %s290
      %s293 = sphi 0, %s292
      %s307 = sphi 0, %s293
      %s311 = sphi 0, %s311
      %s313 = sphi 0, %s311
      %s314 = sphi 0, %s313
      %s328 = sphi 0, %s314
      %s332 = sphi 0, %s332
      %s334 = sphi 0, %s332
      %s335 = sphi 0, %s334
      %s349 = sphi 0, %s335
      %s353 = sphi 0, %s353
      %s355 = sphi 0, %s353
      %s356 = sphi 0, %s355
      %s370 = sphi 0, %s356
      %s374 = sphi 0, %s374
      %s376 = sphi 0, %s374
      %s377 = sphi 0, %s376
      %s391 = sphi 0, %s377
      %s395 = sphi 0, %s395
      %s397 = sphi 0, %s395
      %s398 = sphi 0, %s397
      %s412 = sphi 0, %s398
      %s416 = sphi 0, %s416
      %s418 = sphi 0, %s416
      %s419 = sphi 0, %s418
      %s433 = sphi 0, %s419
      %s437 = sphi 0, %s437
      %s439 = sphi 0, %s437
      %s440 = sphi 0, %s439
      %s454 = sphi 0, %s440
      %s458 = sphi 0, %s458
      %s460 = sphi 0, %s458
      %s461 = sphi 0, %s460
      %s475 = sphi 0, %s461
      %s479 = sphi 0, %s479
      %s481 = sphi 0, %s479
      %s482 = sphi 0, %s481
      %s496 = sphi 0, %s482
      %s500 = sphi 0, %s500
      %s502 = sphi 0, %s500
      %s503 = sphi 0, %s502
      %s517 = sphi 0, %s503
      %s521 = sphi 0, %s521
      %s523 = sphi 0, %s521
      %s524 = sphi 0, %s523
      %s538 = sphi 0, %s524
      %s542 = sphi 0, %s542
      %s544 = sphi 0, %s542
      %s545 = sphi 0, %s544
      %s559 = sphi 0, %s545
      %s563 = sphi 0, %s563
      %s565 = sphi 0, %s563
      %s566 = sphi 0, %s565
      %s580 = sphi 0, %s566
      %s584 = sphi 0, %s584
      %s586 = sphi 0, %s584
      %s587 = sphi 0, %s586
      %s601 = sphi 0, %s587
      %s605 = sphi 0, %s605
      %s607 = sphi 0, %s605
      %s608 = sphi 0, %s607
      %s622 = sphi 0, %s608
      %s626 = sphi 0, %s626
      %s628 = sphi 0, %s626
      %s629 = sphi 0, %s628
      %s643 = sphi 0, %s629
      %s647 = sphi 0, %s647
      %s649 = sphi 0, %s647
      %s650 = sphi 0, %s649
      %s664 = sphi 0, %s650
      %s668 = sphi 0, %s668
      %s670 = sphi 0, %s668
      %s671 = sphi 0, %s670
      %s685 = sphi 0, %s671
      %s689 = sphi 0, %s689
      %s691 = sphi 0, %s689
      %s692 = sphi 0, %s691
      %s706 = sphi 0, %s692
      %s712 = sphi 0, %s714
      %s715 = sphi 0, %s712
      %s716 = sphi 0, %s715
      %s732 = sphi 0, %s716
      %s738 = sphi 0, %s740
      %s741 = sphi 0, %s738
      %s742 = sphi 0, %s741
      %s758 = sphi 0, %s742
    $region4: #{autoencoder_forward.1} parent=1 // loop_header_branch
      %91 = sbr.rel (%p89) target = $region8
    $region5: #{autoencoder_forward.1} parent=1 // loop_body
      %s93 = ssub.s32 %s88, 1
      %s94 = ssub.s32 %s88, 2
      %s95 = sadd.s32 %s88, 1
      %s96 = ssub.s32 %s88, %s95
      %p97 = scmp.eq.s32.totalorder %s96, 0
      %s99 = sadd.s32 %s98, 1
      %s100 = scalar_select %p97, %s98, %s99
      %p103 = pneg %p97
      %p104 = scmp.eq.s32.totalorder %s88, 3
      %p105 = por %p103, %p104
      %p106 = scmp.ne.s32.totalorder %s98, %s101
      %p107 = scmp.eq.s32.totalorder %s88, 0
      %p108 = por %p106, %p107
      %p109 = scmp.ne.s32.totalorder %s98, %s101
      %p110 = scmp.eq.s32.totalorder %s93, 3
      %p111 = por %p109, %p110
      %p112 = scmp.ne.s32.totalorder %s101, %s102
      %p113 = scmp.eq.s32.totalorder %s93, 0
      %p114 = por %p112, %p113
      %p115 = scmp.ne.s32.totalorder %s101, %s102
      %p116 = scmp.eq.s32.totalorder %s94, 3
      %p117 = por %p115, %p116
      %p119 = scmp.ne.s32.totalorder %s102, %s118
      %p120 = scmp.eq.s32.totalorder %s94, 0
      %p121 = por %p119, %p120
      %s123 = sadd.s32 %s122, 1
      %p126 = scmp.eq.s32.totalorder %s88, 3
      %p127 = scmp.ne.s32.totalorder %s122, %s124
      %p128 = scmp.eq.s32.totalorder %s88, 0
      %p129 = por %p127, %p128
      %p130 = scmp.ne.s32.totalorder %s122, %s124
      %p131 = scmp.eq.s32.totalorder %s93, 3
      %p132 = por %p130, %p131
      %p133 = scmp.ne.s32.totalorder %s124, %s125
      %p134 = scmp.eq.s32.totalorder %s93, 0
      %p135 = por %p133, %p134
      %p136 = scmp.ne.s32.totalorder %s124, %s125
      %p137 = scmp.eq.s32.totalorder %s94, 3
      %p138 = por %p136, %p137
      %p140 = scmp.ne.s32.totalorder %s125, %s139
      %p141 = scmp.eq.s32.totalorder %s94, 0
      %p142 = por %p140, %p141
      %s144 = sadd.s32 %s143, 1
      %p147 = scmp.eq.s32.totalorder %s88, 3
      %p148 = scmp.ne.s32.totalorder %s143, %s145
      %p149 = scmp.eq.s32.totalorder %s88, 0
      %p150 = por %p148, %p149
      %p151 = scmp.ne.s32.totalorder %s143, %s145
      %p152 = scmp.eq.s32.totalorder %s93, 3
      %p153 = por %p151, %p152
      %p154 = scmp.ne.s32.totalorder %s145, %s146
      %p155 = scmp.eq.s32.totalorder %s93, 0
      %p156 = por %p154, %p155
      %p157 = scmp.ne.s32.totalorder %s145, %s146
      %p158 = scmp.eq.s32.totalorder %s94, 3
      %p159 = por %p157, %p158
      %p161 = scmp.ne.s32.totalorder %s146, %s160
      %p162 = scmp.eq.s32.totalorder %s94, 0
      %p163 = por %p161, %p162
      %s165 = sadd.s32 %s164, 1
      %p168 = scmp.eq.s32.totalorder %s88, 3
      %p169 = scmp.ne.s32.totalorder %s164, %s166
      %p170 = scmp.eq.s32.totalorder %s88, 0
      %p171 = por %p169, %p170
      %p172 = scmp.ne.s32.totalorder %s164, %s166
      %p173 = scmp.eq.s32.totalorder %s93, 3
      %p174 = por %p172, %p173
      %p175 = scmp.ne.s32.totalorder %s166, %s167
      %p176 = scmp.eq.s32.totalorder %s93, 0
      %p177 = por %p175, %p176
      %p178 = scmp.ne.s32.totalorder %s166, %s167
      %p179 = scmp.eq.s32.totalorder %s94, 3
      %p180 = por %p178, %p179
      %p182 = scmp.ne.s32.totalorder %s167, %s181
      %p183 = scmp.eq.s32.totalorder %s94, 0
      %p184 = por %p182, %p183
      %s186 = sadd.s32 %s185, 1
      %p189 = scmp.eq.s32.totalorder %s88, 3
      %p190 = scmp.ne.s32.totalorder %s185, %s187
      %p191 = scmp.eq.s32.totalorder %s88, 0
      %p192 = por %p190, %p191
      %p193 = scmp.ne.s32.totalorder %s185, %s187
      %p194 = scmp.eq.s32.totalorder %s93, 3
      %p195 = por %p193, %p194
      %p196 = scmp.ne.s32.totalorder %s187, %s188
      %p197 = scmp.eq.s32.totalorder %s93, 0
      %p198 = por %p196, %p197
      %p199 = scmp.ne.s32.totalorder %s187, %s188
      %p200 = scmp.eq.s32.totalorder %s94, 3
      %p201 = por %p199, %p200
      %p203 = scmp.ne.s32.totalorder %s188, %s202
      %p204 = scmp.eq.s32.totalorder %s94, 0
      %p205 = por %p203, %p204
      %s207 = sadd.s32 %s206, 1
      %p210 = scmp.eq.s32.totalorder %s88, 3
      %p211 = scmp.ne.s32.totalorder %s206, %s208
      %p212 = scmp.eq.s32.totalorder %s88, 0
      %p213 = por %p211, %p212
      %p214 = scmp.ne.s32.totalorder %s206, %s208
      %p215 = scmp.eq.s32.totalorder %s93, 3
      %p216 = por %p214, %p215
      %p217 = scmp.ne.s32.totalorder %s208, %s209
      %p218 = scmp.eq.s32.totalorder %s93, 0
      %p219 = por %p217, %p218
      %p220 = scmp.ne.s32.totalorder %s208, %s209
      %p221 = scmp.eq.s32.totalorder %s94, 3
      %p222 = por %p220, %p221
      %p224 = scmp.ne.s32.totalorder %s209, %s223
      %p225 = scmp.eq.s32.totalorder %s94, 0
      %p226 = por %p224, %p225
      %s228 = sadd.s32 %s227, 1
      %p231 = scmp.eq.s32.totalorder %s88, 3
      %p232 = scmp.ne.s32.totalorder %s227, %s229
      %p233 = scmp.eq.s32.totalorder %s88, 0
      %p234 = por %p232, %p233
      %p235 = scmp.ne.s32.totalorder %s227, %s229
      %p236 = scmp.eq.s32.totalorder %s93, 3
      %p237 = por %p235, %p236
      %p238 = scmp.ne.s32.totalorder %s229, %s230
      %p239 = scmp.eq.s32.totalorder %s93, 0
      %p240 = por %p238, %p239
      %p241 = scmp.ne.s32.totalorder %s229, %s230
      %p242 = scmp.eq.s32.totalorder %s94, 3
      %p243 = por %p241, %p242
      %p245 = scmp.ne.s32.totalorder %s230, %s244
      %p246 = scmp.eq.s32.totalorder %s94, 0
      %p247 = por %p245, %p246
      %s249 = sadd.s32 %s248, 1
      %p252 = scmp.eq.s32.totalorder %s88, 3
      %p253 = scmp.ne.s32.totalorder %s248, %s250
      %p254 = scmp.eq.s32.totalorder %s88, 0
      %p255 = por %p253, %p254
      %p256 = scmp.ne.s32.totalorder %s248, %s250
      %p257 = scmp.eq.s32.totalorder %s93, 3
      %p258 = por %p256, %p257
      %p259 = scmp.ne.s32.totalorder %s250, %s251
      %p260 = scmp.eq.s32.totalorder %s93, 0
      %p261 = por %p259, %p260
      %p262 = scmp.ne.s32.totalorder %s250, %s251
      %p263 = scmp.eq.s32.totalorder %s94, 3
      %p264 = por %p262, %p263
      %p266 = scmp.ne.s32.totalorder %s251, %s265
      %p267 = scmp.eq.s32.totalorder %s94, 0
      %p268 = por %p266, %p267
      %s270 = sadd.s32 %s269, 1
      %p273 = scmp.eq.s32.totalorder %s88, 3
      %p274 = scmp.ne.s32.totalorder %s269, %s271
      %p275 = scmp.eq.s32.totalorder %s88, 0
      %p276 = por %p274, %p275
      %p277 = scmp.ne.s32.totalorder %s269, %s271
      %p278 = scmp.eq.s32.totalorder %s93, 3
      %p279 = por %p277, %p278
      %p280 = scmp.ne.s32.totalorder %s271, %s272
      %p281 = scmp.eq.s32.totalorder %s93, 0
      %p282 = por %p280, %p281
      %p283 = scmp.ne.s32.totalorder %s271, %s272
      %p284 = scmp.eq.s32.totalorder %s94, 3
      %p285 = por %p283, %p284
      %p287 = scmp.ne.s32.totalorder %s272, %s286
      %p288 = scmp.eq.s32.totalorder %s94, 0
      %p289 = por %p287, %p288
      %s291 = sadd.s32 %s290, 1
      %p294 = scmp.eq.s32.totalorder %s88, 3
      %p295 = scmp.ne.s32.totalorder %s290, %s292
      %p296 = scmp.eq.s32.totalorder %s88, 0
      %p297 = por %p295, %p296
      %p298 = scmp.ne.s32.totalorder %s290, %s292
      %p299 = scmp.eq.s32.totalorder %s93, 3
      %p300 = por %p298, %p299
      %p301 = scmp.ne.s32.totalorder %s292, %s293
      %p302 = scmp.eq.s32.totalorder %s93, 0
      %p303 = por %p301, %p302
      %p304 = scmp.ne.s32.totalorder %s292, %s293
      %p305 = scmp.eq.s32.totalorder %s94, 3
      %p306 = por %p304, %p305
      %p308 = scmp.ne.s32.totalorder %s293, %s307
      %p309 = scmp.eq.s32.totalorder %s94, 0
      %p310 = por %p308, %p309
      %s312 = sadd.s32 %s311, 1
      %p315 = scmp.eq.s32.totalorder %s88, 3
      %p316 = scmp.ne.s32.totalorder %s311, %s313
      %p317 = scmp.eq.s32.totalorder %s88, 0
      %p318 = por %p316, %p317
      %p319 = scmp.ne.s32.totalorder %s311, %s313
      %p320 = scmp.eq.s32.totalorder %s93, 3
      %p321 = por %p319, %p320
      %p322 = scmp.ne.s32.totalorder %s313, %s314
      %p323 = scmp.eq.s32.totalorder %s93, 0
      %p324 = por %p322, %p323
      %p325 = scmp.ne.s32.totalorder %s313, %s314
      %p326 = scmp.eq.s32.totalorder %s94, 3
      %p327 = por %p325, %p326
      %p329 = scmp.ne.s32.totalorder %s314, %s328
      %p330 = scmp.eq.s32.totalorder %s94, 0
      %p331 = por %p329, %p330
      %s333 = sadd.s32 %s332, 1
      %p336 = scmp.eq.s32.totalorder %s88, 3
      %p337 = scmp.ne.s32.totalorder %s332, %s334
      %p338 = scmp.eq.s32.totalorder %s88, 0
      %p339 = por %p337, %p338
      %p340 = scmp.ne.s32.totalorder %s332, %s334
      %p341 = scmp.eq.s32.totalorder %s93, 3
      %p342 = por %p340, %p341
      %p343 = scmp.ne.s32.totalorder %s334, %s335
      %p344 = scmp.eq.s32.totalorder %s93, 0
      %p345 = por %p343, %p344
      %p346 = scmp.ne.s32.totalorder %s334, %s335
      %p347 = scmp.eq.s32.totalorder %s94, 3
      %p348 = por %p346, %p347
      %p350 = scmp.ne.s32.totalorder %s335, %s349
      %p351 = scmp.eq.s32.totalorder %s94, 0
      %p352 = por %p350, %p351
      %s354 = sadd.s32 %s353, 1
      %p357 = scmp.eq.s32.totalorder %s88, 3
      %p358 = scmp.ne.s32.totalorder %s353, %s355
      %p359 = scmp.eq.s32.totalorder %s88, 0
      %p360 = por %p358, %p359
      %p361 = scmp.ne.s32.totalorder %s353, %s355
      %p362 = scmp.eq.s32.totalorder %s93, 3
      %p363 = por %p361, %p362
      %p364 = scmp.ne.s32.totalorder %s355, %s356
      %p365 = scmp.eq.s32.totalorder %s93, 0
      %p366 = por %p364, %p365
      %p367 = scmp.ne.s32.totalorder %s355, %s356
      %p368 = scmp.eq.s32.totalorder %s94, 3
      %p369 = por %p367, %p368
      %p371 = scmp.ne.s32.totalorder %s356, %s370
      %p372 = scmp.eq.s32.totalorder %s94, 0
      %p373 = por %p371, %p372
      %s375 = sadd.s32 %s374, 1
      %p378 = scmp.eq.s32.totalorder %s88, 3
      %p379 = scmp.ne.s32.totalorder %s374, %s376
      %p380 = scmp.eq.s32.totalorder %s88, 0
      %p381 = por %p379, %p380
      %p382 = scmp.ne.s32.totalorder %s374, %s376
      %p383 = scmp.eq.s32.totalorder %s93, 3
      %p384 = por %p382, %p383
      %p385 = scmp.ne.s32.totalorder %s376, %s377
      %p386 = scmp.eq.s32.totalorder %s93, 0
      %p387 = por %p385, %p386
      %p388 = scmp.ne.s32.totalorder %s376, %s377
      %p389 = scmp.eq.s32.totalorder %s94, 3
      %p390 = por %p388, %p389
      %p392 = scmp.ne.s32.totalorder %s377, %s391
      %p393 = scmp.eq.s32.totalorder %s94, 0
      %p394 = por %p392, %p393
      %s396 = sadd.s32 %s395, 1
      %p399 = scmp.eq.s32.totalorder %s88, 3
      %p400 = scmp.ne.s32.totalorder %s395, %s397
      %p401 = scmp.eq.s32.totalorder %s88, 0
      %p402 = por %p400, %p401
      %p403 = scmp.ne.s32.totalorder %s395, %s397
      %p404 = scmp.eq.s32.totalorder %s93, 3
      %p405 = por %p403, %p404
      %p406 = scmp.ne.s32.totalorder %s397, %s398
      %p407 = scmp.eq.s32.totalorder %s93, 0
      %p408 = por %p406, %p407
      %p409 = scmp.ne.s32.totalorder %s397, %s398
      %p410 = scmp.eq.s32.totalorder %s94, 3
      %p411 = por %p409, %p410
      %p413 = scmp.ne.s32.totalorder %s398, %s412
      %p414 = scmp.eq.s32.totalorder %s94, 0
      %p415 = por %p413, %p414
      %s417 = sadd.s32 %s416, 1
      %p420 = scmp.eq.s32.totalorder %s88, 3
      %p421 = scmp.ne.s32.totalorder %s416, %s418
      %p422 = scmp.eq.s32.totalorder %s88, 0
      %p423 = por %p421, %p422
      %p424 = scmp.ne.s32.totalorder %s416, %s418
      %p425 = scmp.eq.s32.totalorder %s93, 3
      %p426 = por %p424, %p425
      %p427 = scmp.ne.s32.totalorder %s418, %s419
      %p428 = scmp.eq.s32.totalorder %s93, 0
      %p429 = por %p427, %p428
      %p430 = scmp.ne.s32.totalorder %s418, %s419
      %p431 = scmp.eq.s32.totalorder %s94, 3
      %p432 = por %p430, %p431
      %p434 = scmp.ne.s32.totalorder %s419, %s433
      %p435 = scmp.eq.s32.totalorder %s94, 0
      %p436 = por %p434, %p435
      %s438 = sadd.s32 %s437, 1
      %p441 = scmp.eq.s32.totalorder %s88, 3
      %p442 = scmp.ne.s32.totalorder %s437, %s439
      %p443 = scmp.eq.s32.totalorder %s88, 0
      %p444 = por %p442, %p443
      %p445 = scmp.ne.s32.totalorder %s437, %s439
      %p446 = scmp.eq.s32.totalorder %s93, 3
      %p447 = por %p445, %p446
      %p448 = scmp.ne.s32.totalorder %s439, %s440
      %p449 = scmp.eq.s32.totalorder %s93, 0
      %p450 = por %p448, %p449
      %p451 = scmp.ne.s32.totalorder %s439, %s440
      %p452 = scmp.eq.s32.totalorder %s94, 3
      %p453 = por %p451, %p452
      %p455 = scmp.ne.s32.totalorder %s440, %s454
      %p456 = scmp.eq.s32.totalorder %s94, 0
      %p457 = por %p455, %p456
      %s459 = sadd.s32 %s458, 1
      %p462 = scmp.eq.s32.totalorder %s88, 3
      %p463 = scmp.ne.s32.totalorder %s458, %s460
      %p464 = scmp.eq.s32.totalorder %s88, 0
      %p465 = por %p463, %p464
      %p466 = scmp.ne.s32.totalorder %s458, %s460
      %p467 = scmp.eq.s32.totalorder %s93, 3
      %p468 = por %p466, %p467
      %p469 = scmp.ne.s32.totalorder %s460, %s461
      %p470 = scmp.eq.s32.totalorder %s93, 0
      %p471 = por %p469, %p470
      %p472 = scmp.ne.s32.totalorder %s460, %s461
      %p473 = scmp.eq.s32.totalorder %s94, 3
      %p474 = por %p472, %p473
      %p476 = scmp.ne.s32.totalorder %s461, %s475
      %p477 = scmp.eq.s32.totalorder %s94, 0
      %p478 = por %p476, %p477
      %s480 = sadd.s32 %s479, 1
      %p483 = scmp.eq.s32.totalorder %s88, 3
      %p484 = scmp.ne.s32.totalorder %s479, %s481
      %p485 = scmp.eq.s32.totalorder %s88, 0
      %p486 = por %p484, %p485
      %p487 = scmp.ne.s32.totalorder %s479, %s481
      %p488 = scmp.eq.s32.totalorder %s93, 3
      %p489 = por %p487, %p488
      %p490 = scmp.ne.s32.totalorder %s481, %s482
      %p491 = scmp.eq.s32.totalorder %s93, 0
      %p492 = por %p490, %p491
      %p493 = scmp.ne.s32.totalorder %s481, %s482
      %p494 = scmp.eq.s32.totalorder %s94, 3
      %p495 = por %p493, %p494
      %p497 = scmp.ne.s32.totalorder %s482, %s496
      %p498 = scmp.eq.s32.totalorder %s94, 0
      %p499 = por %p497, %p498
      %s501 = sadd.s32 %s500, 1
      %p504 = scmp.eq.s32.totalorder %s88, 3
      %p505 = scmp.ne.s32.totalorder %s500, %s502
      %p506 = scmp.eq.s32.totalorder %s88, 0
      %p507 = por %p505, %p506
      %p508 = scmp.ne.s32.totalorder %s500, %s502
      %p509 = scmp.eq.s32.totalorder %s93, 3
      %p510 = por %p508, %p509
      %p511 = scmp.ne.s32.totalorder %s502, %s503
      %p512 = scmp.eq.s32.totalorder %s93, 0
      %p513 = por %p511, %p512
      %p514 = scmp.ne.s32.totalorder %s502, %s503
      %p515 = scmp.eq.s32.totalorder %s94, 3
      %p516 = por %p514, %p515
      %p518 = scmp.ne.s32.totalorder %s503, %s517
      %p519 = scmp.eq.s32.totalorder %s94, 0
      %p520 = por %p518, %p519
      %s522 = sadd.s32 %s521, 1
      %p525 = scmp.eq.s32.totalorder %s88, 3
      %p526 = scmp.ne.s32.totalorder %s521, %s523
      %p527 = scmp.eq.s32.totalorder %s88, 0
      %p528 = por %p526, %p527
      %p529 = scmp.ne.s32.totalorder %s521, %s523
      %p530 = scmp.eq.s32.totalorder %s93, 3
      %p531 = por %p529, %p530
      %p532 = scmp.ne.s32.totalorder %s523, %s524
      %p533 = scmp.eq.s32.totalorder %s93, 0
      %p534 = por %p532, %p533
      %p535 = scmp.ne.s32.totalorder %s523, %s524
      %p536 = scmp.eq.s32.totalorder %s94, 3
      %p537 = por %p535, %p536
      %p539 = scmp.ne.s32.totalorder %s524, %s538
      %p540 = scmp.eq.s32.totalorder %s94, 0
      %p541 = por %p539, %p540
      %s543 = sadd.s32 %s542, 1
      %p546 = scmp.eq.s32.totalorder %s88, 3
      %p547 = scmp.ne.s32.totalorder %s542, %s544
      %p548 = scmp.eq.s32.totalorder %s88, 0
      %p549 = por %p547, %p548
      %p550 = scmp.ne.s32.totalorder %s542, %s544
      %p551 = scmp.eq.s32.totalorder %s93, 3
      %p552 = por %p550, %p551
      %p553 = scmp.ne.s32.totalorder %s544, %s545
      %p554 = scmp.eq.s32.totalorder %s93, 0
      %p555 = por %p553, %p554
      %p556 = scmp.ne.s32.totalorder %s544, %s545
      %p557 = scmp.eq.s32.totalorder %s94, 3
      %p558 = por %p556, %p557
      %p560 = scmp.ne.s32.totalorder %s545, %s559
      %p561 = scmp.eq.s32.totalorder %s94, 0
      %p562 = por %p560, %p561
      %s564 = sadd.s32 %s563, 1
      %p567 = scmp.eq.s32.totalorder %s88, 3
      %p568 = scmp.ne.s32.totalorder %s563, %s565
      %p569 = scmp.eq.s32.totalorder %s88, 0
      %p570 = por %p568, %p569
      %p571 = scmp.ne.s32.totalorder %s563, %s565
      %p572 = scmp.eq.s32.totalorder %s93, 3
      %p573 = por %p571, %p572
      %p574 = scmp.ne.s32.totalorder %s565, %s566
      %p575 = scmp.eq.s32.totalorder %s93, 0
      %p576 = por %p574, %p575
      %p577 = scmp.ne.s32.totalorder %s565, %s566
      %p578 = scmp.eq.s32.totalorder %s94, 3
      %p579 = por %p577, %p578
      %p581 = scmp.ne.s32.totalorder %s566, %s580
      %p582 = scmp.eq.s32.totalorder %s94, 0
      %p583 = por %p581, %p582
      %s585 = sadd.s32 %s584, 1
      %p588 = scmp.eq.s32.totalorder %s88, 3
      %p589 = scmp.ne.s32.totalorder %s584, %s586
      %p590 = scmp.eq.s32.totalorder %s88, 0
      %p591 = por %p589, %p590
      %p592 = scmp.ne.s32.totalorder %s584, %s586
      %p593 = scmp.eq.s32.totalorder %s93, 3
      %p594 = por %p592, %p593
      %p595 = scmp.ne.s32.totalorder %s586, %s587
      %p596 = scmp.eq.s32.totalorder %s93, 0
      %p597 = por %p595, %p596
      %p598 = scmp.ne.s32.totalorder %s586, %s587
      %p599 = scmp.eq.s32.totalorder %s94, 3
      %p600 = por %p598, %p599
      %p602 = scmp.ne.s32.totalorder %s587, %s601
      %p603 = scmp.eq.s32.totalorder %s94, 0
      %p604 = por %p602, %p603
      %s606 = sadd.s32 %s605, 1
      %p609 = scmp.eq.s32.totalorder %s88, 3
      %p610 = scmp.ne.s32.totalorder %s605, %s607
      %p611 = scmp.eq.s32.totalorder %s88, 0
      %p612 = por %p610, %p611
      %p613 = scmp.ne.s32.totalorder %s605, %s607
      %p614 = scmp.eq.s32.totalorder %s93, 3
      %p615 = por %p613, %p614
      %p616 = scmp.ne.s32.totalorder %s607, %s608
      %p617 = scmp.eq.s32.totalorder %s93, 0
      %p618 = por %p616, %p617
      %p619 = scmp.ne.s32.totalorder %s607, %s608
      %p620 = scmp.eq.s32.totalorder %s94, 3
      %p621 = por %p619, %p620
      %p623 = scmp.ne.s32.totalorder %s608, %s622
      %p624 = scmp.eq.s32.totalorder %s94, 0
      %p625 = por %p623, %p624
      %s627 = sadd.s32 %s626, 1
      %p630 = scmp.eq.s32.totalorder %s88, 3
      %p631 = scmp.ne.s32.totalorder %s626, %s628
      %p632 = scmp.eq.s32.totalorder %s88, 0
      %p633 = por %p631, %p632
      %p634 = scmp.ne.s32.totalorder %s626, %s628
      %p635 = scmp.eq.s32.totalorder %s93, 3
      %p636 = por %p634, %p635
      %p637 = scmp.ne.s32.totalorder %s628, %s629
      %p638 = scmp.eq.s32.totalorder %s93, 0
      %p639 = por %p637, %p638
      %p640 = scmp.ne.s32.totalorder %s628, %s629
      %p641 = scmp.eq.s32.totalorder %s94, 3
      %p642 = por %p640, %p641
      %p644 = scmp.ne.s32.totalorder %s629, %s643
      %p645 = scmp.eq.s32.totalorder %s94, 0
      %p646 = por %p644, %p645
      %s648 = sadd.s32 %s647, 1
      %p651 = scmp.eq.s32.totalorder %s88, 3
      %p652 = scmp.ne.s32.totalorder %s647, %s649
      %p653 = scmp.eq.s32.totalorder %s88, 0
      %p654 = por %p652, %p653
      %p655 = scmp.ne.s32.totalorder %s647, %s649
      %p656 = scmp.eq.s32.totalorder %s93, 3
      %p657 = por %p655, %p656
      %p658 = scmp.ne.s32.totalorder %s649, %s650
      %p659 = scmp.eq.s32.totalorder %s93, 0
      %p660 = por %p658, %p659
      %p661 = scmp.ne.s32.totalorder %s649, %s650
      %p662 = scmp.eq.s32.totalorder %s94, 3
      %p663 = por %p661, %p662
      %p665 = scmp.ne.s32.totalorder %s650, %s664
      %p666 = scmp.eq.s32.totalorder %s94, 0
      %p667 = por %p665, %p666
      %s669 = sadd.s32 %s668, 1
      %p672 = scmp.eq.s32.totalorder %s88, 3
      %p673 = scmp.ne.s32.totalorder %s668, %s670
      %p674 = scmp.eq.s32.totalorder %s88, 0
      %p675 = por %p673, %p674
      %p676 = scmp.ne.s32.totalorder %s668, %s670
      %p677 = scmp.eq.s32.totalorder %s93, 3
      %p678 = por %p676, %p677
      %p679 = scmp.ne.s32.totalorder %s670, %s671
      %p680 = scmp.eq.s32.totalorder %s93, 0
      %p681 = por %p679, %p680
      %p682 = scmp.ne.s32.totalorder %s670, %s671
      %p683 = scmp.eq.s32.totalorder %s94, 3
      %p684 = por %p682, %p683
      %p686 = scmp.ne.s32.totalorder %s671, %s685
      %p687 = scmp.eq.s32.totalorder %s94, 0
      %p688 = por %p686, %p687
      %s690 = sadd.s32 %s689, 1
      %p693 = scmp.eq.s32.totalorder %s88, 3
      %p694 = scmp.ne.s32.totalorder %s689, %s691
      %p695 = scmp.eq.s32.totalorder %s88, 0
      %p696 = por %p694, %p695
      %p697 = scmp.ne.s32.totalorder %s689, %s691
      %p698 = scmp.eq.s32.totalorder %s93, 3
      %p699 = por %p697, %p698
      %p700 = scmp.ne.s32.totalorder %s691, %s692
      %p701 = scmp.eq.s32.totalorder %s93, 0
      %p702 = por %p700, %p701
      %p703 = scmp.ne.s32.totalorder %s691, %s692
      %p704 = scmp.eq.s32.totalorder %s94, 3
      %p705 = por %p703, %p704
      %p707 = scmp.ne.s32.totalorder %s692, %s706
      %p708 = scmp.eq.s32.totalorder %s94, 0
      %p709 = por %p707, %p708
      %s710 = ssub.s32 %s88, %s95
      %p711 = scmp.eq.s32.totalorder %s710, 0
      %s713 = sadd.s32 %s712, 1
      %s714 = scalar_select %p711, %s712, %s713
      %p717 = pneg %p711
      %p718 = scmp.eq.s32.totalorder %s88, 3
      %p719 = por %p717, %p718
      %p720 = scmp.ne.s32.totalorder %s712, %s715
      %p721 = scmp.eq.s32.totalorder %s88, 0
      %p722 = por %p720, %p721
      %p723 = scmp.ne.s32.totalorder %s712, %s715
      %p724 = scmp.eq.s32.totalorder %s93, 3
      %p725 = por %p723, %p724
      %p726 = scmp.ne.s32.totalorder %s715, %s716
      %p727 = scmp.eq.s32.totalorder %s93, 0
      %p728 = por %p726, %p727
      %p729 = scmp.ne.s32.totalorder %s715, %s716
      %p730 = scmp.eq.s32.totalorder %s94, 3
      %p731 = por %p729, %p730
      %p733 = scmp.ne.s32.totalorder %s716, %s732
      %p734 = scmp.eq.s32.totalorder %s94, 0
      %p735 = por %p733, %p734
      %s736 = ssub.s32 %s88, %s95
      %p737 = scmp.eq.s32.totalorder %s736, 0
      %s739 = sadd.s32 %s738, 1
      %s740 = scalar_select %p737, %s738, %s739
      %p743 = pneg %p737
      %p744 = scmp.eq.s32.totalorder %s88, 3
      %p745 = por %p743, %p744
      %p746 = scmp.ne.s32.totalorder %s738, %s741
      %p747 = scmp.eq.s32.totalorder %s88, 0
      %p748 = por %p746, %p747
      %p749 = scmp.ne.s32.totalorder %s738, %s741
      %p750 = scmp.eq.s32.totalorder %s93, 3
      %p751 = por %p749, %p750
      %p752 = scmp.ne.s32.totalorder %s741, %s742
      %p753 = scmp.eq.s32.totalorder %s93, 0
      %p754 = por %p752, %p753
      %p755 = scmp.ne.s32.totalorder %s741, %s742
      %p756 = scmp.eq.s32.totalorder %s94, 3
      %p757 = por %p755, %p756
      %p759 = scmp.ne.s32.totalorder %s742, %s758
      %p760 = scmp.eq.s32.totalorder %s94, 0
      %p761 = por %p759, %p760
      %p762 = scmp.le.s32.totalorder 1, %s88
      %p763 = scmp.lt.s32.totalorder %s88, 5
      %p764 = pnand %p762, %p763
      %p765 = pneg %p764
      // Predicated region
      $region9: #{autoencoder_forward.1} parent=5 // pred_check
        _
      $region10: #{autoencoder_forward.1} parent=5 // pred_check_branch
        %767 = sbr.rel (%p764) target = $region12
      $region11: #{autoencoder_forward.1} parent=5 // pred_region
        %s768 = ssub.s32 %s88, 1
        // Predicated region
        $region13: #{autoencoder_forward.1} parent=11 // pred_check
          %p769 = pneg %p135
        $region14: #{autoencoder_forward.1} parent=11 // pred_check_branch
          %771 = sbr.rel (%p769) target = $region16
        $region15: #{autoencoder_forward.1} parent=11 // pred_region
          %s773 = ssub.s32 4096, 4096
          %774 = vsyncadd [#allocation6], %s773
          %s775 = sshll.u32 [#allocation5], 4
          %s776 = int_to_ptr.vmem [resolvable:$true] %s775
          %781 = dma.hbm_to_vmem [thread:$0]  %s3, 4096, %s776, [#allocation6], 128, 128, 8
        $region16: #{autoencoder_forward.1} parent=11 // pred_fallthru
          _
        // Predicated region
        $region17: #{autoencoder_forward.1} parent=11 // pred_check
          %p782 = pneg %p156
        $region18: #{autoencoder_forward.1} parent=11 // pred_check_branch
          %784 = sbr.rel (%p782) target = $region20
        $region19: #{autoencoder_forward.1} parent=11 // pred_region
          _
        $region20: #{autoencoder_forward.1} parent=11 // pred_fallthru
          _
        // Predicated region
        $region21: #{autoencoder_forward.1} parent=11 // pred_check
          %p785 = pneg %p177
        $region22: #{autoencoder_forward.1} parent=11 // pred_check_branch
          %787 = sbr.rel (%p785) target = $region24
        $region23: #{autoencoder_forward.1} parent=11 // pred_region
          _
        $region24: #{autoencoder_forward.1} parent=11 // pred_fallthru
          _
        // Predicated region
        $region25: #{autoencoder_forward.1} parent=11 // pred_check
          %p788 = pneg %p198
        $region26: #{autoencoder_forward.1} parent=11 // pred_check_branch
          %790 = sbr.rel (%p788) target = $region28
        $region27: #{autoencoder_forward.1} parent=11 // pred_region
          _
        $region28: #{autoencoder_forward.1} parent=11 // pred_fallthru
          _
        // Predicated region
        $region29: #{autoencoder_forward.1} parent=11 // pred_check
          %p791 = pneg %p219
        $region30: #{autoencoder_forward.1} parent=11 // pred_check_branch
          %793 = sbr.rel (%p791) target = $region32
        $region31: #{autoencoder_forward.1} parent=11 // pred_region
          _
        $region32: #{autoencoder_forward.1} parent=11 // pred_fallthru
          _
        // Predicated region
        $region33: #{autoencoder_forward.1} parent=11 // pred_check
          %p794 = pneg %p240
        $region34: #{autoencoder_forward.1} parent=11 // pred_check_branch
          %796 = sbr.rel (%p794) target = $region36
        $region35: #{autoencoder_forward.1} parent=11 // pred_region
          %s798 = ssub.s32 16, 16
          %799 = vsyncadd [#allocation6], %s798
          %s801 = sshll.u32 [#allocation7], 4
          %s802 = int_to_ptr.vmem [resolvable:$true] %s801
          %804 = dma.hbm_to_vmem [thread:$0]  %s13, 16, %s802, [#allocation6]
        $region36: #{autoencoder_forward.1} parent=11 // pred_fallthru
          _
        // Predicated region
        $region37: #{autoencoder_forward.1} parent=11 // pred_check
          %p805 = pneg %p261
        $region38: #{autoencoder_forward.1} parent=11 // pred_check_branch
          %807 = sbr.rel (%p805) target = $region40
        $region39: #{autoencoder_forward.1} parent=11 // pred_region
          %s809 = ssub.s32 16, 16
          %810 = vsyncadd [#allocation9], %s809
          %s812 = sshll.u32 [#allocation8], 4
          %s813 = int_to_ptr.vmem [resolvable:$true] %s812
          %815 = dma.hbm_to_vmem [thread:$0]  %s15, 16, %s813, [#allocation9]
        $region40: #{autoencoder_forward.1} parent=11 // pred_fallthru
          _
        // Predicated region
        $region41: #{autoencoder_forward.1} parent=11 // pred_check
          %p816 = pneg %p282
        $region42: #{autoencoder_forward.1} parent=11 // pred_check_branch
          %818 = sbr.rel (%p816) target = $region44
        $region43: #{autoencoder_forward.1} parent=11 // pred_region
          %s820 = ssub.s32 16, 16
          %821 = vsyncadd [#allocation9], %s820
          %s823 = sshll.u32 [#allocation10], 4
          %s824 = int_to_ptr.vmem [resolvable:$true] %s823
          %826 = dma.hbm_to_vmem [thread:$0]  %s17, 16, %s824, [#allocation9]
        $region44: #{autoencoder_forward.1} parent=11 // pred_fallthru
          _
        // Predicated region
        $region45: #{autoencoder_forward.1} parent=11 // pred_check
          %p827 = pneg %p303
        $region46: #{autoencoder_forward.1} parent=11 // pred_check_branch
          %829 = sbr.rel (%p827) target = $region48
        $region47: #{autoencoder_forward.1} parent=11 // pred_region
          _
        $region48: #{autoencoder_forward.1} parent=11 // pred_fallthru
          _
        // Predicated region
        $region49: #{autoencoder_forward.1} parent=11 // pred_check
          %p830 = pneg %p324
        $region50: #{autoencoder_forward.1} parent=11 // pred_check_branch
          %832 = sbr.rel (%p830) target = $region52
        $region51: #{autoencoder_forward.1} parent=11 // pred_region
          %s834 = ssub.s32 16, 16
          %835 = vsyncadd [#allocation12], %s834
          %s837 = sshll.u32 [#allocation11], 4
          %s838 = int_to_ptr.vmem [resolvable:$true] %s837
          %840 = dma.hbm_to_vmem [thread:$0]  %s21, 16, %s838, [#allocation12]
        $region52: #{autoencoder_forward.1} parent=11 // pred_fallthru
          _
        // Predicated region
        $region53: #{autoencoder_forward.1} parent=11 // pred_check
          %p841 = pneg %p345
        $region54: #{autoencoder_forward.1} parent=11 // pred_check_branch
          %843 = sbr.rel (%p841) target = $region56
        $region55: #{autoencoder_forward.1} parent=11 // pred_region
          %s845 = ssub.s32 16, 16
          %846 = vsyncadd [#allocation12], %s845
          %s848 = sshll.u32 [#allocation13], 4
          %s849 = int_to_ptr.vmem [resolvable:$true] %s848
          %851 = dma.hbm_to_vmem [thread:$0]  %s23, 16, %s849, [#allocation12]
        $region56: #{autoencoder_forward.1} parent=11 // pred_fallthru
          _
        // Predicated region
        $region57: #{autoencoder_forward.1} parent=11 // pred_check
          %p852 = pneg %p366
        $region58: #{autoencoder_forward.1} parent=11 // pred_check_branch
          %854 = sbr.rel (%p852) target = $region60
        $region59: #{autoencoder_forward.1} parent=11 // pred_region
          %s856 = ssub.s32 16, 16
          %857 = vsyncadd [#allocation15], %s856
          %s859 = sshll.u32 [#allocation14], 4
          %s860 = int_to_ptr.vmem [resolvable:$true] %s859
          %862 = dma.hbm_to_vmem [thread:$0]  %s25, 16, %s860, [#allocation15]
        $region60: #{autoencoder_forward.1} parent=11 // pred_fallthru
          _
        // Predicated region
        $region61: #{autoencoder_forward.1} parent=11 // pred_check
          %p863 = pneg %p387
        $region62: #{autoencoder_forward.1} parent=11 // pred_check_branch
          %865 = sbr.rel (%p863) target = $region64
        $region63: #{autoencoder_forward.1} parent=11 // pred_region
          %s867 = ssub.s32 512, 512
          %868 = vsyncadd [#allocation15], %s867
          %s869 = sshll.u32 [#allocation16], 4
          %s870 = int_to_ptr.vmem [resolvable:$true] %s869
          %875 = dma.hbm_to_vmem [thread:$0]  %s27, 512, %s870, [#allocation15], 64, 64, 4
        $region64: #{autoencoder_forward.1} parent=11 // pred_fallthru
          _
        // Predicated region
        $region65: #{autoencoder_forward.1} parent=11 // pred_check
          %p876 = pneg %p408
        $region66: #{autoencoder_forward.1} parent=11 // pred_check_branch
          %878 = sbr.rel (%p876) target = $region68
        $region67: #{autoencoder_forward.1} parent=11 // pred_region
          %s880 = ssub.s32 16, 16
          %881 = vsyncadd [#allocation18], %s880
          %s883 = sshll.u32 [#allocation17], 4
          %s884 = int_to_ptr.vmem [resolvable:$true] %s883
          %886 = dma.hbm_to_vmem [thread:$0]  %s29, 16, %s884, [#allocation18]
        $region68: #{autoencoder_forward.1} parent=11 // pred_fallthru
          _
        // Predicated region
        $region69: #{autoencoder_forward.1} parent=11 // pred_check
          %p887 = pneg %p429
        $region70: #{autoencoder_forward.1} parent=11 // pred_check_branch
          %889 = sbr.rel (%p887) target = $region72
        $region71: #{autoencoder_forward.1} parent=11 // pred_region
          %s891 = ssub.s32 512, 512
          %892 = vsyncadd [#allocation18], %s891
          %s893 = sshll.u32 [#allocation19], 4
          %s894 = int_to_ptr.vmem [resolvable:$true] %s893
          %899 = dma.hbm_to_vmem [thread:$0]  %s31, 512, %s894, [#allocation18], 64, 64, 4
        $region72: #{autoencoder_forward.1} parent=11 // pred_fallthru
          _
        // Predicated region
        $region73: #{autoencoder_forward.1} parent=11 // pred_check
          %p900 = pneg %p450
        $region74: #{autoencoder_forward.1} parent=11 // pred_check_branch
          %902 = sbr.rel (%p900) target = $region76
        $region75: #{autoencoder_forward.1} parent=11 // pred_region
          %s904 = ssub.s32 16, 16
          %905 = vsyncadd [#allocation21], %s904
          %s907 = sshll.u32 [#allocation20], 4
          %s908 = int_to_ptr.vmem [resolvable:$true] %s907
          %910 = dma.hbm_to_vmem [thread:$0]  %s33, 16, %s908, [#allocation21]
        $region76: #{autoencoder_forward.1} parent=11 // pred_fallthru
          _
        // Predicated region
        $region77: #{autoencoder_forward.1} parent=11 // pred_check
          %p911 = pneg %p471
        $region78: #{autoencoder_forward.1} parent=11 // pred_check_branch
          %913 = sbr.rel (%p911) target = $region80
        $region79: #{autoencoder_forward.1} parent=11 // pred_region
          %s915 = ssub.s32 16, 16
          %916 = vsyncadd [#allocation21], %s915
          %s918 = sshll.u32 [#allocation22], 4
          %s919 = int_to_ptr.vmem [resolvable:$true] %s918
          %921 = dma.hbm_to_vmem [thread:$0]  %s35, 16, %s919, [#allocation21]
        $region80: #{autoencoder_forward.1} parent=11 // pred_fallthru
          _
        // Predicated region
        $region81: #{autoencoder_forward.1} parent=11 // pred_check
          %p922 = pneg %p492
        $region82: #{autoencoder_forward.1} parent=11 // pred_check_branch
          %924 = sbr.rel (%p922) target = $region84
        $region83: #{autoencoder_forward.1} parent=11 // pred_region
          %s926 = ssub.s32 16, 16
          %927 = vsyncadd [#allocation24], %s926
          %s929 = sshll.u32 [#allocation23], 4
          %s930 = int_to_ptr.vmem [resolvable:$true] %s929
          %932 = dma.hbm_to_vmem [thread:$0]  %s37, 16, %s930, [#allocation24]
        $region84: #{autoencoder_forward.1} parent=11 // pred_fallthru
          _
        // Predicated region
        $region85: #{autoencoder_forward.1} parent=11 // pred_check
          %p933 = pneg %p513
        $region86: #{autoencoder_forward.1} parent=11 // pred_check_branch
          %935 = sbr.rel (%p933) target = $region88
        $region87: #{autoencoder_forward.1} parent=11 // pred_region
          %s937 = ssub.s32 512, 512
          %938 = vsyncadd [#allocation24], %s937
          %s939 = sshll.u32 [#allocation25], 4
          %s940 = int_to_ptr.vmem [resolvable:$true] %s939
          %945 = dma.hbm_to_vmem [thread:$0]  %s39, 512, %s940, [#allocation24], 64, 64, 4
        $region88: #{autoencoder_forward.1} parent=11 // pred_fallthru
          _
        // Predicated region
        $region89: #{autoencoder_forward.1} parent=11 // pred_check
          %p946 = pneg %p534
        $region90: #{autoencoder_forward.1} parent=11 // pred_check_branch
          %948 = sbr.rel (%p946) target = $region92
        $region91: #{autoencoder_forward.1} parent=11 // pred_region
          %s950 = ssub.s32 16, 16
          %951 = vsyncadd [#allocation27], %s950
          %s953 = sshll.u32 [#allocation26], 4
          %s954 = int_to_ptr.vmem [resolvable:$true] %s953
          %956 = dma.hbm_to_vmem [thread:$0]  %s41, 16, %s954, [#allocation27]
        $region92: #{autoencoder_forward.1} parent=11 // pred_fallthru
          _
        // Predicated region
        $region93: #{autoencoder_forward.1} parent=11 // pred_check
          %p957 = pneg %p555
        $region94: #{autoencoder_forward.1} parent=11 // pred_check_branch
          %959 = sbr.rel (%p957) target = $region96
        $region95: #{autoencoder_forward.1} parent=11 // pred_region
          %s961 = ssub.s32 16, 16
          %962 = vsyncadd [#allocation27], %s961
          %s964 = sshll.u32 [#allocation28], 4
          %s965 = int_to_ptr.vmem [resolvable:$true] %s964
          %967 = dma.hbm_to_vmem [thread:$0]  %s43, 16, %s965, [#allocation27]
        $region96: #{autoencoder_forward.1} parent=11 // pred_fallthru
          _
        // Predicated region
        $region97: #{autoencoder_forward.1} parent=11 // pred_check
          %p968 = pneg %p576
        $region98: #{autoencoder_forward.1} parent=11 // pred_check_branch
          %970 = sbr.rel (%p968) target = $region100
        $region99: #{autoencoder_forward.1} parent=11 // pred_region
          %s972 = ssub.s32 16, 16
          %973 = vsyncadd [#allocation30], %s972
          %s975 = sshll.u32 [#allocation29], 4
          %s976 = int_to_ptr.vmem [resolvable:$true] %s975
          %978 = dma.hbm_to_vmem [thread:$0]  %s45, 16, %s976, [#allocation30]
        $region100: #{autoencoder_forward.1} parent=11 // pred_fallthru
          _
        // Predicated region
        $region101: #{autoencoder_forward.1} parent=11 // pred_check
          %p979 = pneg %p597
        $region102: #{autoencoder_forward.1} parent=11 // pred_check_branch
          %981 = sbr.rel (%p979) target = $region104
        $region103: #{autoencoder_forward.1} parent=11 // pred_region
          %s983 = ssub.s32 2048, 2048
          %984 = vsyncadd [#allocation30], %s983
          %s985 = sshll.u32 [#allocation31], 4
          %s986 = int_to_ptr.vmem [resolvable:$true] %s985
          %991 = dma.hbm_to_vmem [thread:$0]  %s47, 2048, %s986, [#allocation30], 128, 128, 8
        $region104: #{autoencoder_forward.1} parent=11 // pred_fallthru
          _
        // Predicated region
        $region105: #{autoencoder_forward.1} parent=11 // pred_check
          %p992 = pneg %p618
        $region106: #{autoencoder_forward.1} parent=11 // pred_check_branch
          %994 = sbr.rel (%p992) target = $region108
        $region107: #{autoencoder_forward.1} parent=11 // pred_region
          _
        $region108: #{autoencoder_forward.1} parent=11 // pred_fallthru
          _
        // Predicated region
        $region109: #{autoencoder_forward.1} parent=11 // pred_check
          %p995 = pneg %p639
        $region110: #{autoencoder_forward.1} parent=11 // pred_check_branch
          %997 = sbr.rel (%p995) target = $region112
        $region111: #{autoencoder_forward.1} parent=11 // pred_region
          %s999 = ssub.s32 32, 32
          %1000 = vsyncadd [#allocation33], %s999
          %s1002 = sshll.u32 [#allocation32], 4
          %s1003 = int_to_ptr.vmem [resolvable:$true] %s1002
          %1005 = dma.hbm_to_vmem [thread:$0]  %s51, 32, %s1003, [#allocation33]
        $region112: #{autoencoder_forward.1} parent=11 // pred_fallthru
          _
        // Predicated region
        $region113: #{autoencoder_forward.1} parent=11 // pred_check
          %p1006 = pneg %p660
        $region114: #{autoencoder_forward.1} parent=11 // pred_check_branch
          %1008 = sbr.rel (%p1006) target = $region116
        $region115: #{autoencoder_forward.1} parent=11 // pred_region
          %s1010 = ssub.s32 32, 32
          %1011 = vsyncadd [#allocation33], %s1010
          %s1013 = sshll.u32 [#allocation34], 4
          %s1014 = int_to_ptr.vmem [resolvable:$true] %s1013
          %1016 = dma.hbm_to_vmem [thread:$0]  %s53, 32, %s1014, [#allocation33]
        $region116: #{autoencoder_forward.1} parent=11 // pred_fallthru
          _
        // Predicated region
        $region117: #{autoencoder_forward.1} parent=11 // pred_check
          %p1017 = pneg %p681
        $region118: #{autoencoder_forward.1} parent=11 // pred_check_branch
          %1019 = sbr.rel (%p1017) target = $region120
        $region119: #{autoencoder_forward.1} parent=11 // pred_region
          %s1021 = ssub.s32 4096, 4096
          %1022 = vsyncadd [#allocation36], %s1021
          %s1023 = sshll.u32 [#allocation35], 4
          %s1024 = int_to_ptr.vmem [resolvable:$true] %s1023
          %1029 = dma.hbm_to_vmem [thread:$0]  %s55, 4096, %s1024, [#allocation36], 128, 128, 8
        $region120: #{autoencoder_forward.1} parent=11 // pred_fallthru
          _
        // Predicated region
        $region121: #{autoencoder_forward.1} parent=11 // pred_check
          %p1030 = pneg %p702
        $region122: #{autoencoder_forward.1} parent=11 // pred_check_branch
          %1032 = sbr.rel (%p1030) target = $region124
        $region123: #{autoencoder_forward.1} parent=11 // pred_region
          %s1034 = ssub.s32 32, 32
          %1035 = vsyncadd [#allocation36], %s1034
          %s1037 = sshll.u32 [#allocation37], 4
          %s1038 = int_to_ptr.vmem [resolvable:$true] %s1037
          %1040 = dma.hbm_to_vmem [thread:$0]  %s57, 32, %s1038, [#allocation36]
        $region124: #{autoencoder_forward.1} parent=11 // pred_fallthru
          _
      $region12: #{autoencoder_forward.1} parent=5 // pred_fallthru
        _
      %p1041 = scmp.lt.s32.totalorder %s88, 4
      // Predicated region
      $region125: #{autoencoder_forward.1} parent=5 // pred_check
        %p1042 = pneg %p1041
      $region126: #{autoencoder_forward.1} parent=5 // pred_check_branch
        %1044 = sbr.rel (%p1042) target = $region128
      $region127: #{autoencoder_forward.1} parent=5 // pred_region
        // Predicated region
        $region129: #{autoencoder_forward.1} parent=127 // pred_check
          %p1045 = pneg %p108
        $region130: #{autoencoder_forward.1} parent=127 // pred_check_branch
          %1047 = sbr.rel (%p1045) target = $region132
        $region131: #{autoencoder_forward.1} parent=127 // pred_region
          %s1048 = sand.u32 %s98, 1
          %s1049 = scalar_lea.sflag [#allocation3], %s1048
          %s1050 = sand.u32 %s98, 1
          %s1051 = smul.addr %s1050, 32
          %s1052 = scalar_lea.vmem [#allocation2], %s1051
          %s1053 = smul.u32 2, %s88
          %s1055 = ssub.s32 512, 512
          %1056 = vsyncadd %s1049, %s1055
          %s1057 = smul.addr %s1053, 2
          %s1058 = smul.addr %s1057, 128
          %s1059 = scalar_lea.hbm %s1, %s1058
          %s1060 = sshll.u32 %s1052, 4
          %s1061 = int_to_ptr.vmem [resolvable:$true] %s1060
          %1066 = dma.hbm_to_vmem [thread:$0]  %s1059, 512, %s1061, %s1049, 256, 256, 16
        $region132: #{autoencoder_forward.1} parent=127 // pred_fallthru
          _
      $region128: #{autoencoder_forward.1} parent=5 // pred_fallthru
        _
      %p1067 = scmp.le.s32.totalorder 1, %s88
      %p1068 = scmp.lt.s32.totalorder %s88, 5
      %p1069 = pnand %p1067, %p1068
      %p1070 = pneg %p1069
      // Predicated region
      $region133: #{autoencoder_forward.1} parent=5 // pred_check
        _
      $region134: #{autoencoder_forward.1} parent=5 // pred_check_branch
        %1072 = sbr.rel (%p1069) target = $region136
      $region135: #{autoencoder_forward.1} parent=5 // pred_region
        %s1073 = ssub.s32 %s88, 1
        %s1074 = sand.u32 %s101, 1
        %s1075 = scalar_lea.sflag [#allocation3], %s1074
        %s1076 = sand.u32 %s101, 1
        %s1077 = smul.addr %s1076, 32
        %s1078 = scalar_lea.vmem [#allocation2], %s1077
        // Predicated region
        $region137: #{autoencoder_forward.1} parent=135 // pred_check
          %p1079 = pneg %p114
        $region138: #{autoencoder_forward.1} parent=135 // pred_check_branch
          %1081 = sbr.rel (%p1079) target = $region140
        $region139: #{autoencoder_forward.1} parent=135 // pred_region
          %1082 = dma.done %s1075, 512
        $region140: #{autoencoder_forward.1} parent=135 // pred_fallthru
          _
        // Predicated region
        $region141: #{autoencoder_forward.1} parent=135 // pred_check
          %p1083 = pneg %p135
        $region142: #{autoencoder_forward.1} parent=135 // pred_check_branch
          %1085 = sbr.rel (%p1083) target = $region144
        $region143: #{autoencoder_forward.1} parent=135 // pred_region
          %1086 = dma.done [#allocation6], 4096
        $region144: #{autoencoder_forward.1} parent=135 // pred_fallthru
          _
        // Predicated region
        $region145: #{autoencoder_forward.1} parent=135 // pred_check
          %p1087 = pneg %p240
        $region146: #{autoencoder_forward.1} parent=135 // pred_check_branch
          %1089 = sbr.rel (%p1087) target = $region148
        $region147: #{autoencoder_forward.1} parent=135 // pred_region
          %1090 = dma.done [#allocation6], 16
        $region148: #{autoencoder_forward.1} parent=135 // pred_fallthru
          _
        // Predicated region
        $region149: #{autoencoder_forward.1} parent=135 // pred_check
          %p1091 = pneg %p261
        $region150: #{autoencoder_forward.1} parent=135 // pred_check_branch
          %1093 = sbr.rel (%p1091) target = $region152
        $region151: #{autoencoder_forward.1} parent=135 // pred_region
          %1094 = dma.done [#allocation9], 16
        $region152: #{autoencoder_forward.1} parent=135 // pred_fallthru
          _
        // Predicated region
        $region153: #{autoencoder_forward.1} parent=135 // pred_check
          %p1095 = pneg %p282
        $region154: #{autoencoder_forward.1} parent=135 // pred_check_branch
          %1097 = sbr.rel (%p1095) target = $region156
        $region155: #{autoencoder_forward.1} parent=135 // pred_region
          %1098 = dma.done [#allocation9], 16
        $region156: #{autoencoder_forward.1} parent=135 // pred_fallthru
          _
        // Predicated region
        $region157: #{autoencoder_forward.1} parent=135 // pred_check
          %p1099 = pneg %p324
        $region158: #{autoencoder_forward.1} parent=135 // pred_check_branch
          %1101 = sbr.rel (%p1099) target = $region160
        $region159: #{autoencoder_forward.1} parent=135 // pred_region
          %1102 = dma.done [#allocation12], 16
        $region160: #{autoencoder_forward.1} parent=135 // pred_fallthru
          _
        // Predicated region
        $region161: #{autoencoder_forward.1} parent=135 // pred_check
          %p1103 = pneg %p345
        $region162: #{autoencoder_forward.1} parent=135 // pred_check_branch
          %1105 = sbr.rel (%p1103) target = $region164
        $region163: #{autoencoder_forward.1} parent=135 // pred_region
          %1106 = dma.done [#allocation12], 16
        $region164: #{autoencoder_forward.1} parent=135 // pred_fallthru
          _
        // Predicated region
        $region165: #{autoencoder_forward.1} parent=135 // pred_check
          %p1107 = pneg %p366
        $region166: #{autoencoder_forward.1} parent=135 // pred_check_branch
          %1109 = sbr.rel (%p1107) target = $region168
        $region167: #{autoencoder_forward.1} parent=135 // pred_region
          %1110 = dma.done [#allocation15], 16
        $region168: #{autoencoder_forward.1} parent=135 // pred_fallthru
          _
        // Predicated region
        $region169: #{autoencoder_forward.1} parent=135 // pred_check
          %p1111 = pneg %p387
        $region170: #{autoencoder_forward.1} parent=135 // pred_check_branch
          %1113 = sbr.rel (%p1111) target = $region172
        $region171: #{autoencoder_forward.1} parent=135 // pred_region
          %1114 = dma.done [#allocation15], 512
        $region172: #{autoencoder_forward.1} parent=135 // pred_fallthru
          _
        // Predicated region
        $region173: #{autoencoder_forward.1} parent=135 // pred_check
          %p1115 = pneg %p408
        $region174: #{autoencoder_forward.1} parent=135 // pred_check_branch
          %1117 = sbr.rel (%p1115) target = $region176
        $region175: #{autoencoder_forward.1} parent=135 // pred_region
          %1118 = dma.done [#allocation18], 16
        $region176: #{autoencoder_forward.1} parent=135 // pred_fallthru
          _
        // Predicated region
        $region177: #{autoencoder_forward.1} parent=135 // pred_check
          %p1119 = pneg %p429
        $region178: #{autoencoder_forward.1} parent=135 // pred_check_branch
          %1121 = sbr.rel (%p1119) target = $region180
        $region179: #{autoencoder_forward.1} parent=135 // pred_region
          %1122 = dma.done [#allocation18], 512
        $region180: #{autoencoder_forward.1} parent=135 // pred_fallthru
          _
        // Predicated region
        $region181: #{autoencoder_forward.1} parent=135 // pred_check
          %p1123 = pneg %p450
        $region182: #{autoencoder_forward.1} parent=135 // pred_check_branch
          %1125 = sbr.rel (%p1123) target = $region184
        $region183: #{autoencoder_forward.1} parent=135 // pred_region
          %1126 = dma.done [#allocation21], 16
        $region184: #{autoencoder_forward.1} parent=135 // pred_fallthru
          _
        // Predicated region
        $region185: #{autoencoder_forward.1} parent=135 // pred_check
          %p1127 = pneg %p471
        $region186: #{autoencoder_forward.1} parent=135 // pred_check_branch
          %1129 = sbr.rel (%p1127) target = $region188
        $region187: #{autoencoder_forward.1} parent=135 // pred_region
          %1130 = dma.done [#allocation21], 16
        $region188: #{autoencoder_forward.1} parent=135 // pred_fallthru
          _
        // Predicated region
        $region189: #{autoencoder_forward.1} parent=135 // pred_check
          %p1131 = pneg %p492
        $region190: #{autoencoder_forward.1} parent=135 // pred_check_branch
          %1133 = sbr.rel (%p1131) target = $region192
        $region191: #{autoencoder_forward.1} parent=135 // pred_region
          %1134 = dma.done [#allocation24], 16
        $region192: #{autoencoder_forward.1} parent=135 // pred_fallthru
          _
        // Predicated region
        $region193: #{autoencoder_forward.1} parent=135 // pred_check
          %p1135 = pneg %p513
        $region194: #{autoencoder_forward.1} parent=135 // pred_check_branch
          %1137 = sbr.rel (%p1135) target = $region196
        $region195: #{autoencoder_forward.1} parent=135 // pred_region
          %1138 = dma.done [#allocation24], 512
        $region196: #{autoencoder_forward.1} parent=135 // pred_fallthru
          _
        // Predicated region
        $region197: #{autoencoder_forward.1} parent=135 // pred_check
          %p1139 = pneg %p534
        $region198: #{autoencoder_forward.1} parent=135 // pred_check_branch
          %1141 = sbr.rel (%p1139) target = $region200
        $region199: #{autoencoder_forward.1} parent=135 // pred_region
          %1142 = dma.done [#allocation27], 16
        $region200: #{autoencoder_forward.1} parent=135 // pred_fallthru
          _
        // Predicated region
        $region201: #{autoencoder_forward.1} parent=135 // pred_check
          %p1143 = pneg %p555
        $region202: #{autoencoder_forward.1} parent=135 // pred_check_branch
          %1145 = sbr.rel (%p1143) target = $region204
        $region203: #{autoencoder_forward.1} parent=135 // pred_region
          %1146 = dma.done [#allocation27], 16
        $region204: #{autoencoder_forward.1} parent=135 // pred_fallthru
          _
        // Predicated region
        $region205: #{autoencoder_forward.1} parent=135 // pred_check
          %p1147 = pneg %p576
        $region206: #{autoencoder_forward.1} parent=135 // pred_check_branch
          %1149 = sbr.rel (%p1147) target = $region208
        $region207: #{autoencoder_forward.1} parent=135 // pred_region
          %1150 = dma.done [#allocation30], 16
        $region208: #{autoencoder_forward.1} parent=135 // pred_fallthru
          _
        // Predicated region
        $region209: #{autoencoder_forward.1} parent=135 // pred_check
          %p1151 = pneg %p597
        $region210: #{autoencoder_forward.1} parent=135 // pred_check_branch
          %1153 = sbr.rel (%p1151) target = $region212
        $region211: #{autoencoder_forward.1} parent=135 // pred_region
          %1154 = dma.done [#allocation30], 2048
        $region212: #{autoencoder_forward.1} parent=135 // pred_fallthru
          _
        // Predicated region
        $region213: #{autoencoder_forward.1} parent=135 // pred_check
          %p1155 = pneg %p639
        $region214: #{autoencoder_forward.1} parent=135 // pred_check_branch
          %1157 = sbr.rel (%p1155) target = $region216
        $region215: #{autoencoder_forward.1} parent=135 // pred_region
          %1158 = dma.done [#allocation33], 32
        $region216: #{autoencoder_forward.1} parent=135 // pred_fallthru
          _
        // Predicated region
        $region217: #{autoencoder_forward.1} parent=135 // pred_check
          %p1159 = pneg %p660
        $region218: #{autoencoder_forward.1} parent=135 // pred_check_branch
          %1161 = sbr.rel (%p1159) target = $region220
        $region219: #{autoencoder_forward.1} parent=135 // pred_region
          %1162 = dma.done [#allocation33], 32
        $region220: #{autoencoder_forward.1} parent=135 // pred_fallthru
          _
        // Predicated region
        $region221: #{autoencoder_forward.1} parent=135 // pred_check
          %p1163 = pneg %p681
        $region222: #{autoencoder_forward.1} parent=135 // pred_check_branch
          %1165 = sbr.rel (%p1163) target = $region224
        $region223: #{autoencoder_forward.1} parent=135 // pred_region
          %1166 = dma.done [#allocation36], 4096
        $region224: #{autoencoder_forward.1} parent=135 // pred_fallthru
          _
        // Predicated region
        $region225: #{autoencoder_forward.1} parent=135 // pred_check
          %p1167 = pneg %p702
        $region226: #{autoencoder_forward.1} parent=135 // pred_check_branch
          %1169 = sbr.rel (%p1167) target = $region228
        $region227: #{autoencoder_forward.1} parent=135 // pred_region
          %1170 = dma.done [#allocation36], 32
        $region228: #{autoencoder_forward.1} parent=135 // pred_fallthru
          _
        %s1171 = sand.u32 %s101, 1
        %s1172 = scalar_lea.sflag [#allocation3], %s1171
        %s1173 = sand.u32 %s101, 1
        %s1174 = smul.addr %s1173, 32
        %s1175 = scalar_lea.vmem [#allocation2], %s1174
        %p1176 = pneg %p114
        %p1177 = pneg %p111
        %p1178 = pneg %p135
        %p1179 = pneg %p132
        %p1180 = pneg %p156
        %p1181 = pneg %p153
        %p1182 = pneg %p177
        %p1183 = pneg %p174
        %p1184 = pneg %p198
        %p1185 = pneg %p195
        %p1186 = pneg %p219
        %p1187 = pneg %p216
        %p1188 = pneg %p240
        %p1189 = pneg %p237
        %p1190 = pneg %p261
        %p1191 = pneg %p258
        %p1192 = pneg %p282
        %p1193 = pneg %p279
        %p1194 = pneg %p303
        %p1195 = pneg %p300
        %p1196 = pneg %p324
        %p1197 = pneg %p321
        %p1198 = pneg %p345
        %p1199 = pneg %p342
        %p1200 = pneg %p366
        %p1201 = pneg %p363
        %p1202 = pneg %p387
        %p1203 = pneg %p384
        %p1204 = pneg %p408
        %p1205 = pneg %p405
        %p1206 = pneg %p429
        %p1207 = pneg %p426
        %p1208 = pneg %p450
        %p1209 = pneg %p447
        %p1210 = pneg %p471
        %p1211 = pneg %p468
        %p1212 = pneg %p492
        %p1213 = pneg %p489
        %p1214 = pneg %p513
        %p1215 = pneg %p510
        %p1216 = pneg %p534
        %p1217 = pneg %p531
        %p1218 = pneg %p555
        %p1219 = pneg %p552
        %p1220 = pneg %p576
        %p1221 = pneg %p573
        %p1222 = pneg %p597
        %p1223 = pneg %p594
        %p1224 = pneg %p618
        %p1225 = pneg %p615
        %p1226 = pneg %p639
        %p1227 = pneg %p636
        %p1228 = pneg %p660
        %p1229 = pneg %p657
        %p1230 = pneg %p681
        %p1231 = pneg %p678
        %p1232 = pneg %p702
        %p1233 = pneg %p699
        %p1234 = pneg %p728
        %p1235 = pneg %p725
        %s1236 = sand.u32 %s715, 1
        %s1237 = scalar_lea.sflag [#allocation4], %s1236
        %s1238 = sand.u32 %s715, 1
        %s1239 = smul.addr %s1238, 32
        %s1240 = scalar_lea.vmem [#allocation38], %s1239
        %p1241 = pneg %p754
        %p1242 = pneg %p751
        %s1243 = sand.u32 %s741, 1
        %s1244 = scalar_lea.sflag [#allocation40], %s1243
        %s1245 = sand.u32 %s741, 1
        %s1246 = smul.addr %s1245, 16
        %s1247 = scalar_lea.vmem [#allocation39], %s1246
        %s1248 = smul.u32 2, %s93
        %s1249 = smul.u32 2, %s93
        %s1250 = smul.u32 2, %s93
        %v1252 = vld [vmem:[%s1078] sm:$0xff]
        %v1253 = vld [vmem:[%s1078 + $0x8] sm:$0xff]
        %v1254 = vld [vmem:[%s1078 + $0x10] sm:$0xff]
        %v1255 = vld [vmem:[%s1078 + $0x18] sm:$0xff]
        %v1256 = vpack.c.bf16 %v1254, %v1252
        %v1257 = vpack.c.bf16 %v1255, %v1253
        %v1258 = vld [vmem:[#allocation5] sm:$0xff]
        %v1259 = vld [vmem:[#allocation5 + $0x8] sm:$0xff]
        %v1260 = vld [vmem:[#allocation5 + $0x10] sm:$0xff]
        %v1261 = vld [vmem:[#allocation5 + $0x18] sm:$0xff]
        %v1262 = vld [vmem:[#allocation5 + $0x20] sm:$0xff]
        %v1263 = vld [vmem:[#allocation5 + $0x28] sm:$0xff]
        %v1264 = vld [vmem:[#allocation5 + $0x30] sm:$0xff]
        %v1265 = vld [vmem:[#allocation5 + $0x38] sm:$0xff]
        %v1266 = vld [vmem:[#allocation5 + $0x40] sm:$0xff]
        %v1267 = vld [vmem:[#allocation5 + $0x48] sm:$0xff]
        %v1268 = vld [vmem:[#allocation5 + $0x50] sm:$0xff]
        %v1269 = vld [vmem:[#allocation5 + $0x58] sm:$0xff]
        %v1270 = vld [vmem:[#allocation5 + $0x60] sm:$0xff]
        %v1271 = vld [vmem:[#allocation5 + $0x68] sm:$0xff]
        %v1272 = vld [vmem:[#allocation5 + $0x70] sm:$0xff]
        %v1273 = vld [vmem:[#allocation5 + $0x78] sm:$0xff]
        %v1274 = vld [vmem:[#allocation5 + $0x80] sm:$0xff]
        %v1275 = vld [vmem:[#allocation5 + $0x88] sm:$0xff]
        %v1276 = vld [vmem:[#allocation5 + $0x90] sm:$0xff]
        %v1277 = vld [vmem:[#allocation5 + $0x98] sm:$0xff]
        %v1278 = vld [vmem:[#allocation5 + $0xa0] sm:$0xff]
        %v1279 = vld [vmem:[#allocation5 + $0xa8] sm:$0xff]
        %v1280 = vld [vmem:[#allocation5 + $0xb0] sm:$0xff]
        %v1281 = vld [vmem:[#allocation5 + $0xb8] sm:$0xff]
        %v1282 = vld [vmem:[#allocation5 + $0xc0] sm:$0xff]
        %v1283 = vld [vmem:[#allocation5 + $0xc8] sm:$0xff]
        %v1284 = vld [vmem:[#allocation5 + $0xd0] sm:$0xff]
        %v1285 = vld [vmem:[#allocation5 + $0xd8] sm:$0xff]
        %v1286 = vld [vmem:[#allocation5 + $0xe0] sm:$0xff]
        %v1287 = vld [vmem:[#allocation5 + $0xe8] sm:$0xff]
        %v1288 = vld [vmem:[#allocation5 + $0xf0] sm:$0xff]
        %v1289 = vld [vmem:[#allocation5 + $0xf8] sm:$0xff]
        %v1290 = vld [vmem:[%s5] sm:$0x3]
        %v1292 = vlaneseq
        %v1293 = vshrl.u32 %v1292, 7
        %v1294 = vsub.s32 0, %v1293
        %v1295 = vrot.slane %v1290, %v1294
        %v1296 = vlaneseq
        %v1297 = vshrl.u32 %v1296, 7
        %v1298 = vsub.s32 1, %v1297
        %v1299 = vrot.slane %v1290, %v1298
        %v1334 = vunpack.c.l.b16 %v1258
        %v1335 = vunpack.c.h.b16 %v1258
        %v1336 = vunpack.c.l.b16 %v1259
        %v1337 = vunpack.c.h.b16 %v1259
        %v1338 = vunpack.c.l.b16 %v1260
        %v1339 = vunpack.c.h.b16 %v1260
        %v1340 = vunpack.c.l.b16 %v1261
        %v1341 = vunpack.c.h.b16 %v1261
        %v1342 = vunpack.c.l.b16 %v1262
        %v1343 = vunpack.c.h.b16 %v1262
        %v1344 = vunpack.c.l.b16 %v1263
        %v1345 = vunpack.c.h.b16 %v1263
        %v1346 = vunpack.c.l.b16 %v1264
        %v1347 = vunpack.c.h.b16 %v1264
        %v1348 = vunpack.c.l.b16 %v1265
        %v1349 = vunpack.c.h.b16 %v1265
        %v1350 = vunpack.c.l.b16 %v1266
        %v1351 = vunpack.c.h.b16 %v1266
        %v1352 = vunpack.c.l.b16 %v1267
        %v1353 = vunpack.c.h.b16 %v1267
        %v1354 = vunpack.c.l.b16 %v1268
        %v1355 = vunpack.c.h.b16 %v1268
        %v1356 = vunpack.c.l.b16 %v1269
        %v1357 = vunpack.c.h.b16 %v1269
        %v1358 = vunpack.c.l.b16 %v1270
        %v1359 = vunpack.c.h.b16 %v1270
        %v1360 = vunpack.c.l.b16 %v1271
        %v1361 = vunpack.c.h.b16 %v1271
        %v1362 = vunpack.c.l.b16 %v1272
        %v1363 = vunpack.c.h.b16 %v1272
        %v1364 = vunpack.c.l.b16 %v1273
        %v1365 = vunpack.c.h.b16 %v1273
        %v1366 = vunpack.c.l.b16 %v1274
        %v1367 = vunpack.c.h.b16 %v1274
        %v1368 = vunpack.c.l.b16 %v1275
        %v1369 = vunpack.c.h.b16 %v1275
        %v1370 = vunpack.c.l.b16 %v1276
        %v1371 = vunpack.c.h.b16 %v1276
        %v1372 = vunpack.c.l.b16 %v1277
        %v1373 = vunpack.c.h.b16 %v1277
        %v1374 = vunpack.c.l.b16 %v1278
        %v1375 = vunpack.c.h.b16 %v1278
        %v1376 = vunpack.c.l.b16 %v1279
        %v1377 = vunpack.c.h.b16 %v1279
        %v1378 = vunpack.c.l.b16 %v1280
        %v1379 = vunpack.c.h.b16 %v1280
        %v1380 = vunpack.c.l.b16 %v1281
        %v1381 = vunpack.c.h.b16 %v1281
        %v1382 = vunpack.c.l.b16 %v1282
        %v1383 = vunpack.c.h.b16 %v1282
        %v1384 = vunpack.c.l.b16 %v1283
        %v1385 = vunpack.c.h.b16 %v1283
        %v1386 = vunpack.c.l.b16 %v1284
        %v1387 = vunpack.c.h.b16 %v1284
        %v1388 = vunpack.c.l.b16 %v1285
        %v1389 = vunpack.c.h.b16 %v1285
        %v1390 = vunpack.c.l.b16 %v1286
        %v1391 = vunpack.c.h.b16 %v1286
        %v1392 = vunpack.c.l.b16 %v1287
        %v1393 = vunpack.c.h.b16 %v1287
        %v1394 = vunpack.c.l.b16 %v1288
        %v1395 = vunpack.c.h.b16 %v1288
        %v1396 = vunpack.c.l.b16 %v1289
        %v1397 = vunpack.c.h.b16 %v1289
        %v1398 = vpack.c.b16 %v1336, %v1334
        %v1399 = vpack.c.b16 %v1337, %v1335
        %v1400 = vpack.c.b16 %v1340, %v1338
        %v1401 = vpack.c.b16 %v1341, %v1339
        %v1402 = vpack.c.b16 %v1344, %v1342
        %v1403 = vpack.c.b16 %v1345, %v1343
        %v1404 = vpack.c.b16 %v1348, %v1346
        %v1405 = vpack.c.b16 %v1349, %v1347
        %v1406 = vpack.c.b16 %v1352, %v1350
        %v1407 = vpack.c.b16 %v1353, %v1351
        %v1408 = vpack.c.b16 %v1356, %v1354
        %v1409 = vpack.c.b16 %v1357, %v1355
        %v1410 = vpack.c.b16 %v1360, %v1358
        %v1411 = vpack.c.b16 %v1361, %v1359
        %v1412 = vpack.c.b16 %v1364, %v1362
        %v1413 = vpack.c.b16 %v1365, %v1363
        %v1414 = vpack.c.b16 %v1368, %v1366
        %v1415 = vpack.c.b16 %v1369, %v1367
        %v1416 = vpack.c.b16 %v1372, %v1370
        %v1417 = vpack.c.b16 %v1373, %v1371
        %v1418 = vpack.c.b16 %v1376, %v1374
        %v1419 = vpack.c.b16 %v1377, %v1375
        %v1420 = vpack.c.b16 %v1380, %v1378
        %v1421 = vpack.c.b16 %v1381, %v1379
        %v1422 = vpack.c.b16 %v1384, %v1382
        %v1423 = vpack.c.b16 %v1385, %v1383
        %v1424 = vpack.c.b16 %v1388, %v1386
        %v1425 = vpack.c.b16 %v1389, %v1387
        %v1426 = vpack.c.b16 %v1392, %v1390
        %v1427 = vpack.c.b16 %v1393, %v1391
        %v1428 = vpack.c.b16 %v1396, %v1394
        %v1429 = vpack.c.b16 %v1397, %v1395
        %1462 = vmatprep.subr.bf16.mxu0 %v1413
        %1463 = vmatpush1.bf16.msra.mxu0 %v1412
        %1464 = vmatprep.subr.bf16.mxu0 %v1411
        %1465 = vmatpush1.bf16.msra.mxu0 %v1410
        %1466 = vmatprep.subr.bf16.mxu0 %v1409
        %1467 = vmatpush1.bf16.msra.mxu0 %v1408
        %1468 = vmatprep.subr.bf16.mxu0 %v1407
        %1469 = vmatpush1.bf16.msra.mxu0 %v1406
        %1470 = vmatprep.subr.bf16.mxu0 %v1405
        %1471 = vmatpush1.bf16.msra.mxu0 %v1404
        %1472 = vmatprep.subr.bf16.mxu0 %v1403
        %1473 = vmatpush1.bf16.msra.mxu0 %v1402
        %1474 = vmatprep.subr.bf16.mxu0 %v1401
        %1475 = vmatpush1.bf16.msra.mxu0 %v1400
        %1476 = vmatprep.subr.bf16.mxu0 %v1399
        %1477 = vmatpush1.bf16.msra.mxu0 %v1398
        %1478 = vmatprep.subr.bf16.mxu0 %v1429
        %1479 = vmatpush2.bf16.msra.mxu0 %v1428
        %1480 = vmatprep.subr.bf16.mxu0 %v1427
        %1481 = vmatpush2.bf16.msra.mxu0 %v1426
        %1482 = vmatprep.subr.bf16.mxu0 %v1425
        %1483 = vmatpush2.bf16.msra.mxu0 %v1424
        %1484 = vmatprep.subr.bf16.mxu0 %v1423
        %1485 = vmatpush2.bf16.msra.mxu0 %v1422
        %1486 = vmatprep.subr.bf16.mxu0 %v1421
        %1487 = vmatpush2.bf16.msra.mxu0 %v1420
        %1488 = vmatprep.subr.bf16.mxu0 %v1419
        %1489 = vmatpush2.bf16.msra.mxu0 %v1418
        %1490 = vmatprep.subr.bf16.mxu0 %v1417
        %1491 = vmatpush2.bf16.msra.mxu0 %v1416
        %1492 = vmatprep.subr.bf16.mxu0 %v1415
        %1493 = vmatpush2.bf16.msra.mxu0 %v1414
        %1494 = vmatprep.mubr.bf16.mxu0 %v1257
        %1495 = vmatmul.mubr.bf16.gmra.mxu0 %v1256
        %v1496 = vpop.f32.mrf.mxu0
        %v1497 = vadd.f32 %v1295, %v1496
        %v1498 = vpop.f32.mrf.mxu0
        %v1499 = vadd.f32 %v1299, %v1498
        %v1500 = vpop.f32.mrf.mxu0
        %v1501 = vadd.f32 %v1295, %v1500
        %v1502 = vpop.f32.mrf.mxu0
        %v1503 = vadd.f32 %v1299, %v1502
        %1504 = vdwg.mxu0
        %v1505 = vadd.f32 %v1497, %v1499
        %1506 = vadd.xlane.f32.xlu0 %v1505
        %v1507 = vpop.xlane.xlu0 %1506
        %v1508 = vadd.f32 %v1501, %v1503
        %1509 = vadd.xlane.f32.xlu0 %v1508
        %v1510 = vpop.xlane.xlu0 %1509
        %v1511 = vrcp.pop 256.0
        %v1512 = vmul.f32 %v1507, %v1511
        %v1513 = vmul.f32 %v1510, %v1511
        %v1514 = vsub.f32 %v1497, %v1512
        %v1515 = vsub.f32 %v1499, %v1512
        %v1516 = vsub.f32 %v1501, %v1513
        %v1517 = vsub.f32 %v1503, %v1513
        %v1518 = vmul.f32 %v1514, %v1514
        %v1519 = vmul.f32 %v1515, %v1515
        %v1520 = vmul.f32 %v1516, %v1516
        %v1521 = vmul.f32 %v1517, %v1517
        %v1522 = vadd.f32 %v1518, %v1519
        %1523 = vadd.xlane.f32.xlu0 %v1522
        %v1524 = vpop.xlane.xlu0 %1523
        %v1525 = vadd.f32 %v1520, %v1521
        %1526 = vadd.xlane.f32.xlu0 %v1525
        %v1527 = vpop.xlane.xlu0 %1526
        %v1528 = vmul.f32 %v1524, %v1511
        %v1529 = vmul.f32 %v1527, %v1511
        %v1530 = vadd.f32 %v1528, 1e-05
        %v1531 = vadd.f32 %v1529, 1e-05
        %v1532 = vrsqrt.pop %v1530
        %v1533 = vrsqrt.pop %v1531
        %v1534 = vmul.f32 %v1514, %v1532
        %v1535 = vmul.f32 %v1515, %v1532
        %v1536 = vmul.f32 %v1516, %v1533
        %v1537 = vmul.f32 %v1517, %v1533
        %v1538 = vld [vmem:[%s7] sm:$0x3]
        %v1540 = vlaneseq
        %v1541 = vshrl.u32 %v1540, 7
        %v1542 = vsub.s32 0, %v1541
        %v1543 = vrot.slane %v1538, %v1542
        %v1544 = vlaneseq
        %v1545 = vshrl.u32 %v1544, 7
        %v1546 = vsub.s32 1, %v1545
        %v1547 = vrot.slane %v1538, %v1546
        %v1550 = vmul.f32 %v1534, %v1543
        %v1551 = vmul.f32 %v1535, %v1547
        %v1552 = vmul.f32 %v1536, %v1543
        %v1553 = vmul.f32 %v1537, %v1547
        %v1554 = vld [vmem:[%s9] sm:$0x3]
        %v1556 = vlaneseq
        %v1557 = vshrl.u32 %v1556, 7
        %v1558 = vsub.s32 0, %v1557
        %v1559 = vrot.slane %v1554, %v1558
        %v1560 = vlaneseq
        %v1561 = vshrl.u32 %v1560, 7
        %v1562 = vsub.s32 1, %v1561
        %v1563 = vrot.slane %v1554, %v1562
        %v1566 = vadd.f32 %v1550, %v1559
        %v1567 = vadd.f32 %v1551, %v1563
        %v1568 = vadd.f32 %v1552, %v1559
        %v1569 = vadd.f32 %v1553, %v1563
        %vm1570 = vcmp.ge.f32.partialorder %v1566, 0.0
        %vm1571 = vcmp.ge.f32.partialorder %v1567, 0.0
        %vm1572 = vcmp.ge.f32.partialorder %v1568, 0.0
        %vm1573 = vcmp.ge.f32.partialorder %v1569, 0.0
        %v1574 = vmul.f32 %v1566, 0.2
        %v1575 = vmul.f32 %v1567, 0.2
        %v1576 = vmul.f32 %v1568, 0.2
        %v1577 = vmul.f32 %v1569, 0.2
        %v1578 = vsel %vm1570, %v1566, %v1574
        %v1579 = vsel %vm1571, %v1567, %v1575
        %v1580 = vsel %vm1572, %v1568, %v1576
        %v1581 = vsel %vm1573, %v1569, %v1577
        %v1582 = vpack.c.bf16 %v1580, %v1578
        %v1583 = vpack.c.bf16 %v1581, %v1579
        %v1584 = vld [vmem:[%s11] sm:$0xf]
        %v1585 = vld [vmem:[%s11 + $0x4] sm:$0xf]
        %v1586 = vld [vmem:[%s11 + $0x8] sm:$0xf]
        %v1587 = vld [vmem:[%s11 + $0xc] sm:$0xf]
        %v1588 = vld [vmem:[%s11 + $0x10] sm:$0xf]
        %v1589 = vld [vmem:[%s11 + $0x14] sm:$0xf]
        %v1590 = vld [vmem:[%s11 + $0x18] sm:$0xf]
        %v1591 = vld [vmem:[%s11 + $0x1c] sm:$0xf]
        %v1592 = vld [vmem:[%s11 + $0x20] sm:$0xf]
        %v1593 = vld [vmem:[%s11 + $0x24] sm:$0xf]
        %v1594 = vld [vmem:[%s11 + $0x28] sm:$0xf]
        %v1595 = vld [vmem:[%s11 + $0x2c] sm:$0xf]
        %v1596 = vld [vmem:[%s11 + $0x30] sm:$0xf]
        %v1597 = vld [vmem:[%s11 + $0x34] sm:$0xf]
        %v1598 = vld [vmem:[%s11 + $0x38] sm:$0xf]
        %v1599 = vld [vmem:[%s11 + $0x3c] sm:$0xf]
        %v1600 = vld [vmem:[%s11 + $0x40] sm:$0xf]
        %v1601 = vld [vmem:[%s11 + $0x44] sm:$0xf]
        %v1602 = vld [vmem:[%s11 + $0x48] sm:$0xf]
        %v1603 = vld [vmem:[%s11 + $0x4c] sm:$0xf]
        %v1604 = vld [vmem:[%s11 + $0x50] sm:$0xf]
        %v1605 = vld [vmem:[%s11 + $0x54] sm:$0xf]
        %v1606 = vld [vmem:[%s11 + $0x58] sm:$0xf]
        %v1607 = vld [vmem:[%s11 + $0x5c] sm:$0xf]
        %v1608 = vld [vmem:[%s11 + $0x60] sm:$0xf]
        %v1609 = vld [vmem:[%s11 + $0x64] sm:$0xf]
        %v1610 = vld [vmem:[%s11 + $0x68] sm:$0xf]
        %v1611 = vld [vmem:[%s11 + $0x6c] sm:$0xf]
        %v1612 = vld [vmem:[%s11 + $0x70] sm:$0xf]
        %v1613 = vld [vmem:[%s11 + $0x74] sm:$0xf]
        %v1614 = vld [vmem:[%s11 + $0x78] sm:$0xf]
        %v1615 = vld [vmem:[%s11 + $0x7c] sm:$0xf]
        %v1616 = vld [vmem:[#allocation7] sm:$0x1]
        %v1618 = vlaneseq
        %v1619 = vshrl.u32 %v1618, 7
        %v1620 = vsub.s32 0, %v1619
        %v1621 = vrot.slane %v1616, %v1620
        %v1655 = vunpack.c.l.b16 %v1584
        %v1656 = vunpack.c.l.b16 %v1585
        %v1657 = vunpack.c.l.b16 %v1586
        %v1658 = vunpack.c.l.b16 %v1587
        %v1659 = vunpack.c.l.b16 %v1588
        %v1660 = vunpack.c.l.b16 %v1589
        %v1661 = vunpack.c.l.b16 %v1590
        %v1662 = vunpack.c.l.b16 %v1591
        %v1663 = vunpack.c.l.b16 %v1592
        %v1664 = vunpack.c.l.b16 %v1593
        %v1665 = vunpack.c.l.b16 %v1594
        %v1666 = vunpack.c.l.b16 %v1595
        %v1667 = vunpack.c.l.b16 %v1596
        %v1668 = vunpack.c.l.b16 %v1597
        %v1669 = vunpack.c.l.b16 %v1598
        %v1670 = vunpack.c.l.b16 %v1599
        %v1671 = vunpack.c.l.b16 %v1600
        %v1672 = vunpack.c.l.b16 %v1601
        %v1673 = vunpack.c.l.b16 %v1602
        %v1674 = vunpack.c.l.b16 %v1603
        %v1675 = vunpack.c.l.b16 %v1604
        %v1676 = vunpack.c.l.b16 %v1605
        %v1677 = vunpack.c.l.b16 %v1606
        %v1678 = vunpack.c.l.b16 %v1607
        %v1679 = vunpack.c.l.b16 %v1608
        %v1680 = vunpack.c.l.b16 %v1609
        %v1681 = vunpack.c.l.b16 %v1610
        %v1682 = vunpack.c.l.b16 %v1611
        %v1683 = vunpack.c.l.b16 %v1612
        %v1684 = vunpack.c.l.b16 %v1613
        %v1685 = vunpack.c.l.b16 %v1614
        %v1686 = vunpack.c.l.b16 %v1615
        %v1687 = vpack.c.b16 %v1656, %v1655
        %v1688 = vpack.c.b16 %v1658, %v1657
        %v1689 = vpack.c.b16 %v1660, %v1659
        %v1690 = vpack.c.b16 %v1662, %v1661
        %v1691 = vpack.c.b16 %v1664, %v1663
        %v1692 = vpack.c.b16 %v1666, %v1665
        %v1693 = vpack.c.b16 %v1668, %v1667
        %v1694 = vpack.c.b16 %v1670, %v1669
        %v1695 = vpack.c.b16 %v1672, %v1671
        %v1696 = vpack.c.b16 %v1674, %v1673
        %v1697 = vpack.c.b16 %v1676, %v1675
        %v1698 = vpack.c.b16 %v1678, %v1677
        %v1699 = vpack.c.b16 %v1680, %v1679
        %v1700 = vpack.c.b16 %v1682, %v1681
        %v1701 = vpack.c.b16 %v1684, %v1683
        %v1702 = vpack.c.b16 %v1686, %v1685
        %1719 = vmatprep.subr.bf16.mxu0 0
        %1720 = vmatpush1.bf16.msra.mxu0 %v1694
        %1721 = vmatprep.subr.bf16.mxu0 0
        %1722 = vmatpush1.bf16.msra.mxu0 %v1693
        %1723 = vmatprep.subr.bf16.mxu0 0
        %1724 = vmatpush1.bf16.msra.mxu0 %v1692
        %1725 = vmatprep.subr.bf16.mxu0 0
        %1726 = vmatpush1.bf16.msra.mxu0 %v1691
        %1727 = vmatprep.subr.bf16.mxu0 0
        %1728 = vmatpush1.bf16.msra.mxu0 %v1690
        %1729 = vmatprep.subr.bf16.mxu0 0
        %1730 = vmatpush1.bf16.msra.mxu0 %v1689
        %1731 = vmatprep.subr.bf16.mxu0 0
        %1732 = vmatpush1.bf16.msra.mxu0 %v1688
        %1733 = vmatprep.subr.bf16.mxu0 0
        %1734 = vmatpush1.bf16.msra.mxu0 %v1687
        %1735 = vmatprep.subr.bf16.mxu0 0
        %1736 = vmatpush2.bf16.msra.mxu0 %v1702
        %1737 = vmatprep.subr.bf16.mxu0 0
        %1738 = vmatpush2.bf16.msra.mxu0 %v1701
        %1739 = vmatprep.subr.bf16.mxu0 0
        %1740 = vmatpush2.bf16.msra.mxu0 %v1700
        %1741 = vmatprep.subr.bf16.mxu0 0
        %1742 = vmatpush2.bf16.msra.mxu0 %v1699
        %1743 = vmatprep.subr.bf16.mxu0 0
        %1744 = vmatpush2.bf16.msra.mxu0 %v1698
        %1745 = vmatprep.subr.bf16.mxu0 0
        %1746 = vmatpush2.bf16.msra.mxu0 %v1697
        %1747 = vmatprep.subr.bf16.mxu0 0
        %1748 = vmatpush2.bf16.msra.mxu0 %v1696
        %1749 = vmatprep.subr.bf16.mxu0 0
        %1750 = vmatpush2.bf16.msra.mxu0 %v1695
        %1751 = vmatprep.mubr.bf16.mxu0 %v1583
        %1752 = vmatmul.mubr.bf16.gmra.mxu0 %v1582
        %v1753 = vpop.f32.mrf.mxu0
        %v1754 = vadd.f32 %v1621, %v1753
        %v1755 = vpop.f32.mrf.mxu0
        %v1756 = vpop.f32.mrf.mxu0
        %v1757 = vadd.f32 %v1621, %v1756
        %v1758 = vpop.f32.mrf.mxu0
        %1759 = vdwg.mxu0
        %1760 = vadd.xlane.f32.xlu0 %v1754
        %v1761 = vpop.xlane.xlu0 %1760
        %1762 = vadd.xlane.f32.xlu0 %v1757
        %v1763 = vpop.xlane.xlu0 %1762
        %v1764 = vrcp.pop 128.0
        %v1765 = vmul.f32 %v1761, %v1764
        %v1766 = vmul.f32 %v1763, %v1764
        %v1767 = vsub.f32 %v1754, %v1765
        %v1768 = vsub.f32 %v1757, %v1766
        %v1769 = vmul.f32 %v1767, %v1767
        %v1770 = vmul.f32 %v1768, %v1768
        %1771 = vadd.xlane.f32.xlu0 %v1769
        %v1772 = vpop.xlane.xlu0 %1771
        %1773 = vadd.xlane.f32.xlu0 %v1770
        %v1774 = vpop.xlane.xlu0 %1773
        %v1775 = vmul.f32 %v1772, %v1764
        %v1776 = vmul.f32 %v1774, %v1764
        %v1777 = vadd.f32 %v1775, 1e-05
        %v1778 = vadd.f32 %v1776, 1e-05
        %v1779 = vrsqrt.pop %v1777
        %v1780 = vrsqrt.pop %v1778
        %v1781 = vmul.f32 %v1767, %v1779
        %v1782 = vmul.f32 %v1768, %v1780
        %v1783 = vld [vmem:[#allocation8] sm:$0x1]
        %v1785 = vlaneseq
        %v1786 = vshrl.u32 %v1785, 7
        %v1787 = vsub.s32 0, %v1786
        %v1788 = vrot.slane %v1783, %v1787
        %v1790 = vmul.f32 %v1781, %v1788
        %v1791 = vmul.f32 %v1782, %v1788
        %v1792 = vld [vmem:[#allocation10] sm:$0x1]
        %v1794 = vlaneseq
        %v1795 = vshrl.u32 %v1794, 7
        %v1796 = vsub.s32 0, %v1795
        %v1797 = vrot.slane %v1792, %v1796
        %v1799 = vadd.f32 %v1790, %v1797
        %v1800 = vadd.f32 %v1791, %v1797
        %vm1801 = vcmp.ge.f32.partialorder %v1799, 0.0
        %vm1802 = vcmp.ge.f32.partialorder %v1800, 0.0
        %v1803 = vmul.f32 %v1799, 0.2
        %v1804 = vmul.f32 %v1800, 0.2
        %v1805 = vsel %vm1801, %v1799, %v1803
        %v1806 = vsel %vm1802, %v1800, %v1804
        %v1807 = vpack.c.bf16 %v1806, %v1805
        %v1808 = vld [vmem:[%s19] sm:$0xf]
        %v1809 = vld [vmem:[%s19 + $0x4] sm:$0xf]
        %v1810 = vld [vmem:[%s19 + $0x8] sm:$0xf]
        %v1811 = vld [vmem:[%s19 + $0xc] sm:$0xf]
        %v1812 = vld [vmem:[%s19 + $0x10] sm:$0xf]
        %v1813 = vld [vmem:[%s19 + $0x14] sm:$0xf]
        %v1814 = vld [vmem:[%s19 + $0x18] sm:$0xf]
        %v1815 = vld [vmem:[%s19 + $0x1c] sm:$0xf]
        %v1816 = vld [vmem:[%s19 + $0x20] sm:$0xf]
        %v1817 = vld [vmem:[%s19 + $0x24] sm:$0xf]
        %v1818 = vld [vmem:[%s19 + $0x28] sm:$0xf]
        %v1819 = vld [vmem:[%s19 + $0x2c] sm:$0xf]
        %v1820 = vld [vmem:[%s19 + $0x30] sm:$0xf]
        %v1821 = vld [vmem:[%s19 + $0x34] sm:$0xf]
        %v1822 = vld [vmem:[%s19 + $0x38] sm:$0xf]
        %v1823 = vld [vmem:[%s19 + $0x3c] sm:$0xf]
        %v1824 = vld [vmem:[#allocation11] sm:$0x1]
        %v1826 = vlaneseq
        %v1827 = vshrl.u32 %v1826, 7
        %v1828 = vsub.s32 0, %v1827
        %v1829 = vrot.slane %v1824, %v1828
        %v1847 = vunpack.c.l.b16 %v1808
        %v1848 = vunpack.c.l.b16 %v1809
        %v1849 = vunpack.c.l.b16 %v1810
        %v1850 = vunpack.c.l.b16 %v1811
        %v1851 = vunpack.c.l.b16 %v1812
        %v1852 = vunpack.c.l.b16 %v1813
        %v1853 = vunpack.c.l.b16 %v1814
        %v1854 = vunpack.c.l.b16 %v1815
        %v1855 = vunpack.c.l.b16 %v1816
        %v1856 = vunpack.c.l.b16 %v1817
        %v1857 = vunpack.c.l.b16 %v1818
        %v1858 = vunpack.c.l.b16 %v1819
        %v1859 = vunpack.c.l.b16 %v1820
        %v1860 = vunpack.c.l.b16 %v1821
        %v1861 = vunpack.c.l.b16 %v1822
        %v1862 = vunpack.c.l.b16 %v1823
        %v1863 = vpack.c.b16 %v1848, %v1847
        %v1864 = vpack.c.b16 %v1850, %v1849
        %v1865 = vpack.c.b16 %v1852, %v1851
        %v1866 = vpack.c.b16 %v1854, %v1853
        %v1867 = vpack.c.b16 %v1856, %v1855
        %v1868 = vpack.c.b16 %v1858, %v1857
        %v1869 = vpack.c.b16 %v1860, %v1859
        %v1870 = vpack.c.b16 %v1862, %v1861
        %1879 = vmatprep.subr.bf16.mxu0 0
        %1880 = vmatpush1.bf16.msra.mxu0 %v1870
        %1881 = vmatprep.subr.bf16.mxu0 0
        %1882 = vmatpush1.bf16.msra.mxu0 %v1869
        %1883 = vmatprep.subr.bf16.mxu0 0
        %1884 = vmatpush1.bf16.msra.mxu0 %v1868
        %1885 = vmatprep.subr.bf16.mxu0 0
        %1886 = vmatpush1.bf16.msra.mxu0 %v1867
        %1887 = vmatprep.subr.bf16.mxu0 0
        %1888 = vmatpush1.bf16.msra.mxu0 %v1866
        %1889 = vmatprep.subr.bf16.mxu0 0
        %1890 = vmatpush1.bf16.msra.mxu0 %v1865
        %1891 = vmatprep.subr.bf16.mxu0 0
        %1892 = vmatpush1.bf16.msra.mxu0 %v1864
        %1893 = vmatprep.subr.bf16.mxu0 0
        %1894 = vmatpush1.bf16.msra.mxu0 %v1863
        %1895 = vmatprep.subr.bf16.mxu0 0
        %1896 = vmatpush2.bf16.msra.mxu0 0
        %1897 = vmatprep.subr.bf16.mxu0 0
        %1898 = vmatpush2.bf16.msra.mxu0 0
        %1899 = vmatprep.subr.bf16.mxu0 0
        %1900 = vmatpush2.bf16.msra.mxu0 0
        %1901 = vmatprep.subr.bf16.mxu0 0
        %1902 = vmatpush2.bf16.msra.mxu0 0
        %1903 = vmatprep.subr.bf16.mxu0 0
        %1904 = vmatpush2.bf16.msra.mxu0 0
        %1905 = vmatprep.subr.bf16.mxu0 0
        %1906 = vmatpush2.bf16.msra.mxu0 0
        %1907 = vmatprep.subr.bf16.mxu0 0
        %1908 = vmatpush2.bf16.msra.mxu0 0
        %1909 = vmatprep.subr.bf16.mxu0 0
        %1910 = vmatpush2.bf16.msra.mxu0 0
        %1911 = vmatprep.mubr.bf16.mxu0 0
        %1912 = vmatmul.mubr.bf16.gmra.mxu0 %v1807
        %v1913 = vpop.f32.mrf.mxu0
        %v1914 = vadd.f32 %v1829, %v1913
        %v1915 = vpop.f32.mrf.mxu0
        %v1916 = vpop.f32.mrf.mxu0
        %v1917 = vadd.f32 %v1829, %v1916
        %v1918 = vpop.f32.mrf.mxu0
        %1919 = vdwg.mxu0
        %vm1920 = vcmask 523264
        %v1921 = vsel %vm1920, %v1914, 0.0
        %1922 = vadd.xlane.f32.xlu0 %v1921
        %v1923 = vpop.xlane.xlu0 %1922
        %v1924 = vsel %vm1920, %v1917, 0.0
        %1925 = vadd.xlane.f32.xlu0 %v1924
        %v1926 = vpop.xlane.xlu0 %1925
        %v1927 = vrcp.pop 64.0
        %v1928 = vmul.f32 %v1923, %v1927
        %v1929 = vmul.f32 %v1926, %v1927
        %v1930 = vsub.f32 %v1914, %v1928
        %v1931 = vsub.f32 %v1917, %v1929
        %v1932 = vmul.f32 %v1930, %v1930
        %v1933 = vmul.f32 %v1931, %v1931
        %v1934 = vsel %vm1920, %v1932, 0.0
        %1935 = vadd.xlane.f32.xlu0 %v1934
        %v1936 = vpop.xlane.xlu0 %1935
        %v1937 = vsel %vm1920, %v1933, 0.0
        %1938 = vadd.xlane.f32.xlu0 %v1937
        %v1939 = vpop.xlane.xlu0 %1938
        %v1940 = vmul.f32 %v1936, %v1927
        %v1941 = vmul.f32 %v1939, %v1927
        %v1942 = vadd.f32 %v1940, 1e-05
        %v1943 = vadd.f32 %v1941, 1e-05
        %v1944 = vrsqrt.pop %v1942
        %v1945 = vrsqrt.pop %v1943
        %v1946 = vmul.f32 %v1930, %v1944
        %v1947 = vmul.f32 %v1931, %v1945
        %v1948 = vld [vmem:[#allocation13] sm:$0x1]
        %v1950 = vlaneseq
        %v1951 = vshrl.u32 %v1950, 7
        %v1952 = vsub.s32 0, %v1951
        %v1953 = vrot.slane %v1948, %v1952
        %v1955 = vmul.f32 %v1946, %v1953
        %v1956 = vmul.f32 %v1947, %v1953
        %v1957 = vld [vmem:[#allocation14] sm:$0x1]
        %v1959 = vlaneseq
        %v1960 = vshrl.u32 %v1959, 7
        %v1961 = vsub.s32 0, %v1960
        %v1962 = vrot.slane %v1957, %v1961
        %v1964 = vadd.f32 %v1955, %v1962
        %v1965 = vadd.f32 %v1956, %v1962
        %vm1966 = vcmp.ge.f32.partialorder %v1964, 0.0
        %vm1967 = vcmp.ge.f32.partialorder %v1965, 0.0
        %v1968 = vmul.f32 %v1964, 0.2
        %v1969 = vmul.f32 %v1965, 0.2
        %v1970 = vsel %vm1966, %v1964, %v1968
        %v1971 = vsel %vm1967, %v1965, %v1969
        %v1972 = vpack.c.bf16 %v1971, %v1970
        %v1973 = vld [vmem:[#allocation16] sm:$0xf]
        %v1974 = vld [vmem:[#allocation16 + $0x4] sm:$0xf]
        %v1975 = vld [vmem:[#allocation16 + $0x8] sm:$0xf]
        %v1976 = vld [vmem:[#allocation16 + $0xc] sm:$0xf]
        %v1977 = vld [vmem:[#allocation16 + $0x10] sm:$0xf]
        %v1978 = vld [vmem:[#allocation16 + $0x14] sm:$0xf]
        %v1979 = vld [vmem:[#allocation16 + $0x18] sm:$0xf]
        %v1980 = vld [vmem:[#allocation16 + $0x1c] sm:$0xf]
        %v1981 = vld [vmem:[#allocation17] sm:$0x1]
        %v1983 = vlaneseq
        %v1984 = vshrl.u32 %v1983, 7
        %v1985 = vsub.s32 0, %v1984
        %v1986 = vrot.slane %v1981, %v1985
        %v1996 = vunpack.c.l.b16 %v1973
        %v1997 = vunpack.c.l.b16 %v1974
        %v1998 = vunpack.c.l.b16 %v1975
        %v1999 = vunpack.c.l.b16 %v1976
        %v2000 = vunpack.c.l.b16 %v1977
        %v2001 = vunpack.c.l.b16 %v1978
        %v2002 = vunpack.c.l.b16 %v1979
        %v2003 = vunpack.c.l.b16 %v1980
        %v2004 = vpack.c.b16 %v1997, %v1996
        %v2005 = vpack.c.b16 %v1999, %v1998
        %v2006 = vpack.c.b16 %v2001, %v2000
        %v2007 = vpack.c.b16 %v2003, %v2002
        %v2013 = vsel %vm1920, %v1972, 0
        %2015 = vmatprep.subr.bf16.mxu0 0
        %2016 = vmatpush1.bf16.msra.mxu0 0
        %2017 = vmatprep.subr.bf16.mxu0 0
        %2018 = vmatpush1.bf16.msra.mxu0 0
        %2019 = vmatprep.subr.bf16.mxu0 0
        %2020 = vmatpush1.bf16.msra.mxu0 0
        %2021 = vmatprep.subr.bf16.mxu0 0
        %2022 = vmatpush1.bf16.msra.mxu0 0
        %2023 = vmatprep.subr.bf16.mxu0 0
        %2024 = vmatpush1.bf16.msra.mxu0 %v2007
        %2025 = vmatprep.subr.bf16.mxu0 0
        %2026 = vmatpush1.bf16.msra.mxu0 %v2006
        %2027 = vmatprep.subr.bf16.mxu0 0
        %2028 = vmatpush1.bf16.msra.mxu0 %v2005
        %2029 = vmatprep.subr.bf16.mxu0 0
        %2030 = vmatpush1.bf16.msra.mxu0 %v2004
        %2031 = vmatprep.subr.bf16.mxu0 0
        %2032 = vmatpush2.bf16.msra.mxu0 0
        %2033 = vmatprep.subr.bf16.mxu0 0
        %2034 = vmatpush2.bf16.msra.mxu0 0
        %2035 = vmatprep.subr.bf16.mxu0 0
        %2036 = vmatpush2.bf16.msra.mxu0 0
        %2037 = vmatprep.subr.bf16.mxu0 0
        %2038 = vmatpush2.bf16.msra.mxu0 0
        %2039 = vmatprep.subr.bf16.mxu0 0
        %2040 = vmatpush2.bf16.msra.mxu0 0
        %2041 = vmatprep.subr.bf16.mxu0 0
        %2042 = vmatpush2.bf16.msra.mxu0 0
        %2043 = vmatprep.subr.bf16.mxu0 0
        %2044 = vmatpush2.bf16.msra.mxu0 0
        %2045 = vmatprep.subr.bf16.mxu0 0
        %2046 = vmatpush2.bf16.msra.mxu0 0
        %2047 = vmatprep.mubr.bf16.mxu0 0
        %2048 = vmatmul.mubr.bf16.gmra.mxu0 %v2013
        %v2049 = vpop.f32.mrf.mxu0
        %v2050 = vadd.f32 %v1986, %v2049
        %v2051 = vpop.f32.mrf.mxu0
        %v2052 = vpop.f32.mrf.mxu0
        %v2053 = vadd.f32 %v1986, %v2052
        %v2054 = vpop.f32.mrf.mxu0
        %2055 = vdwg.mxu0
        %v2056 = vtanh.pop %v2050
        %v2057 = vtanh.pop %v2053
        %v2058 = vpack.c.bf16 %v2057, %v2056
        %v2059 = vld [vmem:[#allocation19] sm:$0xf]
        %v2060 = vld [vmem:[#allocation19 + $0x4] sm:$0xf]
        %v2061 = vld [vmem:[#allocation19 + $0x8] sm:$0xf]
        %v2062 = vld [vmem:[#allocation19 + $0xc] sm:$0xf]
        %v2063 = vld [vmem:[#allocation19 + $0x10] sm:$0xf]
        %v2064 = vld [vmem:[#allocation19 + $0x14] sm:$0xf]
        %v2065 = vld [vmem:[#allocation19 + $0x18] sm:$0xf]
        %v2066 = vld [vmem:[#allocation19 + $0x1c] sm:$0xf]
        %v2067 = vld [vmem:[#allocation20] sm:$0x1]
        %v2069 = vlaneseq
        %v2070 = vshrl.u32 %v2069, 7
        %v2071 = vsub.s32 0, %v2070
        %v2072 = vrot.slane %v2067, %v2071
        %v2082 = vunpack.c.l.b16 %v2059
        %v2083 = vunpack.c.l.b16 %v2060
        %v2084 = vunpack.c.l.b16 %v2061
        %v2085 = vunpack.c.l.b16 %v2062
        %v2086 = vunpack.c.l.b16 %v2063
        %v2087 = vunpack.c.l.b16 %v2064
        %v2088 = vunpack.c.l.b16 %v2065
        %v2089 = vunpack.c.l.b16 %v2066
        %v2090 = vpack.c.b16 %v2083, %v2082
        %v2091 = vpack.c.b16 %v2085, %v2084
        %v2092 = vpack.c.b16 %v2087, %v2086
        %v2093 = vpack.c.b16 %v2089, %v2088
        %v2099 = vsel %vm1920, %v2058, 0
        %2101 = vmatprep.subr.bf16.mxu0 0
        %2102 = vmatpush1.bf16.msra.mxu0 0
        %2103 = vmatprep.subr.bf16.mxu0 0
        %2104 = vmatpush1.bf16.msra.mxu0 0
        %2105 = vmatprep.subr.bf16.mxu0 0
        %2106 = vmatpush1.bf16.msra.mxu0 0
        %2107 = vmatprep.subr.bf16.mxu0 0
        %2108 = vmatpush1.bf16.msra.mxu0 0
        %2109 = vmatprep.subr.bf16.mxu0 0
        %2110 = vmatpush1.bf16.msra.mxu0 %v2093
        %2111 = vmatprep.subr.bf16.mxu0 0
        %2112 = vmatpush1.bf16.msra.mxu0 %v2092
        %2113 = vmatprep.subr.bf16.mxu0 0
        %2114 = vmatpush1.bf16.msra.mxu0 %v2091
        %2115 = vmatprep.subr.bf16.mxu0 0
        %2116 = vmatpush1.bf16.msra.mxu0 %v2090
        %2117 = vmatprep.subr.bf16.mxu0 0
        %2118 = vmatpush2.bf16.msra.mxu0 0
        %2119 = vmatprep.subr.bf16.mxu0 0
        %2120 = vmatpush2.bf16.msra.mxu0 0
        %2121 = vmatprep.subr.bf16.mxu0 0
        %2122 = vmatpush2.bf16.msra.mxu0 0
        %2123 = vmatprep.subr.bf16.mxu0 0
        %2124 = vmatpush2.bf16.msra.mxu0 0
        %2125 = vmatprep.subr.bf16.mxu0 0
        %2126 = vmatpush2.bf16.msra.mxu0 0
        %2127 = vmatprep.subr.bf16.mxu0 0
        %2128 = vmatpush2.bf16.msra.mxu0 0
        %2129 = vmatprep.subr.bf16.mxu0 0
        %2130 = vmatpush2.bf16.msra.mxu0 0
        %2131 = vmatprep.subr.bf16.mxu0 0
        %2132 = vmatpush2.bf16.msra.mxu0 0
        %2133 = vmatprep.mubr.bf16.mxu0 0
        %2134 = vmatmul.mubr.bf16.gmra.mxu0 %v2099
        %v2135 = vpop.f32.mrf.mxu0
        %v2136 = vadd.f32 %v2072, %v2135
        %v2137 = vpop.f32.mrf.mxu0
        %v2138 = vpop.f32.mrf.mxu0
        %v2139 = vadd.f32 %v2072, %v2138
        %v2140 = vpop.f32.mrf.mxu0
        %2141 = vdwg.mxu0
        %v2142 = vsel %vm1920, %v2136, 0.0
        %2143 = vadd.xlane.f32.xlu0 %v2142
        %v2144 = vpop.xlane.xlu0 %2143
        %v2145 = vsel %vm1920, %v2139, 0.0
        %2146 = vadd.xlane.f32.xlu0 %v2145
        %v2147 = vpop.xlane.xlu0 %2146
        %v2148 = vmul.f32 %v2144, %v1927
        %v2149 = vmul.f32 %v2147, %v1927
        %v2150 = vsub.f32 %v2136, %v2148
        %v2151 = vsub.f32 %v2139, %v2149
        %v2152 = vmul.f32 %v2150, %v2150
        %v2153 = vmul.f32 %v2151, %v2151
        %v2154 = vsel %vm1920, %v2152, 0.0
        %2155 = vadd.xlane.f32.xlu0 %v2154
        %v2156 = vpop.xlane.xlu0 %2155
        %v2157 = vsel %vm1920, %v2153, 0.0
        %2158 = vadd.xlane.f32.xlu0 %v2157
        %v2159 = vpop.xlane.xlu0 %2158
        %v2160 = vmul.f32 %v2156, %v1927
        %v2161 = vmul.f32 %v2159, %v1927
        %v2162 = vadd.f32 %v2160, 1e-05
        %v2163 = vadd.f32 %v2161, 1e-05
        %v2164 = vrsqrt.pop %v2162
        %v2165 = vrsqrt.pop %v2163
        %v2166 = vmul.f32 %v2150, %v2164
        %v2167 = vmul.f32 %v2151, %v2165
        %v2168 = vld [vmem:[#allocation22] sm:$0x1]
        %v2170 = vlaneseq
        %v2171 = vshrl.u32 %v2170, 7
        %v2172 = vsub.s32 0, %v2171
        %v2173 = vrot.slane %v2168, %v2172
        %v2175 = vmul.f32 %v2166, %v2173
        %v2176 = vmul.f32 %v2167, %v2173
        %v2177 = vld [vmem:[#allocation23] sm:$0x1]
        %v2179 = vlaneseq
        %v2180 = vshrl.u32 %v2179, 7
        %v2181 = vsub.s32 0, %v2180
        %v2182 = vrot.slane %v2177, %v2181
        %v2184 = vadd.f32 %v2175, %v2182
        %v2185 = vadd.f32 %v2176, %v2182
        %vm2186 = vcmp.ge.f32.partialorder %v2184, 0.0
        %vm2187 = vcmp.ge.f32.partialorder %v2185, 0.0
        %v2188 = vmul.f32 %v2184, 0.2
        %v2189 = vmul.f32 %v2185, 0.2
        %v2190 = vsel %vm2186, %v2184, %v2188
        %v2191 = vsel %vm2187, %v2185, %v2189
        %v2192 = vpack.c.bf16 %v2191, %v2190
        %v2193 = vld [vmem:[#allocation25] sm:$0xf]
        %v2194 = vld [vmem:[#allocation25 + $0x4] sm:$0xf]
        %v2195 = vld [vmem:[#allocation25 + $0x8] sm:$0xf]
        %v2196 = vld [vmem:[#allocation25 + $0xc] sm:$0xf]
        %v2197 = vld [vmem:[#allocation25 + $0x10] sm:$0xf]
        %v2198 = vld [vmem:[#allocation25 + $0x14] sm:$0xf]
        %v2199 = vld [vmem:[#allocation25 + $0x18] sm:$0xf]
        %v2200 = vld [vmem:[#allocation25 + $0x1c] sm:$0xf]
        %v2201 = vld [vmem:[#allocation26] sm:$0x1]
        %v2203 = vlaneseq
        %v2204 = vshrl.u32 %v2203, 7
        %v2205 = vsub.s32 0, %v2204
        %v2206 = vrot.slane %v2201, %v2205
        %v2216 = vunpack.c.l.b16 %v2193
        %v2217 = vunpack.c.l.b16 %v2194
        %v2218 = vunpack.c.l.b16 %v2195
        %v2219 = vunpack.c.l.b16 %v2196
        %v2220 = vunpack.c.l.b16 %v2197
        %v2221 = vunpack.c.l.b16 %v2198
        %v2222 = vunpack.c.l.b16 %v2199
        %v2223 = vunpack.c.l.b16 %v2200
        %v2224 = vpack.c.b16 %v2217, %v2216
        %v2225 = vpack.c.b16 %v2219, %v2218
        %v2226 = vpack.c.b16 %v2221, %v2220
        %v2227 = vpack.c.b16 %v2223, %v2222
        %v2233 = vsel %vm1920, %v2192, 0
        %2235 = vmatprep.subr.bf16.mxu0 0
        %2236 = vmatpush1.bf16.msra.mxu0 0
        %2237 = vmatprep.subr.bf16.mxu0 0
        %2238 = vmatpush1.bf16.msra.mxu0 0
        %2239 = vmatprep.subr.bf16.mxu0 0
        %2240 = vmatpush1.bf16.msra.mxu0 0
        %2241 = vmatprep.subr.bf16.mxu0 0
        %2242 = vmatpush1.bf16.msra.mxu0 0
        %2243 = vmatprep.subr.bf16.mxu0 0
        %2244 = vmatpush1.bf16.msra.mxu0 %v2227
        %2245 = vmatprep.subr.bf16.mxu0 0
        %2246 = vmatpush1.bf16.msra.mxu0 %v2226
        %2247 = vmatprep.subr.bf16.mxu0 0
        %2248 = vmatpush1.bf16.msra.mxu0 %v2225
        %2249 = vmatprep.subr.bf16.mxu0 0
        %2250 = vmatpush1.bf16.msra.mxu0 %v2224
        %2251 = vmatprep.subr.bf16.mxu0 0
        %2252 = vmatpush2.bf16.msra.mxu0 0
        %2253 = vmatprep.subr.bf16.mxu0 0
        %2254 = vmatpush2.bf16.msra.mxu0 0
        %2255 = vmatprep.subr.bf16.mxu0 0
        %2256 = vmatpush2.bf16.msra.mxu0 0
        %2257 = vmatprep.subr.bf16.mxu0 0
        %2258 = vmatpush2.bf16.msra.mxu0 0
        %2259 = vmatprep.subr.bf16.mxu0 0
        %2260 = vmatpush2.bf16.msra.mxu0 0
        %2261 = vmatprep.subr.bf16.mxu0 0
        %2262 = vmatpush2.bf16.msra.mxu0 0
        %2263 = vmatprep.subr.bf16.mxu0 0
        %2264 = vmatpush2.bf16.msra.mxu0 0
        %2265 = vmatprep.subr.bf16.mxu0 0
        %2266 = vmatpush2.bf16.msra.mxu0 0
        %2267 = vmatprep.mubr.bf16.mxu0 0
        %2268 = vmatmul.mubr.bf16.gmra.mxu0 %v2233
        %v2269 = vpop.f32.mrf.mxu0
        %v2270 = vadd.f32 %v2206, %v2269
        %v2271 = vpop.f32.mrf.mxu0
        %v2272 = vpop.f32.mrf.mxu0
        %v2273 = vadd.f32 %v2206, %v2272
        %v2274 = vpop.f32.mrf.mxu0
        %2275 = vdwg.mxu0
        %2276 = vadd.xlane.f32.xlu0 %v2270
        %v2277 = vpop.xlane.xlu0 %2276
        %2278 = vadd.xlane.f32.xlu0 %v2273
        %v2279 = vpop.xlane.xlu0 %2278
        %v2280 = vmul.f32 %v2277, %v1764
        %v2281 = vmul.f32 %v2279, %v1764
        %v2282 = vsub.f32 %v2270, %v2280
        %v2283 = vsub.f32 %v2273, %v2281
        %v2284 = vmul.f32 %v2282, %v2282
        %v2285 = vmul.f32 %v2283, %v2283
        %2286 = vadd.xlane.f32.xlu0 %v2284
        %v2287 = vpop.xlane.xlu0 %2286
        %2288 = vadd.xlane.f32.xlu0 %v2285
        %v2289 = vpop.xlane.xlu0 %2288
        %v2290 = vmul.f32 %v2287, %v1764
        %v2291 = vmul.f32 %v2289, %v1764
        %v2292 = vadd.f32 %v2290, 1e-05
        %v2293 = vadd.f32 %v2291, 1e-05
        %v2294 = vrsqrt.pop %v2292
        %v2295 = vrsqrt.pop %v2293
        %v2296 = vmul.f32 %v2282, %v2294
        %v2297 = vmul.f32 %v2283, %v2295
        %v2298 = vld [vmem:[#allocation28] sm:$0x1]
        %v2300 = vlaneseq
        %v2301 = vshrl.u32 %v2300, 7
        %v2302 = vsub.s32 0, %v2301
        %v2303 = vrot.slane %v2298, %v2302
        %v2305 = vmul.f32 %v2296, %v2303
        %v2306 = vmul.f32 %v2297, %v2303
        %v2307 = vld [vmem:[#allocation29] sm:$0x1]
        %v2309 = vlaneseq
        %v2310 = vshrl.u32 %v2309, 7
        %v2311 = vsub.s32 0, %v2310
        %v2312 = vrot.slane %v2307, %v2311
        %v2314 = vadd.f32 %v2305, %v2312
        %v2315 = vadd.f32 %v2306, %v2312
        %vm2316 = vcmp.ge.f32.partialorder %v2314, 0.0
        %vm2317 = vcmp.ge.f32.partialorder %v2315, 0.0
        %v2318 = vmul.f32 %v2314, 0.2
        %v2319 = vmul.f32 %v2315, 0.2
        %v2320 = vsel %vm2316, %v2314, %v2318
        %v2321 = vsel %vm2317, %v2315, %v2319
        %v2322 = vpack.c.bf16 %v2321, %v2320
        %v2323 = vld [vmem:[#allocation31] sm:$0xff]
        %v2324 = vld [vmem:[#allocation31 + $0x8] sm:$0xff]
        %v2325 = vld [vmem:[#allocation31 + $0x10] sm:$0xff]
        %v2326 = vld [vmem:[#allocation31 + $0x18] sm:$0xff]
        %v2327 = vld [vmem:[#allocation31 + $0x20] sm:$0xff]
        %v2328 = vld [vmem:[#allocation31 + $0x28] sm:$0xff]
        %v2329 = vld [vmem:[#allocation31 + $0x30] sm:$0xff]
        %v2330 = vld [vmem:[#allocation31 + $0x38] sm:$0xff]
        %v2331 = vld [vmem:[#allocation31 + $0x40] sm:$0xff]
        %v2332 = vld [vmem:[#allocation31 + $0x48] sm:$0xff]
        %v2333 = vld [vmem:[#allocation31 + $0x50] sm:$0xff]
        %v2334 = vld [vmem:[#allocation31 + $0x58] sm:$0xff]
        %v2335 = vld [vmem:[#allocation31 + $0x60] sm:$0xff]
        %v2336 = vld [vmem:[#allocation31 + $0x68] sm:$0xff]
        %v2337 = vld [vmem:[#allocation31 + $0x70] sm:$0xff]
        %v2338 = vld [vmem:[#allocation31 + $0x78] sm:$0xff]
        %v2339 = vld [vmem:[%s49] sm:$0x3]
        %v2341 = vlaneseq
        %v2342 = vshrl.u32 %v2341, 7
        %v2343 = vsub.s32 0, %v2342
        %v2344 = vrot.slane %v2339, %v2343
        %v2345 = vlaneseq
        %v2346 = vshrl.u32 %v2345, 7
        %v2347 = vsub.s32 1, %v2346
        %v2348 = vrot.slane %v2339, %v2347
        %v2367 = vunpack.c.l.b16 %v2323
        %v2368 = vunpack.c.h.b16 %v2323
        %v2369 = vunpack.c.l.b16 %v2324
        %v2370 = vunpack.c.h.b16 %v2324
        %v2371 = vunpack.c.l.b16 %v2325
        %v2372 = vunpack.c.h.b16 %v2325
        %v2373 = vunpack.c.l.b16 %v2326
        %v2374 = vunpack.c.h.b16 %v2326
        %v2375 = vunpack.c.l.b16 %v2327
        %v2376 = vunpack.c.h.b16 %v2327
        %v2377 = vunpack.c.l.b16 %v2328
        %v2378 = vunpack.c.h.b16 %v2328
        %v2379 = vunpack.c.l.b16 %v2329
        %v2380 = vunpack.c.h.b16 %v2329
        %v2381 = vunpack.c.l.b16 %v2330
        %v2382 = vunpack.c.h.b16 %v2330
        %v2383 = vunpack.c.l.b16 %v2331
        %v2384 = vunpack.c.h.b16 %v2331
        %v2385 = vunpack.c.l.b16 %v2332
        %v2386 = vunpack.c.h.b16 %v2332
        %v2387 = vunpack.c.l.b16 %v2333
        %v2388 = vunpack.c.h.b16 %v2333
        %v2389 = vunpack.c.l.b16 %v2334
        %v2390 = vunpack.c.h.b16 %v2334
        %v2391 = vunpack.c.l.b16 %v2335
        %v2392 = vunpack.c.h.b16 %v2335
        %v2393 = vunpack.c.l.b16 %v2336
        %v2394 = vunpack.c.h.b16 %v2336
        %v2395 = vunpack.c.l.b16 %v2337
        %v2396 = vunpack.c.h.b16 %v2337
        %v2397 = vunpack.c.l.b16 %v2338
        %v2398 = vunpack.c.h.b16 %v2338
        %v2399 = vpack.c.b16 %v2369, %v2367
        %v2400 = vpack.c.b16 %v2370, %v2368
        %v2401 = vpack.c.b16 %v2373, %v2371
        %v2402 = vpack.c.b16 %v2374, %v2372
        %v2403 = vpack.c.b16 %v2377, %v2375
        %v2404 = vpack.c.b16 %v2378, %v2376
        %v2405 = vpack.c.b16 %v2381, %v2379
        %v2406 = vpack.c.b16 %v2382, %v2380
        %v2407 = vpack.c.b16 %v2385, %v2383
        %v2408 = vpack.c.b16 %v2386, %v2384
        %v2409 = vpack.c.b16 %v2389, %v2387
        %v2410 = vpack.c.b16 %v2390, %v2388
        %v2411 = vpack.c.b16 %v2393, %v2391
        %v2412 = vpack.c.b16 %v2394, %v2392
        %v2413 = vpack.c.b16 %v2397, %v2395
        %v2414 = vpack.c.b16 %v2398, %v2396
        %2431 = vmatprep.subr.bf16.mxu0 %v2414
        %2432 = vmatpush1.bf16.msra.mxu0 %v2413
        %2433 = vmatprep.subr.bf16.mxu0 %v2412
        %2434 = vmatpush1.bf16.msra.mxu0 %v2411
        %2435 = vmatprep.subr.bf16.mxu0 %v2410
        %2436 = vmatpush1.bf16.msra.mxu0 %v2409
        %2437 = vmatprep.subr.bf16.mxu0 %v2408
        %2438 = vmatpush1.bf16.msra.mxu0 %v2407
        %2439 = vmatprep.subr.bf16.mxu0 %v2406
        %2440 = vmatpush1.bf16.msra.mxu0 %v2405
        %2441 = vmatprep.subr.bf16.mxu0 %v2404
        %2442 = vmatpush1.bf16.msra.mxu0 %v2403
        %2443 = vmatprep.subr.bf16.mxu0 %v2402
        %2444 = vmatpush1.bf16.msra.mxu0 %v2401
        %2445 = vmatprep.subr.bf16.mxu0 %v2400
        %2446 = vmatpush1.bf16.msra.mxu0 %v2399
        %2447 = vmatprep.subr.bf16.mxu0 0
        %2448 = vmatpush2.bf16.msra.mxu0 0
        %2449 = vmatprep.subr.bf16.mxu0 0
        %2450 = vmatpush2.bf16.msra.mxu0 0
        %2451 = vmatprep.subr.bf16.mxu0 0
        %2452 = vmatpush2.bf16.msra.mxu0 0
        %2453 = vmatprep.subr.bf16.mxu0 0
        %2454 = vmatpush2.bf16.msra.mxu0 0
        %2455 = vmatprep.subr.bf16.mxu0 0
        %2456 = vmatpush2.bf16.msra.mxu0 0
        %2457 = vmatprep.subr.bf16.mxu0 0
        %2458 = vmatpush2.bf16.msra.mxu0 0
        %2459 = vmatprep.subr.bf16.mxu0 0
        %2460 = vmatpush2.bf16.msra.mxu0 0
        %2461 = vmatprep.subr.bf16.mxu0 0
        %2462 = vmatpush2.bf16.msra.mxu0 0
        %2463 = vmatprep.mubr.bf16.mxu0 0
        %2464 = vmatmul.mubr.bf16.gmra.mxu0 %v2322
        %v2465 = vpop.f32.mrf.mxu0
        %v2466 = vadd.f32 %v2344, %v2465
        %v2467 = vpop.f32.mrf.mxu0
        %v2468 = vadd.f32 %v2348, %v2467
        %v2469 = vpop.f32.mrf.mxu0
        %v2470 = vadd.f32 %v2344, %v2469
        %v2471 = vpop.f32.mrf.mxu0
        %v2472 = vadd.f32 %v2348, %v2471
        %2473 = vdwg.mxu0
        %v2474 = vadd.f32 %v2466, %v2468
        %2475 = vadd.xlane.f32.xlu0 %v2474
        %v2476 = vpop.xlane.xlu0 %2475
        %v2477 = vadd.f32 %v2470, %v2472
        %2478 = vadd.xlane.f32.xlu0 %v2477
        %v2479 = vpop.xlane.xlu0 %2478
        %v2480 = vmul.f32 %v2476, %v1511
        %v2481 = vmul.f32 %v2479, %v1511
        %v2482 = vsub.f32 %v2466, %v2480
        %v2483 = vsub.f32 %v2468, %v2480
        %v2484 = vsub.f32 %v2470, %v2481
        %v2485 = vsub.f32 %v2472, %v2481
        %v2486 = vmul.f32 %v2482, %v2482
        %v2487 = vmul.f32 %v2483, %v2483
        %v2488 = vmul.f32 %v2484, %v2484
        %v2489 = vmul.f32 %v2485, %v2485
        %v2490 = vadd.f32 %v2486, %v2487
        %2491 = vadd.xlane.f32.xlu0 %v2490
        %v2492 = vpop.xlane.xlu0 %2491
        %v2493 = vadd.f32 %v2488, %v2489
        %2494 = vadd.xlane.f32.xlu0 %v2493
        %v2495 = vpop.xlane.xlu0 %2494
        %v2496 = vmul.f32 %v2492, %v1511
        %v2497 = vmul.f32 %v2495, %v1511
        %v2498 = vadd.f32 %v2496, 1e-05
        %v2499 = vadd.f32 %v2497, 1e-05
        %v2500 = vrsqrt.pop %v2498
        %v2501 = vrsqrt.pop %v2499
        %v2502 = vmul.f32 %v2482, %v2500
        %v2503 = vmul.f32 %v2483, %v2500
        %v2504 = vmul.f32 %v2484, %v2501
        %v2505 = vmul.f32 %v2485, %v2501
        %v2506 = vld [vmem:[#allocation32] sm:$0x3]
        %v2508 = vlaneseq
        %v2509 = vshrl.u32 %v2508, 7
        %v2510 = vsub.s32 0, %v2509
        %v2511 = vrot.slane %v2506, %v2510
        %v2512 = vlaneseq
        %v2513 = vshrl.u32 %v2512, 7
        %v2514 = vsub.s32 1, %v2513
        %v2515 = vrot.slane %v2506, %v2514
        %v2518 = vmul.f32 %v2502, %v2511
        %v2519 = vmul.f32 %v2503, %v2515
        %v2520 = vmul.f32 %v2504, %v2511
        %v2521 = vmul.f32 %v2505, %v2515
        %v2522 = vld [vmem:[#allocation34] sm:$0x3]
        %v2524 = vlaneseq
        %v2525 = vshrl.u32 %v2524, 7
        %v2526 = vsub.s32 0, %v2525
        %v2527 = vrot.slane %v2522, %v2526
        %v2528 = vlaneseq
        %v2529 = vshrl.u32 %v2528, 7
        %v2530 = vsub.s32 1, %v2529
        %v2531 = vrot.slane %v2522, %v2530
        %v2534 = vadd.f32 %v2518, %v2527
        %v2535 = vadd.f32 %v2519, %v2531
        %v2536 = vadd.f32 %v2520, %v2527
        %v2537 = vadd.f32 %v2521, %v2531
        %vm2538 = vcmp.ge.f32.partialorder %v2534, 0.0
        %vm2539 = vcmp.ge.f32.partialorder %v2535, 0.0
        %vm2540 = vcmp.ge.f32.partialorder %v2536, 0.0
        %vm2541 = vcmp.ge.f32.partialorder %v2537, 0.0
        %v2542 = vmul.f32 %v2534, 0.2
        %v2543 = vmul.f32 %v2535, 0.2
        %v2544 = vmul.f32 %v2536, 0.2
        %v2545 = vmul.f32 %v2537, 0.2
        %v2546 = vsel %vm2538, %v2534, %v2542
        %v2547 = vsel %vm2539, %v2535, %v2543
        %v2548 = vsel %vm2540, %v2536, %v2544
        %v2549 = vsel %vm2541, %v2537, %v2545
        %v2550 = vpack.c.bf16 %v2548, %v2546
        %v2551 = vpack.c.bf16 %v2549, %v2547
        %v2552 = vld [vmem:[#allocation35] sm:$0xff]
        %v2553 = vld [vmem:[#allocation35 + $0x8] sm:$0xff]
        %v2554 = vld [vmem:[#allocation35 + $0x10] sm:$0xff]
        %v2555 = vld [vmem:[#allocation35 + $0x18] sm:$0xff]
        %v2556 = vld [vmem:[#allocation35 + $0x20] sm:$0xff]
        %v2557 = vld [vmem:[#allocation35 + $0x28] sm:$0xff]
        %v2558 = vld [vmem:[#allocation35 + $0x30] sm:$0xff]
        %v2559 = vld [vmem:[#allocation35 + $0x38] sm:$0xff]
        %v2560 = vld [vmem:[#allocation35 + $0x40] sm:$0xff]
        %v2561 = vld [vmem:[#allocation35 + $0x48] sm:$0xff]
        %v2562 = vld [vmem:[#allocation35 + $0x50] sm:$0xff]
        %v2563 = vld [vmem:[#allocation35 + $0x58] sm:$0xff]
        %v2564 = vld [vmem:[#allocation35 + $0x60] sm:$0xff]
        %v2565 = vld [vmem:[#allocation35 + $0x68] sm:$0xff]
        %v2566 = vld [vmem:[#allocation35 + $0x70] sm:$0xff]
        %v2567 = vld [vmem:[#allocation35 + $0x78] sm:$0xff]
        %v2568 = vld [vmem:[#allocation35 + $0x80] sm:$0xff]
        %v2569 = vld [vmem:[#allocation35 + $0x88] sm:$0xff]
        %v2570 = vld [vmem:[#allocation35 + $0x90] sm:$0xff]
        %v2571 = vld [vmem:[#allocation35 + $0x98] sm:$0xff]
        %v2572 = vld [vmem:[#allocation35 + $0xa0] sm:$0xff]
        %v2573 = vld [vmem:[#allocation35 + $0xa8] sm:$0xff]
        %v2574 = vld [vmem:[#allocation35 + $0xb0] sm:$0xff]
        %v2575 = vld [vmem:[#allocation35 + $0xb8] sm:$0xff]
        %v2576 = vld [vmem:[#allocation35 + $0xc0] sm:$0xff]
        %v2577 = vld [vmem:[#allocation35 + $0xc8] sm:$0xff]
        %v2578 = vld [vmem:[#allocation35 + $0xd0] sm:$0xff]
        %v2579 = vld [vmem:[#allocation35 + $0xd8] sm:$0xff]
        %v2580 = vld [vmem:[#allocation35 + $0xe0] sm:$0xff]
        %v2581 = vld [vmem:[#allocation35 + $0xe8] sm:$0xff]
        %v2582 = vld [vmem:[#allocation35 + $0xf0] sm:$0xff]
        %v2583 = vld [vmem:[#allocation35 + $0xf8] sm:$0xff]
        %v2584 = vld [vmem:[#allocation37] sm:$0x3]
        %v2586 = vlaneseq
        %v2587 = vshrl.u32 %v2586, 7
        %v2588 = vsub.s32 0, %v2587
        %v2589 = vrot.slane %v2584, %v2588
        %v2590 = vlaneseq
        %v2591 = vshrl.u32 %v2590, 7
        %v2592 = vsub.s32 1, %v2591
        %v2593 = vrot.slane %v2584, %v2592
        %v2628 = vunpack.c.l.b16 %v2552
        %v2629 = vunpack.c.h.b16 %v2552
        %v2630 = vunpack.c.l.b16 %v2553
        %v2631 = vunpack.c.h.b16 %v2553
        %v2632 = vunpack.c.l.b16 %v2554
        %v2633 = vunpack.c.h.b16 %v2554
        %v2634 = vunpack.c.l.b16 %v2555
        %v2635 = vunpack.c.h.b16 %v2555
        %v2636 = vunpack.c.l.b16 %v2556
        %v2637 = vunpack.c.h.b16 %v2556
        %v2638 = vunpack.c.l.b16 %v2557
        %v2639 = vunpack.c.h.b16 %v2557
        %v2640 = vunpack.c.l.b16 %v2558
        %v2641 = vunpack.c.h.b16 %v2558
        %v2642 = vunpack.c.l.b16 %v2559
        %v2643 = vunpack.c.h.b16 %v2559
        %v2644 = vunpack.c.l.b16 %v2560
        %v2645 = vunpack.c.h.b16 %v2560
        %v2646 = vunpack.c.l.b16 %v2561
        %v2647 = vunpack.c.h.b16 %v2561
        %v2648 = vunpack.c.l.b16 %v2562
        %v2649 = vunpack.c.h.b16 %v2562
        %v2650 = vunpack.c.l.b16 %v2563
        %v2651 = vunpack.c.h.b16 %v2563
        %v2652 = vunpack.c.l.b16 %v2564
        %v2653 = vunpack.c.h.b16 %v2564
        %v2654 = vunpack.c.l.b16 %v2565
        %v2655 = vunpack.c.h.b16 %v2565
        %v2656 = vunpack.c.l.b16 %v2566
        %v2657 = vunpack.c.h.b16 %v2566
        %v2658 = vunpack.c.l.b16 %v2567
        %v2659 = vunpack.c.h.b16 %v2567
        %v2660 = vunpack.c.l.b16 %v2568
        %v2661 = vunpack.c.h.b16 %v2568
        %v2662 = vunpack.c.l.b16 %v2569
        %v2663 = vunpack.c.h.b16 %v2569
        %v2664 = vunpack.c.l.b16 %v2570
        %v2665 = vunpack.c.h.b16 %v2570
        %v2666 = vunpack.c.l.b16 %v2571
        %v2667 = vunpack.c.h.b16 %v2571
        %v2668 = vunpack.c.l.b16 %v2572
        %v2669 = vunpack.c.h.b16 %v2572
        %v2670 = vunpack.c.l.b16 %v2573
        %v2671 = vunpack.c.h.b16 %v2573
        %v2672 = vunpack.c.l.b16 %v2574
        %v2673 = vunpack.c.h.b16 %v2574
        %v2674 = vunpack.c.l.b16 %v2575
        %v2675 = vunpack.c.h.b16 %v2575
        %v2676 = vunpack.c.l.b16 %v2576
        %v2677 = vunpack.c.h.b16 %v2576
        %v2678 = vunpack.c.l.b16 %v2577
        %v2679 = vunpack.c.h.b16 %v2577
        %v2680 = vunpack.c.l.b16 %v2578
        %v2681 = vunpack.c.h.b16 %v2578
        %v2682 = vunpack.c.l.b16 %v2579
        %v2683 = vunpack.c.h.b16 %v2579
        %v2684 = vunpack.c.l.b16 %v2580
        %v2685 = vunpack.c.h.b16 %v2580
        %v2686 = vunpack.c.l.b16 %v2581
        %v2687 = vunpack.c.h.b16 %v2581
        %v2688 = vunpack.c.l.b16 %v2582
        %v2689 = vunpack.c.h.b16 %v2582
        %v2690 = vunpack.c.l.b16 %v2583
        %v2691 = vunpack.c.h.b16 %v2583
        %v2692 = vpack.c.b16 %v2630, %v2628
        %v2693 = vpack.c.b16 %v2631, %v2629
        %v2694 = vpack.c.b16 %v2634, %v2632
        %v2695 = vpack.c.b16 %v2635, %v2633
        %v2696 = vpack.c.b16 %v2638, %v2636
        %v2697 = vpack.c.b16 %v2639, %v2637
        %v2698 = vpack.c.b16 %v2642, %v2640
        %v2699 = vpack.c.b16 %v2643, %v2641
        %v2700 = vpack.c.b16 %v2646, %v2644
        %v2701 = vpack.c.b16 %v2647, %v2645
        %v2702 = vpack.c.b16 %v2650, %v2648
        %v2703 = vpack.c.b16 %v2651, %v2649
        %v2704 = vpack.c.b16 %v2654, %v2652
        %v2705 = vpack.c.b16 %v2655, %v2653
        %v2706 = vpack.c.b16 %v2658, %v2656
        %v2707 = vpack.c.b16 %v2659, %v2657
        %v2708 = vpack.c.b16 %v2662, %v2660
        %v2709 = vpack.c.b16 %v2663, %v2661
        %v2710 = vpack.c.b16 %v2666, %v2664
        %v2711 = vpack.c.b16 %v2667, %v2665
        %v2712 = vpack.c.b16 %v2670, %v2668
        %v2713 = vpack.c.b16 %v2671, %v2669
        %v2714 = vpack.c.b16 %v2674, %v2672
        %v2715 = vpack.c.b16 %v2675, %v2673
        %v2716 = vpack.c.b16 %v2678, %v2676
        %v2717 = vpack.c.b16 %v2679, %v2677
        %v2718 = vpack.c.b16 %v2682, %v2680
        %v2719 = vpack.c.b16 %v2683, %v2681
        %v2720 = vpack.c.b16 %v2686, %v2684
        %v2721 = vpack.c.b16 %v2687, %v2685
        %v2722 = vpack.c.b16 %v2690, %v2688
        %v2723 = vpack.c.b16 %v2691, %v2689
        %2756 = vmatprep.subr.bf16.mxu0 %v2707
        %2757 = vmatpush1.bf16.msra.mxu0 %v2706
        %2758 = vmatprep.subr.bf16.mxu0 %v2705
        %2759 = vmatpush1.bf16.msra.mxu0 %v2704
        %2760 = vmatprep.subr.bf16.mxu0 %v2703
        %2761 = vmatpush1.bf16.msra.mxu0 %v2702
        %2762 = vmatprep.subr.bf16.mxu0 %v2701
        %2763 = vmatpush1.bf16.msra.mxu0 %v2700
        %2764 = vmatprep.subr.bf16.mxu0 %v2699
        %2765 = vmatpush1.bf16.msra.mxu0 %v2698
        %2766 = vmatprep.subr.bf16.mxu0 %v2697
        %2767 = vmatpush1.bf16.msra.mxu0 %v2696
        %2768 = vmatprep.subr.bf16.mxu0 %v2695
        %2769 = vmatpush1.bf16.msra.mxu0 %v2694
        %2770 = vmatprep.subr.bf16.mxu0 %v2693
        %2771 = vmatpush1.bf16.msra.mxu0 %v2692
        %2772 = vmatprep.subr.bf16.mxu0 %v2723
        %2773 = vmatpush2.bf16.msra.mxu0 %v2722
        %2774 = vmatprep.subr.bf16.mxu0 %v2721
        %2775 = vmatpush2.bf16.msra.mxu0 %v2720
        %2776 = vmatprep.subr.bf16.mxu0 %v2719
        %2777 = vmatpush2.bf16.msra.mxu0 %v2718
        %2778 = vmatprep.subr.bf16.mxu0 %v2717
        %2779 = vmatpush2.bf16.msra.mxu0 %v2716
        %2780 = vmatprep.subr.bf16.mxu0 %v2715
        %2781 = vmatpush2.bf16.msra.mxu0 %v2714
        %2782 = vmatprep.subr.bf16.mxu0 %v2713
        %2783 = vmatpush2.bf16.msra.mxu0 %v2712
        %2784 = vmatprep.subr.bf16.mxu0 %v2711
        %2785 = vmatpush2.bf16.msra.mxu0 %v2710
        %2786 = vmatprep.subr.bf16.mxu0 %v2709
        %2787 = vmatpush2.bf16.msra.mxu0 %v2708
        %2788 = vmatprep.mubr.bf16.mxu0 %v2551
        %2789 = vmatmul.mubr.bf16.gmra.mxu0 %v2550
        %v2790 = vpop.f32.mrf.mxu0
        %v2791 = vadd.f32 %v2589, %v2790
        %v2792 = vpop.f32.mrf.mxu0
        %v2793 = vadd.f32 %v2593, %v2792
        %v2794 = vpop.f32.mrf.mxu0
        %v2795 = vadd.f32 %v2589, %v2794
        %v2796 = vpop.f32.mrf.mxu0
        %v2797 = vadd.f32 %v2593, %v2796
        %2798 = vdwg.mxu0
        %2799 = vst [vmem:[%s1240] sm:$0xff] %v2791
        %2800 = vst [vmem:[%s1240 + $0x8] sm:$0xff] %v2793
        %2801 = vst [vmem:[%s1240 + $0x10] sm:$0xff] %v2795
        %2802 = vst [vmem:[%s1240 + $0x18] sm:$0xff] %v2797
        %2803 = vst.msk [vmem:[%s1247] sm:$0xff] %vm1920, %v2056
        %2804 = vst.msk [vmem:[%s1247 + $0x8] sm:$0xff] %vm1920, %v2057
        %s2805 = sand.u32 %s715, 1
        %s2806 = scalar_lea.sflag [#allocation4], %s2805
        %s2807 = sand.u32 %s715, 1
        %s2808 = smul.addr %s2807, 32
        %s2809 = scalar_lea.vmem [#allocation38], %s2808
        %s2810 = sand.u32 %s741, 1
        %s2811 = scalar_lea.sflag [#allocation40], %s2810
        %s2812 = sand.u32 %s741, 1
        %s2813 = smul.addr %s2812, 16
        %s2814 = scalar_lea.vmem [#allocation39], %s2813
        // Predicated region
        $region229: #{autoencoder_forward.1} parent=135 // pred_check
          %p2815 = pneg %p725
        $region230: #{autoencoder_forward.1} parent=135 // pred_check_branch
          %2817 = sbr.rel (%p2815) target = $region232
        $region231: #{autoencoder_forward.1} parent=135 // pred_region
          %s2818 = smul.u32 2, %s93
          %s2820 = ssub.s32 512, 512
          %2821 = vsyncadd %s2806, %s2820
          %s2822 = smul.addr %s2818, 2
          %s2823 = smul.addr %s2822, 128
          %s2824 = scalar_lea.hbm %s59, %s2823
          %s2825 = sshll.u32 %s2809, 4
          %s2826 = int_to_ptr.vmem [resolvable:$true] %s2825
          %2831 = dma.vmem_to_hbm [thread:$0]  %s2826, 512, %s2824, %s2806, 256, 256, 16
        $region232: #{autoencoder_forward.1} parent=135 // pred_fallthru
          _
        // Predicated region
        $region233: #{autoencoder_forward.1} parent=135 // pred_check
          %p2832 = pneg %p751
        $region234: #{autoencoder_forward.1} parent=135 // pred_check_branch
          %2834 = sbr.rel (%p2832) target = $region236
        $region235: #{autoencoder_forward.1} parent=135 // pred_region
          %s2835 = smul.u32 2, %s93
          %s2837 = ssub.s32 256, 256
          %2838 = vsyncadd %s2811, %s2837
          %s2839 = smul.addr %s2835, 128
          %s2840 = scalar_lea.hbm %s61, %s2839
          %s2841 = sshll.u32 %s2814, 4
          %s2842 = int_to_ptr.vmem [resolvable:$true] %s2841
          %2847 = dma.vmem_to_hbm [thread:$0]  %s2842, 256, %s2840, %s2811, 128, 128, 8
        $region236: #{autoencoder_forward.1} parent=135 // pred_fallthru
          _
      $region136: #{autoencoder_forward.1} parent=5 // pred_fallthru
        _
      %p2848 = scmp.le.s32.totalorder 2, %s88
      // Predicated region
      $region237: #{autoencoder_forward.1} parent=5 // pred_check
        %p2849 = pneg %p2848
      $region238: #{autoencoder_forward.1} parent=5 // pred_check_branch
        %2851 = sbr.rel (%p2849) target = $region240
      $region239: #{autoencoder_forward.1} parent=5 // pred_region
        %s2852 = ssub.s32 %s88, 2
        // Predicated region
        $region241: #{autoencoder_forward.1} parent=239 // pred_check
          %p2853 = pneg %p731
        $region242: #{autoencoder_forward.1} parent=239 // pred_check_branch
          %2855 = sbr.rel (%p2853) target = $region244
        $region243: #{autoencoder_forward.1} parent=239 // pred_region
          %s2856 = sand.u32 %s716, 1
          %s2857 = scalar_lea.sflag [#allocation4], %s2856
          %s2858 = sand.u32 %s716, 1
          %s2859 = smul.addr %s2858, 32
          %s2860 = scalar_lea.vmem [#allocation38], %s2859
          %2861 = dma.done %s2857, 512
        $region244: #{autoencoder_forward.1} parent=239 // pred_fallthru
          _
        // Predicated region
        $region245: #{autoencoder_forward.1} parent=239 // pred_check
          %p2862 = pneg %p757
        $region246: #{autoencoder_forward.1} parent=239 // pred_check_branch
          %2864 = sbr.rel (%p2862) target = $region248
        $region247: #{autoencoder_forward.1} parent=239 // pred_region
          %s2865 = sand.u32 %s742, 1
          %s2866 = scalar_lea.sflag [#allocation40], %s2865
          %s2867 = sand.u32 %s742, 1
          %s2868 = smul.addr %s2867, 16
          %s2869 = scalar_lea.vmem [#allocation39], %s2868
          %2870 = dma.done %s2866, 256
        $region248: #{autoencoder_forward.1} parent=239 // pred_fallthru
          _
      $region240: #{autoencoder_forward.1} parent=5 // pred_fallthru
        _
    $region6: #{autoencoder_forward.1} parent=1 // loop_footer
      %s92 = sadd.s32 1, %s88
    $region7: #{autoencoder_forward.1} parent=1 // loop_footer_branch
      %87 = sbr.rel target = $region3
    $region8: #{autoencoder_forward.1} parent=1 // loop_exit
      _
    %2871 = vsyncpa [#allocation3], 1
    %s2872 = scalar_lea.sflag [#allocation3], 1
    %2873 = vsyncpa %s2872, 1
    %2874 = vsyncpa [#allocation6], 1
    %2875 = vsyncpa [#allocation9], 1
    %2876 = vsyncpa [#allocation12], 1
    %2877 = vsyncpa [#allocation15], 1
    %2878 = vsyncpa [#allocation18], 1
    %2879 = vsyncpa [#allocation21], 1
    %2880 = vsyncpa [#allocation24], 1
    %2881 = vsyncpa [#allocation27], 1
    %2882 = vsyncpa [#allocation30], 1
    %2883 = vsyncpa [#allocation33], 1
    %2884 = vsyncpa [#allocation36], 1
    %2885 = vsyncpa [#allocation4], 1
    %s2886 = scalar_lea.sflag [#allocation4], 1
    %2887 = vsyncpa %s2886, 1
    %2888 = vsyncpa [#allocation40], 1
    %s2889 = scalar_lea.sflag [#allocation40], 1
    %2890 = vsyncpa %s2889, 1

</llo_original>
